<compile_context>
chip_gen: v6e
topology: v6e:2x2x1
jax: 0.10.0
libtpu: 0.0.40
codegen_flags: <defaults>
</compile_context>

<pallas_src>
import jax
import jax.numpy as jnp
import numpy as np
from jax import lax
from jax.experimental import pallas as pl
from jax.experimental.pallas import tpu as pltpu

HF = 4  # pooled feature-map height
WF = 4  # pooled feature-map width


# --------------------- fused encoder-projection + decoder kernel ---------------------
def _caption_kernel(
    x_ref, emb_ref,
    w_conv_ref, b_conv_ref,
    w_enc_att_ref, b_enc_att_ref,
    w_dec_att_ref, b_dec_att_ref,
    w_full_ref,
    w_lstm_emb_ref, w_lstm_ch_ref, b_lstm_ref,
    w_fc_ref, b_fc_ref,
    w_init_h_ref, b_init_h_ref, w_init_c_ref, b_init_c_ref,
    preds_ref, alpha_ref,
    g_emb_ref,
):
    f32, bf16 = jnp.float32, jnp.bfloat16
    T, B, P = alpha_ref.shape
    H = w_dec_att_ref.shape[0]  # hidden size

    # ---------------- hoisted preamble (runs exactly once per caption batch) ----------------
    # Encoder stand-in: fused 1x1 conv (3 -> E) + ReLU on the pooled pixels.
    enc = jnp.maximum(
        jnp.einsum("bpc,ce->bpe", x_ref[...].astype(bf16), w_conv_ref[...],
                   preferred_element_type=f32) + b_conv_ref[...],
        0.0)                                                           # (B, P, E) f32

    # init_hidden_state: h0 / c0 from the mean encoder feature.
    mean_enc = jnp.mean(enc, axis=1).astype(bf16)                      # (B, E)
    h0 = (jnp.dot(mean_enc, w_init_h_ref[...], preferred_element_type=f32)
          + b_init_h_ref[...])
    c0 = (jnp.dot(mean_enc, w_init_c_ref[...], preferred_element_type=f32)
          + b_init_c_ref[...])

    # Encoder-side attention projection: h-independent, computed once.
    att1 = (jnp.einsum("bpe,ea->bpa", enc.astype(bf16), w_enc_att_ref[...],
                       preferred_element_type=f32)
            + b_enc_att_ref[...])                                      # (B, P, A)

    # Embedding -> LSTM-gate contribution for ALL T steps in one wide matmul,
    # stashed in VMEM scratch; the serial carry chain only sees the (context|h) matmul.
    g_emb_ref[...] = jnp.einsum("tbe,eg->tbg", emb_ref[...], w_lstm_emb_ref[...],
                                preferred_element_type=f32)            # (T, B, 4H)

    w_dec_att = w_dec_att_ref[...]     # (H, A)  bf16
    b_dec_att = b_dec_att_ref[...]     # (1, A)  f32
    w_full = w_full_ref[...]           # (1, A)  f32   (VPU mul+reduce)
    w_lstm_ch = w_lstm_ch_ref[...]     # (E+H, 4H) bf16, gate order (i, f, o, g)
    b_lstm = b_lstm_ref[...]           # (1, 4H) f32
    w_fc = w_fc_ref[...]               # (H+E, Vp) bf16, Vp padded to 128-lane multiple
    b_fc = b_fc_ref[...]               # (1, Vp) f32

    def step(t, carry):
        h, c = carry                   # f32 recurrence

        # ---- Attention (att1 hoisted; `+ b_full` dropped: softmax is shift-invariant) ----
        att2 = (jnp.dot(h.astype(bf16), w_dec_att, preferred_element_type=f32)
                + b_dec_att)                                           # (B, A)
        att = jnp.maximum(att1 + att2[:, None, :], 0.0)                # ReLU, (B, P, A)
        scores = jnp.sum(att * w_full, axis=-1)                        # (B, P)
        m = jnp.max(scores, axis=-1, keepdims=True)
        e = jnp.exp(scores - m)
        alpha = e * pl.reciprocal(jnp.sum(e, axis=-1, keepdims=True), approx=True)
        # NOTE: at realistic P (e.g. 196 for 14x14 features) switch this to an MXU
        # einsum ('bqp,bpe->bqe'); at P=16 the VPU mul+reduce is equivalent.
        context = jnp.sum(enc * alpha[:, :, None], axis=1)             # (B, E) f32

        # ---- LSTM cell: embedding part precomputed; fused (context|h) matmul ----
        g_emb = g_emb_ref[t]                                           # (B, 4H)
        xh = jnp.concatenate([context, h], axis=-1).astype(bf16)       # (B, E+H)
        gates = (g_emb + jnp.dot(xh, w_lstm_ch, preferred_element_type=f32)
                 + b_lstm)                                             # (B, 4H)
        sig = jax.nn.sigmoid(gates[:, : 3 * H])                        # one EUP pass (i,f,o)
        i_g = sig[:, :H]
        f_g = sig[:, H:2 * H]
        o_g = sig[:, 2 * H:3 * H]
        g_g = jnp.tanh(gates[:, 3 * H:])
        c_new = f_g * c + i_g * g_g
        h_new = o_g * jnp.tanh(c_new)

        # ---- Output FC on [h, context]: single fused, vocab-padded (lane-dense) matmul ----
        y = jnp.concatenate([h_new, context], axis=-1).astype(bf16)    # (B, H+E)
        preds = jnp.dot(y, w_fc, preferred_element_type=f32) + b_fc    # (B, Vp)

        preds_ref[t] = preds           # Vp % 128 == 0 -> unmasked lane-dense store
        alpha_ref[t] = alpha
        return (h_new, c_new)

    # T=6 toy: full unroll. For realistic caption lengths (T>=16) use unroll=2..4
    # or put T on an "arbitrary" grid axis with h/c carried in VMEM scratch so the
    # preds writeback is pipelined (mandatory on v7x's 64 MiB VMEM at real vocab
    # sizes, together with a vocab-tile axis and a "parallel" batch-tile axis).
    lax.fori_loop(0, T, step, (h0, c0), unroll=True)


def attention_caption_model_forward(images, captions, params):
    B, C, Hi, Wi = images.shape
    T = captions.shape[1]
    P = HF * WF
    bf16 = jnp.bfloat16

    # Encoder stand-in glue: adaptive avg-pool (Hi,Wi)->(HF,WF); the 1x1-conv + ReLU
    # projection itself is fused into the Pallas kernel below.
    pooled = images.reshape(B, C, HF, Hi // HF, WF, Wi // WF).mean(axis=(3, 5))
    x3 = pooled.transpose(0, 2, 3, 1).reshape(B, P, C)                 # (B, P, C) f32

    # Embedding lookup (glue); dropout = identity (eval mode). Time-major + bf16
    # (only feeds the hoisted gate matmul).
    emb = params["embedding"][captions]                                # (B, T, Em)
    emb3 = jnp.transpose(emb, (1, 0, 2)).astype(bf16)                  # (T, B, Em)

    E = params["w_conv"].shape[1]
    H = params["w_hh"].shape[0]
    V = params["b_fc"].shape[1]

    def reorder_gates(w):  # columns (i, f, g, o) -> (i, f, o, g)
        hh = w.shape[-1] // 4
        return jnp.concatenate([w[:, :2 * hh], w[:, 3 * hh:], w[:, 2 * hh:3 * hh]],
                               axis=-1)

    # LSTM weights: embedding part separated (hoisted matmul), (context|h) part fused.
    w_lstm_emb = reorder_gates(params["w_ih_e"]).astype(bf16)          # (Em, 4H)
    w_lstm_ch = reorder_gates(
        jnp.concatenate([params["w_ih_c"], params["w_hh"]], axis=0)).astype(bf16)  # (E+H, 4H)
    b_lstm = reorder_gates(params["b_lstm"])                           # (1, 4H) f32

    # Output FC fused and zero-padded to a 128-lane multiple for unmasked stores.
    Vp = ((V + 127) // 128) * 128
    w_fc = jnp.concatenate([params["w_fc_h"], params["w_fc_c"]], axis=0)  # (H+E, V)
    w_fc_p = jnp.pad(w_fc, ((0, 0), (0, Vp - V))).astype(bf16)            # (H+E, Vp)
    b_fc_p = jnp.pad(params["b_fc"], ((0, 0), (0, Vp - V)))               # (1, Vp)

    operands = [
        x3, emb3,
        params["w_conv"].astype(bf16), params["b_conv"],
        params["w_enc_att"].astype(bf16), params["b_enc_att"],
        params["w_dec_att"].astype(bf16), params["b_dec_att"],
        params["w_full"],
        w_lstm_emb, w_lstm_ch, b_lstm,
        w_fc_p, b_fc_p,
        params["w_init_h"].astype(bf16), params["b_init_h"],
        params["w_init_c"].astype(bf16), params["b_init_c"],
    ]

    # Grid-less call: every operand / output is VMEM-resident exactly once (no
    # redundant double-buffering), single kernel launch for the whole forward.
    preds_tm, alphas_tm = pl.pallas_call(
        _caption_kernel,
        out_shape=(
            jax.ShapeDtypeStruct((T, B, Vp), jnp.float32),
            jax.ShapeDtypeStruct((T, B, P), jnp.float32),
        ),
        scratch_shapes=[pltpu.VMEM((T, B, 4 * H), jnp.float32)],
    )(*operands)

    # Back to PyTorch layout (B, T, ...) and drop the vocab padding (tiny tensors).
    preds = jnp.transpose(preds_tm, (1, 0, 2))[:, :, :V]
    alphas = jnp.transpose(alphas_tm, (1, 0, 2))
    return preds, alphas


# --------------------------- pure-JAX reference (f32) ---------------------------
def reference_forward(images, captions, params):
    B, C, Hi, Wi = images.shape
    pooled = images.reshape(B, C, HF, Hi // HF, WF, Wi // WF).mean(axis=(3, 5))
    x_flat = pooled.transpose(0, 2, 3, 1).reshape(B * HF * WF, C)
    feat = jax.nn.relu(x_flat @ params["w_conv"] + params["b_conv"])
    enc_out = feat.reshape(B, HF * WF, -1)

    emb = params["embedding"][captions]
    T = captions.shape[1]
    mean_enc = enc_out.mean(axis=1)
    h = mean_enc @ params["w_init_h"] + params["b_init_h"]
    c = mean_enc @ params["w_init_c"] + params["b_init_c"]
    preds_all, alphas_all = [], []
    for t in range(T):
        att1 = jnp.einsum("bpe,ea->bpa", enc_out, params["w_enc_att"]) + params["b_enc_att"]
        att2 = h @ params["w_dec_att"] + params["b_dec_att"]
        att = jax.nn.relu(att1 + att2[:, None, :])
        scores = (att * params["w_full"]).sum(-1) + params["b_full"]
        alpha = jax.nn.softmax(scores, axis=1)
        context = (enc_out * alpha[:, :, None]).sum(axis=1)
        gates = (emb[:, t] @ params["w_ih_e"] + context @ params["w_ih_c"]
                 + h @ params["w_hh"] + params["b_lstm"])
        H = h.shape[-1]
        i_g = jax.nn.sigmoid(gates[:, :H])
        f_g = jax.nn.sigmoid(gates[:, H:2 * H])
        g_g = jnp.tanh(gates[:, 2 * H:3 * H])
        o_g = jax.nn.sigmoid(gates[:, 3 * H:])
        c = f_g * c + i_g * g_g
        h = o_g * jnp.tanh(c)
        preds = h @ params["w_fc_h"] + context @ params["w_fc_c"] + params["b_fc"]
        preds_all.append(preds)
        alphas_all.append(alpha)
    return jnp.stack(preds_all, axis=1), jnp.stack(alphas_all, axis=1)


# --------------------------- deterministic parameter init ---------------------------
def init_params(key, embed_size, hidden_size, vocab_size, attention_dim):
    E, H, V, A, Em = embed_size, hidden_size, vocab_size, attention_dim, embed_size
    ks = jax.random.split(key, 20)

    def w(k, shape, scale=0.1):
        return (jax.random.normal(k, shape, jnp.float32) * scale).astype(jnp.float32)

    return {
        "w_conv": w(ks[0], (3, E)),          # encoder 1x1 conv (stand-in)
        "b_conv": w(ks[1], (1, E)),
        "embedding": w(ks[2], (V, Em)),      # nn.Embedding(vocab, embed)
        "w_enc_att": w(ks[3], (E, A)),       # Attention.encoder_att
        "b_enc_att": w(ks[4], (1, A)),
        "w_dec_att": w(ks[5], (H, A)),       # Attention.decoder_att
        "b_dec_att": w(ks[6], (1, A)),
        "w_full": w(ks[7], (1, A)),          # Attention.full_att (A -> 1)
        "b_full": w(ks[8], (1, 1)),
        "w_ih_e": w(ks[9], (Em, 4 * H)),     # LSTM W_ih split: embedding part
        "w_ih_c": w(ks[10], (E, 4 * H)),     # LSTM W_ih split: context part
        "w_hh": w(ks[11], (H, 4 * H)),       # LSTM W_hh
        "b_lstm": w(ks[12], (1, 4 * H)),     # b_ih + b_hh combined
        "w_init_h": w(ks[13], (E, H)),       # init_h linear
        "b_init_h": w(ks[14], (1, H)),
        "w_init_c": w(ks[15], (E, H)),       # init_c linear
        "b_init_c": w(ks[16], (1, H)),
        "w_fc_h": w(ks[17], (H, V)),         # fc split: hidden part
        "w_fc_c": w(ks[18], (E, V)),         # fc split: context part
        "b_fc": w(ks[19], (1, V)),
    }


if __name__ == "__main__":
    B, C, Hi, Wi = 2, 3, 16, 16
    embed_size, hidden_size, vocab_size, attention_dim = 32, 32, 64, 32
    T = 6  # max caption length

    key = jax.random.PRNGKey(0)
    k_img, k_cap, k_par = jax.random.split(key, 3)
    images = jax.random.normal(k_img, (B, C, Hi, Wi), jnp.float32)
    captions = jax.random.randint(k_cap, (B, T), 0, vocab_size)
    params = init_params(k_par, embed_size, hidden_size, vocab_size, attention_dim)

    preds, alphas = attention_caption_model_forward(images, captions, params)
    preds = jax.block_until_ready(preds)
    alphas = jax.block_until_ready(alphas)

    assert preds.shape == (B, T, vocab_size)
    assert alphas.shape == (B, T, HF * WF)

    # Tolerance covers bf16 MXU operands + approx-reciprocal softmax (f32 reference).
    ref_preds, ref_alphas = reference_forward(images, captions, params)
    np.testing.assert_allclose(np.asarray(preds), np.asarray(ref_preds),
                               rtol=2e-2, atol=2e-2)
    np.testing.assert_allclose(np.asarray(alphas), np.asarray(ref_alphas),
                               rtol=2e-2, atol=2e-2)

    print("KERNEL_OK")
</pallas_src>

<mosaic_0001>
module attributes {stable_mosaic.version = 11 : i64} {
  func.func @_caption_kernel(%arg0: memref<2x16x3xf32, #tpu.memory_space<vmem>>, %arg1: memref<6x2x32xbf16, #tpu.memory_space<vmem>>, %arg2: memref<3x32xbf16, #tpu.memory_space<vmem>>, %arg3: memref<1x32xf32, #tpu.memory_space<vmem>>, %arg4: memref<32x32xbf16, #tpu.memory_space<vmem>>, %arg5: memref<1x32xf32, #tpu.memory_space<vmem>>, %arg6: memref<32x32xbf16, #tpu.memory_space<vmem>>, %arg7: memref<1x32xf32, #tpu.memory_space<vmem>>, %arg8: memref<1x32xf32, #tpu.memory_space<vmem>>, %arg9: memref<32x128xbf16, #tpu.memory_space<vmem>>, %arg10: memref<64x128xbf16, #tpu.memory_space<vmem>>, %arg11: memref<1x128xf32, #tpu.memory_space<vmem>>, %arg12: memref<64x128xbf16, #tpu.memory_space<vmem>>, %arg13: memref<1x128xf32, #tpu.memory_space<vmem>>, %arg14: memref<32x32xbf16, #tpu.memory_space<vmem>>, %arg15: memref<1x32xf32, #tpu.memory_space<vmem>>, %arg16: memref<32x32xbf16, #tpu.memory_space<vmem>>, %arg17: memref<1x32xf32, #tpu.memory_space<vmem>>, %arg18: memref<6x2x128xf32, #tpu.memory_space<vmem>>, %arg19: memref<6x2x16xf32, #tpu.memory_space<vmem>>, %arg20: memref<6x2x128xf32, #tpu.memory_space<vmem>>) attributes {dimension_semantics = [], scalar_prefetch = 0 : i64, scratch_operands = 1 : i64, tpu.core_type = #tpu.core_type<tc>} {
    %c0 = arith.constant 0 : index
    %c0_0 = arith.constant 0 : index
    %c0_1 = arith.constant 0 : index
    %0 = vector.load %arg0[%c0, %c0_0, %c0_1] : memref<2x16x3xf32, #tpu.memory_space<vmem>>, vector<2x16x3xf32>
    %1 = arith.truncf %0 : vector<2x16x3xf32> to vector<2x16x3xbf16>
    %c0_2 = arith.constant 0 : index
    %c0_3 = arith.constant 0 : index
    %2 = vector.load %arg2[%c0_2, %c0_3] : memref<3x32xbf16, #tpu.memory_space<vmem>>, vector<3x32xbf16>
    "tpu.trace_start"() <{level = 10 : i32, message = "bpc,ce->bpe"}> : () -> ()
    %cst = arith.constant dense<0.000000e+00> : vector<2x16x32xf32>
    %3 = tpu.matmul %1, %2, %cst {dimension_numbers = #tpu.dot_dimension_numbers<[2], [0], [0, 1], [1], [0, 0, 0, 1, 1, 1], [], []>} : vector<2x16x3xbf16>, vector<3x32xbf16>, vector<2x16x32xf32> -> vector<2x16x32xf32>
    "tpu.trace_stop"() : () -> ()
    %c0_4 = arith.constant 0 : index
    %c0_5 = arith.constant 0 : index
    %4 = vector.load %arg3[%c0_4, %c0_5] : memref<1x32xf32, #tpu.memory_space<vmem>>, vector<1x32xf32>
    %5 = vector.shape_cast %4 : vector<1x32xf32> to vector<1x1x32xf32>
    %6 = vector.broadcast %5 : vector<1x1x32xf32> to vector<2x16x32xf32>
    %7 = arith.addf %3, %6 : vector<2x16x32xf32>
    %cst_6 = arith.constant 0.000000e+00 : f32
    %8 = vector.broadcast %cst_6 : f32 to vector<2x16x32xf32>
    %9 = arith.maximumf %7, %8 : vector<2x16x32xf32>
    %cst_7 = arith.constant dense<0.000000e+00> : vector<2x32xf32>
    %10 = vector.multi_reduction <add>, %9, %cst_7 [1] : vector<2x16x32xf32> to vector<2x32xf32>
    %cst_8 = arith.constant 1.600000e+01 : f32
    %11 = vector.broadcast %cst_8 : f32 to vector<2x32xf32>
    %12 = arith.divf %10, %11 : vector<2x32xf32>
    %13 = arith.truncf %12 : vector<2x32xf32> to vector<2x32xbf16>
    %c0_9 = arith.constant 0 : index
    %c0_10 = arith.constant 0 : index
    %14 = vector.load %arg14[%c0_9, %c0_10] : memref<32x32xbf16, #tpu.memory_space<vmem>>, vector<32x32xbf16>
    %cst_11 = arith.constant dense<0.000000e+00> : vector<2x32xf32>
    %15 = tpu.matmul %13, %14, %cst_11 {dimension_numbers = #tpu.dot_dimension_numbers<[1], [0], [0], [1], [0, 0, 1, 1], [], []>} : vector<2x32xbf16>, vector<32x32xbf16>, vector<2x32xf32> -> vector<2x32xf32>
    %c0_12 = arith.constant 0 : index
    %c0_13 = arith.constant 0 : index
    %16 = vector.load %arg15[%c0_12, %c0_13] : memref<1x32xf32, #tpu.memory_space<vmem>>, vector<1x32xf32>
    %17 = vector.broadcast %16 : vector<1x32xf32> to vector<2x32xf32>
    %18 = arith.addf %15, %17 : vector<2x32xf32>
    %c0_14 = arith.constant 0 : index
    %c0_15 = arith.constant 0 : index
    %19 = vector.load %arg16[%c0_14, %c0_15] : memref<32x32xbf16, #tpu.memory_space<vmem>>, vector<32x32xbf16>
    %cst_16 = arith.constant dense<0.000000e+00> : vector<2x32xf32>
    %20 = tpu.matmul %13, %19, %cst_16 {dimension_numbers = #tpu.dot_dimension_numbers<[1], [0], [0], [1], [0, 0, 1, 1], [], []>} : vector<2x32xbf16>, vector<32x32xbf16>, vector<2x32xf32> -> vector<2x32xf32>
    %c0_17 = arith.constant 0 : index
    %c0_18 = arith.constant 0 : index
    %21 = vector.load %arg17[%c0_17, %c0_18] : memref<1x32xf32, #tpu.memory_space<vmem>>, vector<1x32xf32>
    %22 = vector.broadcast %21 : vector<1x32xf32> to vector<2x32xf32>
    %23 = arith.addf %20, %22 : vector<2x32xf32>
    %24 = arith.truncf %9 : vector<2x16x32xf32> to vector<2x16x32xbf16>
    %c0_19 = arith.constant 0 : index
    %c0_20 = arith.constant 0 : index
    %25 = vector.load %arg4[%c0_19, %c0_20] : memref<32x32xbf16, #tpu.memory_space<vmem>>, vector<32x32xbf16>
    "tpu.trace_start"() <{level = 10 : i32, message = "bpe,ea->bpa"}> : () -> ()
    %cst_21 = arith.constant dense<0.000000e+00> : vector<2x16x32xf32>
    %26 = tpu.matmul %24, %25, %cst_21 {dimension_numbers = #tpu.dot_dimension_numbers<[2], [0], [0, 1], [1], [0, 0, 0, 1, 1, 1], [], []>} : vector<2x16x32xbf16>, vector<32x32xbf16>, vector<2x16x32xf32> -> vector<2x16x32xf32>
    "tpu.trace_stop"() : () -> ()
    %c0_22 = arith.constant 0 : index
    %c0_23 = arith.constant 0 : index
    %27 = vector.load %arg5[%c0_22, %c0_23] : memref<1x32xf32, #tpu.memory_space<vmem>>, vector<1x32xf32>
    %28 = vector.shape_cast %27 : vector<1x32xf32> to vector<1x1x32xf32>
    %29 = vector.broadcast %28 : vector<1x1x32xf32> to vector<2x16x32xf32>
    %30 = arith.addf %26, %29 : vector<2x16x32xf32>
    %c0_24 = arith.constant 0 : index
    %c0_25 = arith.constant 0 : index
    %c0_26 = arith.constant 0 : index
    %31 = vector.load %arg1[%c0_24, %c0_25, %c0_26] : memref<6x2x32xbf16, #tpu.memory_space<vmem>>, vector<6x2x32xbf16>
    %c0_27 = arith.constant 0 : index
    %c0_28 = arith.constant 0 : index
    %32 = vector.load %arg9[%c0_27, %c0_28] : memref<32x128xbf16, #tpu.memory_space<vmem>>, vector<32x128xbf16>
    "tpu.trace_start"() <{level = 10 : i32, message = "tbe,eg->tbg"}> : () -> ()
    %cst_29 = arith.constant dense<0.000000e+00> : vector<6x2x128xf32>
    %33 = tpu.matmul %31, %32, %cst_29 {dimension_numbers = #tpu.dot_dimension_numbers<[2], [0], [0, 1], [1], [0, 0, 0, 1, 1, 1], [], []>} : vector<6x2x32xbf16>, vector<32x128xbf16>, vector<6x2x128xf32> -> vector<6x2x128xf32>
    "tpu.trace_stop"() : () -> ()
    %c0_30 = arith.constant 0 : index
    %c0_31 = arith.constant 0 : index
    %c0_32 = arith.constant 0 : index
    %34 = vector.load %arg20[%c0_30, %c0_31, %c0_32] : memref<6x2x128xf32, #tpu.memory_space<vmem>>, vector<6x2x128xf32>
    tpu.vector_store %arg20[%c0_30, %c0_31, %c0_32], %33 {strides = array<i32>} : memref<6x2x128xf32, #tpu.memory_space<vmem>>, vector<6x2x128xf32>,
    %c0_33 = arith.constant 0 : index
    %c0_34 = arith.constant 0 : index
    %35 = vector.load %arg6[%c0_33, %c0_34] : memref<32x32xbf16, #tpu.memory_space<vmem>>, vector<32x32xbf16>
    %c0_35 = arith.constant 0 : index
    %c0_36 = arith.constant 0 : index
    %36 = vector.load %arg7[%c0_35, %c0_36] : memref<1x32xf32, #tpu.memory_space<vmem>>, vector<1x32xf32>
    %c0_37 = arith.constant 0 : index
    %c0_38 = arith.constant 0 : index
    %37 = vector.load %arg8[%c0_37, %c0_38] : memref<1x32xf32, #tpu.memory_space<vmem>>, vector<1x32xf32>
    %c0_39 = arith.constant 0 : index
    %c0_40 = arith.constant 0 : index
    %38 = vector.load %arg10[%c0_39, %c0_40] : memref<64x128xbf16, #tpu.memory_space<vmem>>, vector<64x128xbf16>
    %c0_41 = arith.constant 0 : index
    %c0_42 = arith.constant 0 : index
    %39 = vector.load %arg11[%c0_41, %c0_42] : memref<1x128xf32, #tpu.memory_space<vmem>>, vector<1x128xf32>
    %c0_43 = arith.constant 0 : index
    %c0_44 = arith.constant 0 : index
    %40 = vector.load %arg12[%c0_43, %c0_44] : memref<64x128xbf16, #tpu.memory_space<vmem>>, vector<64x128xbf16>
    %c0_45 = arith.constant 0 : index
    %c0_46 = arith.constant 0 : index
    %41 = vector.load %arg13[%c0_45, %c0_46] : memref<1x128xf32, #tpu.memory_space<vmem>>, vector<1x128xf32>
    %c0_i32 = arith.constant 0 : i32
    %42 = arith.truncf %18 : vector<2x32xf32> to vector<2x32xbf16>
    %cst_47 = arith.constant dense<0.000000e+00> : vector<2x32xf32>
    %43 = tpu.matmul %42, %35, %cst_47 {dimension_numbers = #tpu.dot_dimension_numbers<[1], [0], [0], [1], [0, 0, 1, 1], [], []>} : vector<2x32xbf16>, vector<32x32xbf16>, vector<2x32xf32> -> vector<2x32xf32>
    %44 = vector.broadcast %36 : vector<1x32xf32> to vector<2x32xf32>
    %45 = arith.addf %43, %44 : vector<2x32xf32>
    %46 = vector.shape_cast %45 : vector<2x32xf32> to vector<2x1x32xf32>
    %47 = vector.broadcast %46 : vector<2x1x32xf32> to vector<2x16x32xf32>
    %48 = arith.addf %30, %47 : vector<2x16x32xf32>
    %cst_48 = arith.constant 0.000000e+00 : f32
    %49 = vector.broadcast %cst_48 : f32 to vector<2x16x32xf32>
    %50 = arith.maximumf %48, %49 : vector<2x16x32xf32>
    %51 = vector.shape_cast %37 : vector<1x32xf32> to vector<1x1x32xf32>
    %52 = vector.broadcast %51 : vector<1x1x32xf32> to vector<2x16x32xf32>
    %53 = arith.mulf %50, %52 : vector<2x16x32xf32>
    %cst_49 = arith.constant dense<0.000000e+00> : vector<2x16xf32>
    %54 = vector.multi_reduction <add>, %53, %cst_49 [2] : vector<2x16x32xf32> to vector<2x16xf32>
    %cst_50 = arith.constant dense<0xFF800000> : vector<2xf32>
    %55 = vector.multi_reduction <maximumf>, %54, %cst_50 [1] : vector<2x16xf32> to vector<2xf32>
    %56 = vector.shape_cast %55 : vector<2xf32> to vector<2x1xf32>
    %57 = vector.broadcast %56 : vector<2x1xf32> to vector<2x16xf32>
    %58 = arith.subf %54, %57 : vector<2x16xf32>
    %59 = math.exp %58 : vector<2x16xf32>
    %cst_51 = arith.constant dense<0.000000e+00> : vector<2xf32>
    %60 = vector.multi_reduction <add>, %59, %cst_51 [1] : vector<2x16xf32> to vector<2xf32>
    %61 = vector.shape_cast %60 : vector<2xf32> to vector<2x1xf32>
    %62 = tpu.reciprocal %61 {approx = true} : vector<2x1xf32> -> vector<2x1xf32>
    %63 = vector.broadcast %62 : vector<2x1xf32> to vector<2x16xf32>
    %64 = arith.mulf %59, %63 : vector<2x16xf32>
    %65 = vector.shape_cast %64 : vector<2x16xf32> to vector<2x16x1xf32>
    %66 = vector.broadcast %65 : vector<2x16x1xf32> to vector<2x16x32xf32>
    %67 = arith.mulf %9, %66 : vector<2x16x32xf32>
    %cst_52 = arith.constant dense<0.000000e+00> : vector<2x32xf32>
    %68 = vector.multi_reduction <add>, %67, %cst_52 [1] : vector<2x16x32xf32> to vector<2x32xf32>
    %69 = arith.index_cast %c0_i32 : i32 to index
    %c0_53 = arith.constant 0 : index
    %c0_54 = arith.constant 0 : index
    %70 = vector.load %arg20[%69, %c0_53, %c0_54] : memref<6x2x128xf32, #tpu.memory_space<vmem>>, vector<1x2x128xf32>
    %71 = vector.shape_cast %70 : vector<1x2x128xf32> to vector<2x128xf32>
    %72 = tpu.concatenate %68, %18 in 1 : vector<2x32xf32>, vector<2x32xf32> -> vector<2x64xf32>
    %73 = arith.truncf %72 : vector<2x64xf32> to vector<2x64xbf16>
    %cst_55 = arith.constant dense<0.000000e+00> : vector<2x128xf32>
    %74 = tpu.matmul %73, %38, %cst_55 {dimension_numbers = #tpu.dot_dimension_numbers<[1], [0], [0], [1], [0, 0, 1, 1], [], []>} : vector<2x64xbf16>, vector<64x128xbf16>, vector<2x128xf32> -> vector<2x128xf32>
    %75 = arith.addf %71, %74 : vector<2x128xf32>
    %76 = vector.broadcast %39 : vector<1x128xf32> to vector<2x128xf32>
    %77 = arith.addf %75, %76 : vector<2x128xf32>
    %78 = vector.extract_strided_slice %77 {offsets = [0, 0], sizes = [2, 96], strides = [1, 1]} : vector<2x128xf32> to vector<2x96xf32>
    %79 = arith.negf %78 : vector<2x96xf32>
    %80 = math.exp %79 : vector<2x96xf32>
    %cst_56 = arith.constant 1.000000e+00 : f32
    %81 = vector.broadcast %cst_56 : f32 to vector<2x96xf32>
    %82 = arith.addf %81, %80 : vector<2x96xf32>
    %83 = arith.divf %81, %82 : vector<2x96xf32>
    %84 = vector.extract_strided_slice %83 {offsets = [0, 0], sizes = [2, 32], strides = [1, 1]} : vector<2x96xf32> to vector<2x32xf32>
    %85 = vector.extract_strided_slice %83 {offsets = [0, 32], sizes = [2, 32], strides = [1, 1]} : vector<2x96xf32> to vector<2x32xf32>
    %86 = vector.extract_strided_slice %83 {offsets = [0, 64], sizes = [2, 32], strides = [1, 1]} : vector<2x96xf32> to vector<2x32xf32>
    %87 = vector.extract_strided_slice %77 {offsets = [0, 96], sizes = [2, 32], strides = [1, 1]} : vector<2x128xf32> to vector<2x32xf32>
    %88 = math.tanh %87 : vector<2x32xf32>
    %89 = arith.mulf %85, %23 : vector<2x32xf32>
    %90 = arith.mulf %84, %88 : vector<2x32xf32>
    %91 = arith.addf %89, %90 : vector<2x32xf32>
    %92 = math.tanh %91 : vector<2x32xf32>
    %93 = arith.mulf %86, %92 : vector<2x32xf32>
    %94 = tpu.concatenate %93, %68 in 1 : vector<2x32xf32>, vector<2x32xf32> -> vector<2x64xf32>
    %95 = arith.truncf %94 : vector<2x64xf32> to vector<2x64xbf16>
    %cst_57 = arith.constant dense<0.000000e+00> : vector<2x128xf32>
    %96 = tpu.matmul %95, %40, %cst_57 {dimension_numbers = #tpu.dot_dimension_numbers<[1], [0], [0], [1], [0, 0, 1, 1], [], []>} : vector<2x64xbf16>, vector<64x128xbf16>, vector<2x128xf32> -> vector<2x128xf32>
    %97 = vector.broadcast %41 : vector<1x128xf32> to vector<2x128xf32>
    %98 = arith.addf %96, %97 : vector<2x128xf32>
    %99 = arith.index_cast %c0_i32 : i32 to index
    %c0_58 = arith.constant 0 : index
    %c0_59 = arith.constant 0 : index
    %100 = vector.load %arg18[%99, %c0_58, %c0_59] : memref<6x2x128xf32, #tpu.memory_space<vmem>>, vector<1x2x128xf32>
    %101 = vector.shape_cast %100 : vector<1x2x128xf32> to vector<2x128xf32>
    %102 = vector.shape_cast %98 : vector<2x128xf32> to vector<1x2x128xf32>
    tpu.vector_store %arg18[%99, %c0_58, %c0_59], %102 {strides = array<i32>} : memref<6x2x128xf32, #tpu.memory_space<vmem>>, vector<1x2x128xf32>,
    %103 = arith.index_cast %c0_i32 : i32 to index
    %c0_60 = arith.constant 0 : index
    %c0_61 = arith.constant 0 : index
    %104 = vector.load %arg19[%103, %c0_60, %c0_61] : memref<6x2x16xf32, #tpu.memory_space<vmem>>, vector<1x2x16xf32>
    %105 = vector.shape_cast %104 : vector<1x2x16xf32> to vector<2x16xf32>
    %106 = vector.shape_cast %64 : vector<2x16xf32> to vector<1x2x16xf32>
    tpu.vector_store %arg19[%103, %c0_60, %c0_61], %106 {strides = array<i32>} : memref<6x2x16xf32, #tpu.memory_space<vmem>>, vector<1x2x16xf32>,
    %c1_i32 = arith.constant 1 : i32
    %107 = arith.truncf %93 : vector<2x32xf32> to vector<2x32xbf16>
    %cst_62 = arith.constant dense<0.000000e+00> : vector<2x32xf32>
    %108 = tpu.matmul %107, %35, %cst_62 {dimension_numbers = #tpu.dot_dimension_numbers<[1], [0], [0], [1], [0, 0, 1, 1], [], []>} : vector<2x32xbf16>, vector<32x32xbf16>, vector<2x32xf32> -> vector<2x32xf32>
    %109 = vector.broadcast %36 : vector<1x32xf32> to vector<2x32xf32>
    %110 = arith.addf %108, %109 : vector<2x32xf32>
    %111 = vector.shape_cast %110 : vector<2x32xf32> to vector<2x1x32xf32>
    %112 = vector.broadcast %111 : vector<2x1x32xf32> to vector<2x16x32xf32>
    %113 = arith.addf %30, %112 : vector<2x16x32xf32>
    %cst_63 = arith.constant 0.000000e+00 : f32
    %114 = vector.broadcast %cst_63 : f32 to vector<2x16x32xf32>
    %115 = arith.maximumf %113, %114 : vector<2x16x32xf32>
    %116 = vector.shape_cast %37 : vector<1x32xf32> to vector<1x1x32xf32>
    %117 = vector.broadcast %116 : vector<1x1x32xf32> to vector<2x16x32xf32>
    %118 = arith.mulf %115, %117 : vector<2x16x32xf32>
    %cst_64 = arith.constant dense<0.000000e+00> : vector<2x16xf32>
    %119 = vector.multi_reduction <add>, %118, %cst_64 [2] : vector<2x16x32xf32> to vector<2x16xf32>
    %cst_65 = arith.constant dense<0xFF800000> : vector<2xf32>
    %120 = vector.multi_reduction <maximumf>, %119, %cst_65 [1] : vector<2x16xf32> to vector<2xf32>
    %121 = vector.shape_cast %120 : vector<2xf32> to vector<2x1xf32>
    %122 = vector.broadcast %121 : vector<2x1xf32> to vector<2x16xf32>
    %123 = arith.subf %119, %122 : vector<2x16xf32>
    %124 = math.exp %123 : vector<2x16xf32>
    %cst_66 = arith.constant dense<0.000000e+00> : vector<2xf32>
    %125 = vector.multi_reduction <add>, %124, %cst_66 [1] : vector<2x16xf32> to vector<2xf32>
    %126 = vector.shape_cast %125 : vector<2xf32> to vector<2x1xf32>
    %127 = tpu.reciprocal %126 {approx = true} : vector<2x1xf32> -> vector<2x1xf32>
    %128 = vector.broadcast %127 : vector<2x1xf32> to vector<2x16xf32>
    %129 = arith.mulf %124, %128 : vector<2x16xf32>
    %130 = vector.shape_cast %129 : vector<2x16xf32> to vector<2x16x1xf32>
    %131 = vector.broadcast %130 : vector<2x16x1xf32> to vector<2x16x32xf32>
    %132 = arith.mulf %9, %131 : vector<2x16x32xf32>
    %cst_67 = arith.constant dense<0.000000e+00> : vector<2x32xf32>
    %133 = vector.multi_reduction <add>, %132, %cst_67 [1] : vector<2x16x32xf32> to vector<2x32xf32>
    %134 = arith.index_cast %c1_i32 : i32 to index
    %c0_68 = arith.constant 0 : index
    %c0_69 = arith.constant 0 : index
    %135 = vector.load %arg20[%134, %c0_68, %c0_69] : memref<6x2x128xf32, #tpu.memory_space<vmem>>, vector<1x2x128xf32>
    %136 = vector.shape_cast %135 : vector<1x2x128xf32> to vector<2x128xf32>
    %137 = tpu.concatenate %133, %93 in 1 : vector<2x32xf32>, vector<2x32xf32> -> vector<2x64xf32>
    %138 = arith.truncf %137 : vector<2x64xf32> to vector<2x64xbf16>
    %cst_70 = arith.constant dense<0.000000e+00> : vector<2x128xf32>
    %139 = tpu.matmul %138, %38, %cst_70 {dimension_numbers = #tpu.dot_dimension_numbers<[1], [0], [0], [1], [0, 0, 1, 1], [], []>} : vector<2x64xbf16>, vector<64x128xbf16>, vector<2x128xf32> -> vector<2x128xf32>
    %140 = arith.addf %136, %139 : vector<2x128xf32>
    %141 = vector.broadcast %39 : vector<1x128xf32> to vector<2x128xf32>
    %142 = arith.addf %140, %141 : vector<2x128xf32>
    %143 = vector.extract_strided_slice %142 {offsets = [0, 0], sizes = [2, 96], strides = [1, 1]} : vector<2x128xf32> to vector<2x96xf32>
    %144 = arith.negf %143 : vector<2x96xf32>
    %145 = math.exp %144 : vector<2x96xf32>
    %cst_71 = arith.constant 1.000000e+00 : f32
    %146 = vector.broadcast %cst_71 : f32 to vector<2x96xf32>
    %147 = arith.addf %146, %145 : vector<2x96xf32>
    %148 = arith.divf %146, %147 : vector<2x96xf32>
    %149 = vector.extract_strided_slice %148 {offsets = [0, 0], sizes = [2, 32], strides = [1, 1]} : vector<2x96xf32> to vector<2x32xf32>
    %150 = vector.extract_strided_slice %148 {offsets = [0, 32], sizes = [2, 32], strides = [1, 1]} : vector<2x96xf32> to vector<2x32xf32>
    %151 = vector.extract_strided_slice %148 {offsets = [0, 64], sizes = [2, 32], strides = [1, 1]} : vector<2x96xf32> to vector<2x32xf32>
    %152 = vector.extract_strided_slice %142 {offsets = [0, 96], sizes = [2, 32], strides = [1, 1]} : vector<2x128xf32> to vector<2x32xf32>
    %153 = math.tanh %152 : vector<2x32xf32>
    %154 = arith.mulf %150, %91 : vector<2x32xf32>
    %155 = arith.mulf %149, %153 : vector<2x32xf32>
    %156 = arith.addf %154, %155 : vector<2x32xf32>
    %157 = math.tanh %156 : vector<2x32xf32>
    %158 = arith.mulf %151, %157 : vector<2x32xf32>
    %159 = tpu.concatenate %158, %133 in 1 : vector<2x32xf32>, vector<2x32xf32> -> vector<2x64xf32>
    %160 = arith.truncf %159 : vector<2x64xf32> to vector<2x64xbf16>
    %cst_72 = arith.constant dense<0.000000e+00> : vector<2x128xf32>
    %161 = tpu.matmul %160, %40, %cst_72 {dimension_numbers = #tpu.dot_dimension_numbers<[1], [0], [0], [1], [0, 0, 1, 1], [], []>} : vector<2x64xbf16>, vector<64x128xbf16>, vector<2x128xf32> -> vector<2x128xf32>
    %162 = vector.broadcast %41 : vector<1x128xf32> to vector<2x128xf32>
    %163 = arith.addf %161, %162 : vector<2x128xf32>
    %164 = arith.index_cast %c1_i32 : i32 to index
    %c0_73 = arith.constant 0 : index
    %c0_74 = arith.constant 0 : index
    %165 = vector.load %arg18[%164, %c0_73, %c0_74] : memref<6x2x128xf32, #tpu.memory_space<vmem>>, vector<1x2x128xf32>
    %166 = vector.shape_cast %165 : vector<1x2x128xf32> to vector<2x128xf32>
    %167 = vector.shape_cast %163 : vector<2x128xf32> to vector<1x2x128xf32>
    tpu.vector_store %arg18[%164, %c0_73, %c0_74], %167 {strides = array<i32>} : memref<6x2x128xf32, #tpu.memory_space<vmem>>, vector<1x2x128xf32>,
    %168 = arith.index_cast %c1_i32 : i32 to index
    %c0_75 = arith.constant 0 : index
    %c0_76 = arith.constant 0 : index
    %169 = vector.load %arg19[%168, %c0_75, %c0_76] : memref<6x2x16xf32, #tpu.memory_space<vmem>>, vector<1x2x16xf32>
    %170 = vector.shape_cast %169 : vector<1x2x16xf32> to vector<2x16xf32>
    %171 = vector.shape_cast %129 : vector<2x16xf32> to vector<1x2x16xf32>
    tpu.vector_store %arg19[%168, %c0_75, %c0_76], %171 {strides = array<i32>} : memref<6x2x16xf32, #tpu.memory_space<vmem>>, vector<1x2x16xf32>,
    %c2_i32 = arith.constant 2 : i32
    %172 = arith.truncf %158 : vector<2x32xf32> to vector<2x32xbf16>
    %cst_77 = arith.constant dense<0.000000e+00> : vector<2x32xf32>
    %173 = tpu.matmul %172, %35, %cst_77 {dimension_numbers = #tpu.dot_dimension_numbers<[1], [0], [0], [1], [0, 0, 1, 1], [], []>} : vector<2x32xbf16>, vector<32x32xbf16>, vector<2x32xf32> -> vector<2x32xf32>
    %174 = vector.broadcast %36 : vector<1x32xf32> to vector<2x32xf32>
    %175 = arith.addf %173, %174 : vector<2x32xf32>
    %176 = vector.shape_cast %175 : vector<2x32xf32> to vector<2x1x32xf32>
    %177 = vector.broadcast %176 : vector<2x1x32xf32> to vector<2x16x32xf32>
    %178 = arith.addf %30, %177 : vector<2x16x32xf32>
    %cst_78 = arith.constant 0.000000e+00 : f32
    %179 = vector.broadcast %cst_78 : f32 to vector<2x16x32xf32>
    %180 = arith.maximumf %178, %179 : vector<2x16x32xf32>
    %181 = vector.shape_cast %37 : vector<1x32xf32> to vector<1x1x32xf32>
    %182 = vector.broadcast %181 : vector<1x1x32xf32> to vector<2x16x32xf32>
    %183 = arith.mulf %180, %182 : vector<2x16x32xf32>
    %cst_79 = arith.constant dense<0.000000e+00> : vector<2x16xf32>
    %184 = vector.multi_reduction <add>, %183, %cst_79 [2] : vector<2x16x32xf32> to vector<2x16xf32>
    %cst_80 = arith.constant dense<0xFF800000> : vector<2xf32>
    %185 = vector.multi_reduction <maximumf>, %184, %cst_80 [1] : vector<2x16xf32> to vector<2xf32>
    %186 = vector.shape_cast %185 : vector<2xf32> to vector<2x1xf32>
    %187 = vector.broadcast %186 : vector<2x1xf32> to vector<2x16xf32>
    %188 = arith.subf %184, %187 : vector<2x16xf32>
    %189 = math.exp %188 : vector<2x16xf32>
    %cst_81 = arith.constant dense<0.000000e+00> : vector<2xf32>
    %190 = vector.multi_reduction <add>, %189, %cst_81 [1] : vector<2x16xf32> to vector<2xf32>
    %191 = vector.shape_cast %190 : vector<2xf32> to vector<2x1xf32>
    %192 = tpu.reciprocal %191 {approx = true} : vector<2x1xf32> -> vector<2x1xf32>
    %193 = vector.broadcast %192 : vector<2x1xf32> to vector<2x16xf32>
    %194 = arith.mulf %189, %193 : vector<2x16xf32>
    %195 = vector.shape_cast %194 : vector<2x16xf32> to vector<2x16x1xf32>
    %196 = vector.broadcast %195 : vector<2x16x1xf32> to vector<2x16x32xf32>
    %197 = arith.mulf %9, %196 : vector<2x16x32xf32>
    %cst_82 = arith.constant dense<0.000000e+00> : vector<2x32xf32>
    %198 = vector.multi_reduction <add>, %197, %cst_82 [1] : vector<2x16x32xf32> to vector<2x32xf32>
    %199 = arith.index_cast %c2_i32 : i32 to index
    %c0_83 = arith.constant 0 : index
    %c0_84 = arith.constant 0 : index
    %200 = vector.load %arg20[%199, %c0_83, %c0_84] : memref<6x2x128xf32, #tpu.memory_space<vmem>>, vector<1x2x128xf32>
    %201 = vector.shape_cast %200 : vector<1x2x128xf32> to vector<2x128xf32>
    %202 = tpu.concatenate %198, %158 in 1 : vector<2x32xf32>, vector<2x32xf32> -> vector<2x64xf32>
    %203 = arith.truncf %202 : vector<2x64xf32> to vector<2x64xbf16>
    %cst_85 = arith.constant dense<0.000000e+00> : vector<2x128xf32>
    %204 = tpu.matmul %203, %38, %cst_85 {dimension_numbers = #tpu.dot_dimension_numbers<[1], [0], [0], [1], [0, 0, 1, 1], [], []>} : vector<2x64xbf16>, vector<64x128xbf16>, vector<2x128xf32> -> vector<2x128xf32>
    %205 = arith.addf %201, %204 : vector<2x128xf32>
    %206 = vector.broadcast %39 : vector<1x128xf32> to vector<2x128xf32>
    %207 = arith.addf %205, %206 : vector<2x128xf32>
    %208 = vector.extract_strided_slice %207 {offsets = [0, 0], sizes = [2, 96], strides = [1, 1]} : vector<2x128xf32> to vector<2x96xf32>
    %209 = arith.negf %208 : vector<2x96xf32>
    %210 = math.exp %209 : vector<2x96xf32>
    %cst_86 = arith.constant 1.000000e+00 : f32
    %211 = vector.broadcast %cst_86 : f32 to vector<2x96xf32>
    %212 = arith.addf %211, %210 : vector<2x96xf32>
    %213 = arith.divf %211, %212 : vector<2x96xf32>
    %214 = vector.extract_strided_slice %213 {offsets = [0, 0], sizes = [2, 32], strides = [1, 1]} : vector<2x96xf32> to vector<2x32xf32>
    %215 = vector.extract_strided_slice %213 {offsets = [0, 32], sizes = [2, 32], strides = [1, 1]} : vector<2x96xf32> to vector<2x32xf32>
    %216 = vector.extract_strided_slice %213 {offsets = [0, 64], sizes = [2, 32], strides = [1, 1]} : vector<2x96xf32> to vector<2x32xf32>
    %217 = vector.extract_strided_slice %207 {offsets = [0, 96], sizes = [2, 32], strides = [1, 1]} : vector<2x128xf32> to vector<2x32xf32>
    %218 = math.tanh %217 : vector<2x32xf32>
    %219 = arith.mulf %215, %156 : vector<2x32xf32>
    %220 = arith.mulf %214, %218 : vector<2x32xf32>
    %221 = arith.addf %219, %220 : vector<2x32xf32>
    %222 = math.tanh %221 : vector<2x32xf32>
    %223 = arith.mulf %216, %222 : vector<2x32xf32>
    %224 = tpu.concatenate %223, %198 in 1 : vector<2x32xf32>, vector<2x32xf32> -> vector<2x64xf32>
    %225 = arith.truncf %224 : vector<2x64xf32> to vector<2x64xbf16>
    %cst_87 = arith.constant dense<0.000000e+00> : vector<2x128xf32>
    %226 = tpu.matmul %225, %40, %cst_87 {dimension_numbers = #tpu.dot_dimension_numbers<[1], [0], [0], [1], [0, 0, 1, 1], [], []>} : vector<2x64xbf16>, vector<64x128xbf16>, vector<2x128xf32> -> vector<2x128xf32>
    %227 = vector.broadcast %41 : vector<1x128xf32> to vector<2x128xf32>
    %228 = arith.addf %226, %227 : vector<2x128xf32>
    %229 = arith.index_cast %c2_i32 : i32 to index
    %c0_88 = arith.constant 0 : index
    %c0_89 = arith.constant 0 : index
    %230 = vector.load %arg18[%229, %c0_88, %c0_89] : memref<6x2x128xf32, #tpu.memory_space<vmem>>, vector<1x2x128xf32>
    %231 = vector.shape_cast %230 : vector<1x2x128xf32> to vector<2x128xf32>
    %232 = vector.shape_cast %228 : vector<2x128xf32> to vector<1x2x128xf32>
    tpu.vector_store %arg18[%229, %c0_88, %c0_89], %232 {strides = array<i32>} : memref<6x2x128xf32, #tpu.memory_space<vmem>>, vector<1x2x128xf32>,
    %233 = arith.index_cast %c2_i32 : i32 to index
    %c0_90 = arith.constant 0 : index
    %c0_91 = arith.constant 0 : index
    %234 = vector.load %arg19[%233, %c0_90, %c0_91] : memref<6x2x16xf32, #tpu.memory_space<vmem>>, vector<1x2x16xf32>
    %235 = vector.shape_cast %234 : vector<1x2x16xf32> to vector<2x16xf32>
    %236 = vector.shape_cast %194 : vector<2x16xf32> to vector<1x2x16xf32>
    tpu.vector_store %arg19[%233, %c0_90, %c0_91], %236 {strides = array<i32>} : memref<6x2x16xf32, #tpu.memory_space<vmem>>, vector<1x2x16xf32>,
    %c3_i32 = arith.constant 3 : i32
    %237 = arith.truncf %223 : vector<2x32xf32> to vector<2x32xbf16>
    %cst_92 = arith.constant dense<0.000000e+00> : vector<2x32xf32>
    %238 = tpu.matmul %237, %35, %cst_92 {dimension_numbers = #tpu.dot_dimension_numbers<[1], [0], [0], [1], [0, 0, 1, 1], [], []>} : vector<2x32xbf16>, vector<32x32xbf16>, vector<2x32xf32> -> vector<2x32xf32>
    %239 = vector.broadcast %36 : vector<1x32xf32> to vector<2x32xf32>
    %240 = arith.addf %238, %239 : vector<2x32xf32>
    %241 = vector.shape_cast %240 : vector<2x32xf32> to vector<2x1x32xf32>
    %242 = vector.broadcast %241 : vector<2x1x32xf32> to vector<2x16x32xf32>
    %243 = arith.addf %30, %242 : vector<2x16x32xf32>
    %cst_93 = arith.constant 0.000000e+00 : f32
    %244 = vector.broadcast %cst_93 : f32 to vector<2x16x32xf32>
    %245 = arith.maximumf %243, %244 : vector<2x16x32xf32>
    %246 = vector.shape_cast %37 : vector<1x32xf32> to vector<1x1x32xf32>
    %247 = vector.broadcast %246 : vector<1x1x32xf32> to vector<2x16x32xf32>
    %248 = arith.mulf %245, %247 : vector<2x16x32xf32>
    %cst_94 = arith.constant dense<0.000000e+00> : vector<2x16xf32>
    %249 = vector.multi_reduction <add>, %248, %cst_94 [2] : vector<2x16x32xf32> to vector<2x16xf32>
    %cst_95 = arith.constant dense<0xFF800000> : vector<2xf32>
    %250 = vector.multi_reduction <maximumf>, %249, %cst_95 [1] : vector<2x16xf32> to vector<2xf32>
    %251 = vector.shape_cast %250 : vector<2xf32> to vector<2x1xf32>
    %252 = vector.broadcast %251 : vector<2x1xf32> to vector<2x16xf32>
    %253 = arith.subf %249, %252 : vector<2x16xf32>
    %254 = math.exp %253 : vector<2x16xf32>
    %cst_96 = arith.constant dense<0.000000e+00> : vector<2xf32>
    %255 = vector.multi_reduction <add>, %254, %cst_96 [1] : vector<2x16xf32> to vector<2xf32>
    %256 = vector.shape_cast %255 : vector<2xf32> to vector<2x1xf32>
    %257 = tpu.reciprocal %256 {approx = true} : vector<2x1xf32> -> vector<2x1xf32>
    %258 = vector.broadcast %257 : vector<2x1xf32> to vector<2x16xf32>
    %259 = arith.mulf %254, %258 : vector<2x16xf32>
    %260 = vector.shape_cast %259 : vector<2x16xf32> to vector<2x16x1xf32>
    %261 = vector.broadcast %260 : vector<2x16x1xf32> to vector<2x16x32xf32>
    %262 = arith.mulf %9, %261 : vector<2x16x32xf32>
    %cst_97 = arith.constant dense<0.000000e+00> : vector<2x32xf32>
    %263 = vector.multi_reduction <add>, %262, %cst_97 [1] : vector<2x16x32xf32> to vector<2x32xf32>
    %264 = arith.index_cast %c3_i32 : i32 to index
    %c0_98 = arith.constant 0 : index
    %c0_99 = arith.constant 0 : index
    %265 = vector.load %arg20[%264, %c0_98, %c0_99] : memref<6x2x128xf32, #tpu.memory_space<vmem>>, vector<1x2x128xf32>
    %266 = vector.shape_cast %265 : vector<1x2x128xf32> to vector<2x128xf32>
    %267 = tpu.concatenate %263, %223 in 1 : vector<2x32xf32>, vector<2x32xf32> -> vector<2x64xf32>
    %268 = arith.truncf %267 : vector<2x64xf32> to vector<2x64xbf16>
    %cst_100 = arith.constant dense<0.000000e+00> : vector<2x128xf32>
    %269 = tpu.matmul %268, %38, %cst_100 {dimension_numbers = #tpu.dot_dimension_numbers<[1], [0], [0], [1], [0, 0, 1, 1], [], []>} : vector<2x64xbf16>, vector<64x128xbf16>, vector<2x128xf32> -> vector<2x128xf32>
    %270 = arith.addf %266, %269 : vector<2x128xf32>
    %271 = vector.broadcast %39 : vector<1x128xf32> to vector<2x128xf32>
    %272 = arith.addf %270, %271 : vector<2x128xf32>
    %273 = vector.extract_strided_slice %272 {offsets = [0, 0], sizes = [2, 96], strides = [1, 1]} : vector<2x128xf32> to vector<2x96xf32>
    %274 = arith.negf %273 : vector<2x96xf32>
    %275 = math.exp %274 : vector<2x96xf32>
    %cst_101 = arith.constant 1.000000e+00 : f32
    %276 = vector.broadcast %cst_101 : f32 to vector<2x96xf32>
    %277 = arith.addf %276, %275 : vector<2x96xf32>
    %278 = arith.divf %276, %277 : vector<2x96xf32>
    %279 = vector.extract_strided_slice %278 {offsets = [0, 0], sizes = [2, 32], strides = [1, 1]} : vector<2x96xf32> to vector<2x32xf32>
    %280 = vector.extract_strided_slice %278 {offsets = [0, 32], sizes = [2, 32], strides = [1, 1]} : vector<2x96xf32> to vector<2x32xf32>
    %281 = vector.extract_strided_slice %278 {offsets = [0, 64], sizes = [2, 32], strides = [1, 1]} : vector<2x96xf32> to vector<2x32xf32>
    %282 = vector.extract_strided_slice %272 {offsets = [0, 96], sizes = [2, 32], strides = [1, 1]} : vector<2x128xf32> to vector<2x32xf32>
    %283 = math.tanh %282 : vector<2x32xf32>
    %284 = arith.mulf %280, %221 : vector<2x32xf32>
    %285 = arith.mulf %279, %283 : vector<2x32xf32>
    %286 = arith.addf %284, %285 : vector<2x32xf32>
    %287 = math.tanh %286 : vector<2x32xf32>
    %288 = arith.mulf %281, %287 : vector<2x32xf32>
    %289 = tpu.concatenate %288, %263 in 1 : vector<2x32xf32>, vector<2x32xf32> -> vector<2x64xf32>
    %290 = arith.truncf %289 : vector<2x64xf32> to vector<2x64xbf16>
    %cst_102 = arith.constant dense<0.000000e+00> : vector<2x128xf32>
    %291 = tpu.matmul %290, %40, %cst_102 {dimension_numbers = #tpu.dot_dimension_numbers<[1], [0], [0], [1], [0, 0, 1, 1], [], []>} : vector<2x64xbf16>, vector<64x128xbf16>, vector<2x128xf32> -> vector<2x128xf32>
    %292 = vector.broadcast %41 : vector<1x128xf32> to vector<2x128xf32>
    %293 = arith.addf %291, %292 : vector<2x128xf32>
    %294 = arith.index_cast %c3_i32 : i32 to index
    %c0_103 = arith.constant 0 : index
    %c0_104 = arith.constant 0 : index
    %295 = vector.load %arg18[%294, %c0_103, %c0_104] : memref<6x2x128xf32, #tpu.memory_space<vmem>>, vector<1x2x128xf32>
    %296 = vector.shape_cast %295 : vector<1x2x128xf32> to vector<2x128xf32>
    %297 = vector.shape_cast %293 : vector<2x128xf32> to vector<1x2x128xf32>
    tpu.vector_store %arg18[%294, %c0_103, %c0_104], %297 {strides = array<i32>} : memref<6x2x128xf32, #tpu.memory_space<vmem>>, vector<1x2x128xf32>,
    %298 = arith.index_cast %c3_i32 : i32 to index
    %c0_105 = arith.constant 0 : index
    %c0_106 = arith.constant 0 : index
    %299 = vector.load %arg19[%298, %c0_105, %c0_106] : memref<6x2x16xf32, #tpu.memory_space<vmem>>, vector<1x2x16xf32>
    %300 = vector.shape_cast %299 : vector<1x2x16xf32> to vector<2x16xf32>
    %301 = vector.shape_cast %259 : vector<2x16xf32> to vector<1x2x16xf32>
    tpu.vector_store %arg19[%298, %c0_105, %c0_106], %301 {strides = array<i32>} : memref<6x2x16xf32, #tpu.memory_space<vmem>>, vector<1x2x16xf32>,
    %c4_i32 = arith.constant 4 : i32
    %302 = arith.truncf %288 : vector<2x32xf32> to vector<2x32xbf16>
    %cst_107 = arith.constant dense<0.000000e+00> : vector<2x32xf32>
    %303 = tpu.matmul %302, %35, %cst_107 {dimension_numbers = #tpu.dot_dimension_numbers<[1], [0], [0], [1], [0, 0, 1, 1], [], []>} : vector<2x32xbf16>, vector<32x32xbf16>, vector<2x32xf32> -> vector<2x32xf32>
    %304 = vector.broadcast %36 : vector<1x32xf32> to vector<2x32xf32>
    %305 = arith.addf %303, %304 : vector<2x32xf32>
    %306 = vector.shape_cast %305 : vector<2x32xf32> to vector<2x1x32xf32>
    %307 = vector.broadcast %306 : vector<2x1x32xf32> to vector<2x16x32xf32>
    %308 = arith.addf %30, %307 : vector<2x16x32xf32>
    %cst_108 = arith.constant 0.000000e+00 : f32
    %309 = vector.broadcast %cst_108 : f32 to vector<2x16x32xf32>
    %310 = arith.maximumf %308, %309 : vector<2x16x32xf32>
    %311 = vector.shape_cast %37 : vector<1x32xf32> to vector<1x1x32xf32>
    %312 = vector.broadcast %311 : vector<1x1x32xf32> to vector<2x16x32xf32>
    %313 = arith.mulf %310, %312 : vector<2x16x32xf32>
    %cst_109 = arith.constant dense<0.000000e+00> : vector<2x16xf32>
    %314 = vector.multi_reduction <add>, %313, %cst_109 [2] : vector<2x16x32xf32> to vector<2x16xf32>
    %cst_110 = arith.constant dense<0xFF800000> : vector<2xf32>
    %315 = vector.multi_reduction <maximumf>, %314, %cst_110 [1] : vector<2x16xf32> to vector<2xf32>
    %316 = vector.shape_cast %315 : vector<2xf32> to vector<2x1xf32>
    %317 = vector.broadcast %316 : vector<2x1xf32> to vector<2x16xf32>
    %318 = arith.subf %314, %317 : vector<2x16xf32>
    %319 = math.exp %318 : vector<2x16xf32>
    %cst_111 = arith.constant dense<0.000000e+00> : vector<2xf32>
    %320 = vector.multi_reduction <add>, %319, %cst_111 [1] : vector<2x16xf32> to vector<2xf32>
    %321 = vector.shape_cast %320 : vector<2xf32> to vector<2x1xf32>
    %322 = tpu.reciprocal %321 {approx = true} : vector<2x1xf32> -> vector<2x1xf32>
    %323 = vector.broadcast %322 : vector<2x1xf32> to vector<2x16xf32>
    %324 = arith.mulf %319, %323 : vector<2x16xf32>
    %325 = vector.shape_cast %324 : vector<2x16xf32> to vector<2x16x1xf32>
    %326 = vector.broadcast %325 : vector<2x16x1xf32> to vector<2x16x32xf32>
    %327 = arith.mulf %9, %326 : vector<2x16x32xf32>
    %cst_112 = arith.constant dense<0.000000e+00> : vector<2x32xf32>
    %328 = vector.multi_reduction <add>, %327, %cst_112 [1] : vector<2x16x32xf32> to vector<2x32xf32>
    %329 = arith.index_cast %c4_i32 : i32 to index
    %c0_113 = arith.constant 0 : index
    %c0_114 = arith.constant 0 : index
    %330 = vector.load %arg20[%329, %c0_113, %c0_114] : memref<6x2x128xf32, #tpu.memory_space<vmem>>, vector<1x2x128xf32>
    %331 = vector.shape_cast %330 : vector<1x2x128xf32> to vector<2x128xf32>
    %332 = tpu.concatenate %328, %288 in 1 : vector<2x32xf32>, vector<2x32xf32> -> vector<2x64xf32>
    %333 = arith.truncf %332 : vector<2x64xf32> to vector<2x64xbf16>
    %cst_115 = arith.constant dense<0.000000e+00> : vector<2x128xf32>
    %334 = tpu.matmul %333, %38, %cst_115 {dimension_numbers = #tpu.dot_dimension_numbers<[1], [0], [0], [1], [0, 0, 1, 1], [], []>} : vector<2x64xbf16>, vector<64x128xbf16>, vector<2x128xf32> -> vector<2x128xf32>
    %335 = arith.addf %331, %334 : vector<2x128xf32>
    %336 = vector.broadcast %39 : vector<1x128xf32> to vector<2x128xf32>
    %337 = arith.addf %335, %336 : vector<2x128xf32>
    %338 = vector.extract_strided_slice %337 {offsets = [0, 0], sizes = [2, 96], strides = [1, 1]} : vector<2x128xf32> to vector<2x96xf32>
    %339 = arith.negf %338 : vector<2x96xf32>
    %340 = math.exp %339 : vector<2x96xf32>
    %cst_116 = arith.constant 1.000000e+00 : f32
    %341 = vector.broadcast %cst_116 : f32 to vector<2x96xf32>
    %342 = arith.addf %341, %340 : vector<2x96xf32>
    %343 = arith.divf %341, %342 : vector<2x96xf32>
    %344 = vector.extract_strided_slice %343 {offsets = [0, 0], sizes = [2, 32], strides = [1, 1]} : vector<2x96xf32> to vector<2x32xf32>
    %345 = vector.extract_strided_slice %343 {offsets = [0, 32], sizes = [2, 32], strides = [1, 1]} : vector<2x96xf32> to vector<2x32xf32>
    %346 = vector.extract_strided_slice %343 {offsets = [0, 64], sizes = [2, 32], strides = [1, 1]} : vector<2x96xf32> to vector<2x32xf32>
    %347 = vector.extract_strided_slice %337 {offsets = [0, 96], sizes = [2, 32], strides = [1, 1]} : vector<2x128xf32> to vector<2x32xf32>
    %348 = math.tanh %347 : vector<2x32xf32>
    %349 = arith.mulf %345, %286 : vector<2x32xf32>
    %350 = arith.mulf %344, %348 : vector<2x32xf32>
    %351 = arith.addf %349, %350 : vector<2x32xf32>
    %352 = math.tanh %351 : vector<2x32xf32>
    %353 = arith.mulf %346, %352 : vector<2x32xf32>
    %354 = tpu.concatenate %353, %328 in 1 : vector<2x32xf32>, vector<2x32xf32> -> vector<2x64xf32>
    %355 = arith.truncf %354 : vector<2x64xf32> to vector<2x64xbf16>
    %cst_117 = arith.constant dense<0.000000e+00> : vector<2x128xf32>
    %356 = tpu.matmul %355, %40, %cst_117 {dimension_numbers = #tpu.dot_dimension_numbers<[1], [0], [0], [1], [0, 0, 1, 1], [], []>} : vector<2x64xbf16>, vector<64x128xbf16>, vector<2x128xf32> -> vector<2x128xf32>
    %357 = vector.broadcast %41 : vector<1x128xf32> to vector<2x128xf32>
    %358 = arith.addf %356, %357 : vector<2x128xf32>
    %359 = arith.index_cast %c4_i32 : i32 to index
    %c0_118 = arith.constant 0 : index
    %c0_119 = arith.constant 0 : index
    %360 = vector.load %arg18[%359, %c0_118, %c0_119] : memref<6x2x128xf32, #tpu.memory_space<vmem>>, vector<1x2x128xf32>
    %361 = vector.shape_cast %360 : vector<1x2x128xf32> to vector<2x128xf32>
    %362 = vector.shape_cast %358 : vector<2x128xf32> to vector<1x2x128xf32>
    tpu.vector_store %arg18[%359, %c0_118, %c0_119], %362 {strides = array<i32>} : memref<6x2x128xf32, #tpu.memory_space<vmem>>, vector<1x2x128xf32>,
    %363 = arith.index_cast %c4_i32 : i32 to index
    %c0_120 = arith.constant 0 : index
    %c0_121 = arith.constant 0 : index
    %364 = vector.load %arg19[%363, %c0_120, %c0_121] : memref<6x2x16xf32, #tpu.memory_space<vmem>>, vector<1x2x16xf32>
    %365 = vector.shape_cast %364 : vector<1x2x16xf32> to vector<2x16xf32>
    %366 = vector.shape_cast %324 : vector<2x16xf32> to vector<1x2x16xf32>
    tpu.vector_store %arg19[%363, %c0_120, %c0_121], %366 {strides = array<i32>} : memref<6x2x16xf32, #tpu.memory_space<vmem>>, vector<1x2x16xf32>,
    %c5_i32 = arith.constant 5 : i32
    %367 = arith.truncf %353 : vector<2x32xf32> to vector<2x32xbf16>
    %cst_122 = arith.constant dense<0.000000e+00> : vector<2x32xf32>
    %368 = tpu.matmul %367, %35, %cst_122 {dimension_numbers = #tpu.dot_dimension_numbers<[1], [0], [0], [1], [0, 0, 1, 1], [], []>} : vector<2x32xbf16>, vector<32x32xbf16>, vector<2x32xf32> -> vector<2x32xf32>
    %369 = vector.broadcast %36 : vector<1x32xf32> to vector<2x32xf32>
    %370 = arith.addf %368, %369 : vector<2x32xf32>
    %371 = vector.shape_cast %370 : vector<2x32xf32> to vector<2x1x32xf32>
    %372 = vector.broadcast %371 : vector<2x1x32xf32> to vector<2x16x32xf32>
    %373 = arith.addf %30, %372 : vector<2x16x32xf32>
    %cst_123 = arith.constant 0.000000e+00 : f32
    %374 = vector.broadcast %cst_123 : f32 to vector<2x16x32xf32>
    %375 = arith.maximumf %373, %374 : vector<2x16x32xf32>
    %376 = vector.shape_cast %37 : vector<1x32xf32> to vector<1x1x32xf32>
    %377 = vector.broadcast %376 : vector<1x1x32xf32> to vector<2x16x32xf32>
    %378 = arith.mulf %375, %377 : vector<2x16x32xf32>
    %cst_124 = arith.constant dense<0.000000e+00> : vector<2x16xf32>
    %379 = vector.multi_reduction <add>, %378, %cst_124 [2] : vector<2x16x32xf32> to vector<2x16xf32>
    %cst_125 = arith.constant dense<0xFF800000> : vector<2xf32>
    %380 = vector.multi_reduction <maximumf>, %379, %cst_125 [1] : vector<2x16xf32> to vector<2xf32>
    %381 = vector.shape_cast %380 : vector<2xf32> to vector<2x1xf32>
    %382 = vector.broadcast %381 : vector<2x1xf32> to vector<2x16xf32>
    %383 = arith.subf %379, %382 : vector<2x16xf32>
    %384 = math.exp %383 : vector<2x16xf32>
    %cst_126 = arith.constant dense<0.000000e+00> : vector<2xf32>
    %385 = vector.multi_reduction <add>, %384, %cst_126 [1] : vector<2x16xf32> to vector<2xf32>
    %386 = vector.shape_cast %385 : vector<2xf32> to vector<2x1xf32>
    %387 = tpu.reciprocal %386 {approx = true} : vector<2x1xf32> -> vector<2x1xf32>
    %388 = vector.broadcast %387 : vector<2x1xf32> to vector<2x16xf32>
    %389 = arith.mulf %384, %388 : vector<2x16xf32>
    %390 = vector.shape_cast %389 : vector<2x16xf32> to vector<2x16x1xf32>
    %391 = vector.broadcast %390 : vector<2x16x1xf32> to vector<2x16x32xf32>
    %392 = arith.mulf %9, %391 : vector<2x16x32xf32>
    %cst_127 = arith.constant dense<0.000000e+00> : vector<2x32xf32>
    %393 = vector.multi_reduction <add>, %392, %cst_127 [1] : vector<2x16x32xf32> to vector<2x32xf32>
    %394 = arith.index_cast %c5_i32 : i32 to index
    %c0_128 = arith.constant 0 : index
    %c0_129 = arith.constant 0 : index
    %395 = vector.load %arg20[%394, %c0_128, %c0_129] : memref<6x2x128xf32, #tpu.memory_space<vmem>>, vector<1x2x128xf32>
    %396 = vector.shape_cast %395 : vector<1x2x128xf32> to vector<2x128xf32>
    %397 = tpu.concatenate %393, %353 in 1 : vector<2x32xf32>, vector<2x32xf32> -> vector<2x64xf32>
    %398 = arith.truncf %397 : vector<2x64xf32> to vector<2x64xbf16>
    %cst_130 = arith.constant dense<0.000000e+00> : vector<2x128xf32>
    %399 = tpu.matmul %398, %38, %cst_130 {dimension_numbers = #tpu.dot_dimension_numbers<[1], [0], [0], [1], [0, 0, 1, 1], [], []>} : vector<2x64xbf16>, vector<64x128xbf16>, vector<2x128xf32> -> vector<2x128xf32>
    %400 = arith.addf %396, %399 : vector<2x128xf32>
    %401 = vector.broadcast %39 : vector<1x128xf32> to vector<2x128xf32>
    %402 = arith.addf %400, %401 : vector<2x128xf32>
    %403 = vector.extract_strided_slice %402 {offsets = [0, 0], sizes = [2, 96], strides = [1, 1]} : vector<2x128xf32> to vector<2x96xf32>
    %404 = arith.negf %403 : vector<2x96xf32>
    %405 = math.exp %404 : vector<2x96xf32>
    %cst_131 = arith.constant 1.000000e+00 : f32
    %406 = vector.broadcast %cst_131 : f32 to vector<2x96xf32>
    %407 = arith.addf %406, %405 : vector<2x96xf32>
    %408 = arith.divf %406, %407 : vector<2x96xf32>
    %409 = vector.extract_strided_slice %408 {offsets = [0, 0], sizes = [2, 32], strides = [1, 1]} : vector<2x96xf32> to vector<2x32xf32>
    %410 = vector.extract_strided_slice %408 {offsets = [0, 32], sizes = [2, 32], strides = [1, 1]} : vector<2x96xf32> to vector<2x32xf32>
    %411 = vector.extract_strided_slice %408 {offsets = [0, 64], sizes = [2, 32], strides = [1, 1]} : vector<2x96xf32> to vector<2x32xf32>
    %412 = vector.extract_strided_slice %402 {offsets = [0, 96], sizes = [2, 32], strides = [1, 1]} : vector<2x128xf32> to vector<2x32xf32>
    %413 = math.tanh %412 : vector<2x32xf32>
    %414 = arith.mulf %410, %351 : vector<2x32xf32>
    %415 = arith.mulf %409, %413 : vector<2x32xf32>
    %416 = arith.addf %414, %415 : vector<2x32xf32>
    %417 = math.tanh %416 : vector<2x32xf32>
    %418 = arith.mulf %411, %417 : vector<2x32xf32>
    %419 = tpu.concatenate %418, %393 in 1 : vector<2x32xf32>, vector<2x32xf32> -> vector<2x64xf32>
    %420 = arith.truncf %419 : vector<2x64xf32> to vector<2x64xbf16>
    %cst_132 = arith.constant dense<0.000000e+00> : vector<2x128xf32>
    %421 = tpu.matmul %420, %40, %cst_132 {dimension_numbers = #tpu.dot_dimension_numbers<[1], [0], [0], [1], [0, 0, 1, 1], [], []>} : vector<2x64xbf16>, vector<64x128xbf16>, vector<2x128xf32> -> vector<2x128xf32>
    %422 = vector.broadcast %41 : vector<1x128xf32> to vector<2x128xf32>
    %423 = arith.addf %421, %422 : vector<2x128xf32>
    %424 = arith.index_cast %c5_i32 : i32 to index
    %c0_133 = arith.constant 0 : index
    %c0_134 = arith.constant 0 : index
    %425 = vector.load %arg18[%424, %c0_133, %c0_134] : memref<6x2x128xf32, #tpu.memory_space<vmem>>, vector<1x2x128xf32>
    %426 = vector.shape_cast %425 : vector<1x2x128xf32> to vector<2x128xf32>
    %427 = vector.shape_cast %423 : vector<2x128xf32> to vector<1x2x128xf32>
    tpu.vector_store %arg18[%424, %c0_133, %c0_134], %427 {strides = array<i32>} : memref<6x2x128xf32, #tpu.memory_space<vmem>>, vector<1x2x128xf32>,
    %428 = arith.index_cast %c5_i32 : i32 to index
    %c0_135 = arith.constant 0 : index
    %c0_136 = arith.constant 0 : index
    %429 = vector.load %arg19[%428, %c0_135, %c0_136] : memref<6x2x16xf32, #tpu.memory_space<vmem>>, vector<1x2x16xf32>
    %430 = vector.shape_cast %429 : vector<1x2x16xf32> to vector<2x16xf32>
    %431 = vector.shape_cast %389 : vector<2x16xf32> to vector<1x2x16xf32>
    tpu.vector_store %arg19[%428, %c0_135, %c0_136], %431 {strides = array<i32>} : memref<6x2x16xf32, #tpu.memory_space<vmem>>, vector<1x2x16xf32>,
    %c6_i32 = arith.constant 6 : i32
    return
  }
}

</mosaic_0001>

<llo_original>
// kernel: tpu_custom_call.1
$region0: #{tpu_custom_call.1}
  #allocation0 [shape = 'u32[]', space=smem, size = 0x4, offset = 0x4, fixed_abs, tag = 'smem constant byte address 0x4 - core index']
  #allocation1 [shape = 'u32[144,128]{1,0:T(1,128)}', space=vmem, size = 0x12000, scoped, tag = 'internal scratch']
  #allocation2 [shape = 'f32[6,2,128]{2,1,0:T(2,128)}', space=vmem, size = 0x1800, scoped, tag = 'scratch operand']
  %s0 = inlined_call_operand.vmem [shape: f32[2,16,3], index: 0, kind: input, shape index: {}]
  %s1 = inlined_call_operand.hbm [shape: bf16[6,2,32], index: 1, kind: input, shape index: {}]
  %s2 = inlined_call_operand.hbm [shape: bf16[3,32], index: 2, kind: input, shape index: {}]
  %s3 = inlined_call_operand.vmem [shape: f32[1,32], index: 3, kind: input, shape index: {}]
  %s4 = inlined_call_operand.vmem [shape: bf16[32,32], index: 4, kind: input, shape index: {}]
  %s5 = inlined_call_operand.hbm [shape: f32[1,32], index: 5, kind: input, shape index: {}]
  %s6 = inlined_call_operand.hbm [shape: bf16[32,32], index: 6, kind: input, shape index: {}]
  %s7 = inlined_call_operand.hbm [shape: f32[1,32], index: 7, kind: input, shape index: {}]
  %s8 = inlined_call_operand.hbm [shape: f32[1,32], index: 8, kind: input, shape index: {}]
  %s9 = inlined_call_operand.hbm [shape: bf16[32,128], index: 9, kind: input, shape index: {}]
  %s10 = inlined_call_operand.vmem [shape: bf16[64,128], index: 10, kind: input, shape index: {}]
  %s11 = inlined_call_operand.hbm [shape: f32[1,128], index: 11, kind: input, shape index: {}]
  %s12 = inlined_call_operand.hbm [shape: bf16[64,128], index: 12, kind: input, shape index: {}]
  %s13 = inlined_call_operand.hbm [shape: f32[1,128], index: 13, kind: input, shape index: {}]
  %s14 = inlined_call_operand.hbm [shape: bf16[32,32], index: 14, kind: input, shape index: {}]
  %s15 = inlined_call_operand.hbm [shape: f32[1,32], index: 15, kind: input, shape index: {}]
  %s16 = inlined_call_operand.vmem [shape: bf16[32,32], index: 16, kind: input, shape index: {}]
  %s17 = inlined_call_operand.vmem [shape: f32[1,32], index: 17, kind: input, shape index: {}]
  %s18 = inlined_call_operand.hbm [shape: f32[6,2,128], index: 18, kind: output, shape index: {0}]
  %s19 = inlined_call_operand.hbm [shape: f32[6,2,16], index: 19, kind: output, shape index: {1}]
  %20 = xla_tuple %s18, %s19
  %s21 = sld [smem:[#allocation0]]
  $region138: #{tpu_custom_call.1} parent=0
    _
  %s23 = ssub.s32 1, %s21
  %s24 = scalar_select 0, %s23, %s21
  $region1: #{tpu_custom_call.1} parent=0
    #allocation3 [shape = 'u8[3072]{0}', space=vmem, size = 0xc00, scoped, tag = 'input window, operand 1, single buffered']
    #allocation4 [shape = 's32[1]{0}', space=sflag, size = 0x4, scoped, tag = 'scoped memory for tpu_custom_call.1']
    #allocation5 [shape = 's32[1]{0}', space=sflag, size = 0x4, scoped, tag = 'scoped memory for tpu_custom_call.1']
    #allocation6 [shape = 'u8[1024]{0}', space=vmem, size = 0x400, scoped, tag = 'input window, operand 2, single buffered']
    #allocation7 [shape = 's32[1]{0}', space=sflag, size = 0x4, scoped, tag = 'scoped memory for tpu_custom_call.1']
    #allocation8 [shape = 'u8[512]{0}', space=vmem, size = 0x400, scoped, tag = 'input window, operand 5, single buffered']
    #allocation9 [shape = 'u8[8192]{0}', space=vmem, size = 0x2000, scoped, tag = 'input window, operand 6, single buffered']
    #allocation10 [shape = 's32[1]{0}', space=sflag, size = 0x4, scoped, tag = 'scoped memory for tpu_custom_call.1']
    #allocation11 [shape = 'u8[512]{0}', space=vmem, size = 0x400, scoped, tag = 'input window, operand 7, single buffered']
    #allocation12 [shape = 'u8[512]{0}', space=vmem, size = 0x400, scoped, tag = 'input window, operand 8, single buffered']
    #allocation13 [shape = 's32[1]{0}', space=sflag, size = 0x4, scoped, tag = 'scoped memory for tpu_custom_call.1']
    #allocation14 [shape = 'u8[8192]{0}', space=vmem, size = 0x2000, scoped, tag = 'input window, operand 9, single buffered']
    #allocation15 [shape = 'u8[512]{0}', space=vmem, size = 0x400, scoped, tag = 'input window, operand 11, single buffered']
    #allocation16 [shape = 's32[1]{0}', space=sflag, size = 0x4, scoped, tag = 'scoped memory for tpu_custom_call.1']
    #allocation17 [shape = 'u8[16384]{0}', space=vmem, size = 0x4000, scoped, tag = 'input window, operand 12, single buffered']
    #allocation18 [shape = 'u8[512]{0}', space=vmem, size = 0x400, scoped, tag = 'input window, operand 13, single buffered']
    #allocation19 [shape = 's32[1]{0}', space=sflag, size = 0x4, scoped, tag = 'scoped memory for tpu_custom_call.1']
    #allocation20 [shape = 'u8[8192]{0}', space=vmem, size = 0x2000, scoped, tag = 'input window, operand 14, single buffered']
    #allocation21 [shape = 'u8[512]{0}', space=vmem, size = 0x400, scoped, tag = 'input window, operand 15, single buffered']
    #allocation22 [shape = 's32[1]{0}', space=sflag, size = 0x4, scoped, tag = 'scoped memory for tpu_custom_call.1']
    #allocation23 [shape = 'u8[6144]{0}', space=vmem, size = 0x1800, scoped, tag = 'output window, operand 0, single buffered']
    #allocation24 [shape = 'u8[6144]{0}', space=vmem, size = 0x1800, scoped, tag = 'output window, operand 1, single buffered']
    #allocation25 [shape = 's32[1]{0}', space=sflag, size = 0x4, scoped, tag = 'scoped memory for tpu_custom_call.1']
    %25 = vsyncpa [#allocation4], 0
    %26 = vsyncpa [#allocation7], 0
    %27 = vsyncpa [#allocation10], 0
    %28 = vsyncpa [#allocation13], 0
    %29 = vsyncpa [#allocation16], 0
    %30 = vsyncpa [#allocation19], 0
    %31 = vsyncpa [#allocation22], 0
    %32 = vsyncpa [#allocation5], 0
    %33 = vsyncpa [#allocation25], 0
    // Predicated region
    $region2: #{tpu_custom_call.1} parent=1 // pred_check
      _
    $region3: #{tpu_custom_call.1} parent=1 // pred_check_branch
      %35 = sbr.rel (0) target = $region5
    $region4: #{tpu_custom_call.1} parent=1 // pred_region
      _
    $region5: #{tpu_custom_call.1} parent=1 // pred_fallthru
      _
    // Predicated region
    $region6: #{tpu_custom_call.1} parent=1 // pred_check
      _
    $region7: #{tpu_custom_call.1} parent=1 // pred_check_branch
      %37 = sbr.rel (0) target = $region9
    $region8: #{tpu_custom_call.1} parent=1 // pred_region
      %s39 = ssub.s32 96, 96
      %40 = vsyncadd [#allocation4], %s39
      %s41 = sshll.u32 [#allocation3], 4
      %s42 = int_to_ptr.vmem [resolvable:$true] %s41
      %47 = dma.hbm_to_vmem [thread:$0]  %s1, 96, %s42, [#allocation4], 16, 16, 1
    $region9: #{tpu_custom_call.1} parent=1 // pred_fallthru
      _
    // Predicated region
    $region10: #{tpu_custom_call.1} parent=1 // pred_check
      _
    $region11: #{tpu_custom_call.1} parent=1 // pred_check_branch
      %49 = sbr.rel (0) target = $region13
    $region12: #{tpu_custom_call.1} parent=1 // pred_region
      %s51 = ssub.s32 32, 32
      %52 = vsyncadd [#allocation7], %s51
      %s54 = sshll.u32 [#allocation6], 4
      %s55 = int_to_ptr.vmem [resolvable:$true] %s54
      %57 = dma.hbm_to_vmem [thread:$0]  %s2, 32, %s55, [#allocation7]
    $region13: #{tpu_custom_call.1} parent=1 // pred_fallthru
      _
    // Predicated region
    $region14: #{tpu_custom_call.1} parent=1 // pred_check
      _
    $region15: #{tpu_custom_call.1} parent=1 // pred_check_branch
      %59 = sbr.rel (0) target = $region17
    $region16: #{tpu_custom_call.1} parent=1 // pred_region
      _
    $region17: #{tpu_custom_call.1} parent=1 // pred_fallthru
      _
    // Predicated region
    $region18: #{tpu_custom_call.1} parent=1 // pred_check
      _
    $region19: #{tpu_custom_call.1} parent=1 // pred_check_branch
      %61 = sbr.rel (0) target = $region21
    $region20: #{tpu_custom_call.1} parent=1 // pred_region
      _
    $region21: #{tpu_custom_call.1} parent=1 // pred_fallthru
      _
    // Predicated region
    $region22: #{tpu_custom_call.1} parent=1 // pred_check
      _
    $region23: #{tpu_custom_call.1} parent=1 // pred_check_branch
      %63 = sbr.rel (0) target = $region25
    $region24: #{tpu_custom_call.1} parent=1 // pred_region
      %s65 = ssub.s32 16, 16
      %66 = vsyncadd [#allocation7], %s65
      %s68 = sshll.u32 [#allocation8], 4
      %s69 = int_to_ptr.vmem [resolvable:$true] %s68
      %71 = dma.hbm_to_vmem [thread:$0]  %s5, 16, %s69, [#allocation7]
    $region25: #{tpu_custom_call.1} parent=1 // pred_fallthru
      _
    // Predicated region
    $region26: #{tpu_custom_call.1} parent=1 // pred_check
      _
    $region27: #{tpu_custom_call.1} parent=1 // pred_check_branch
      %73 = sbr.rel (0) target = $region29
    $region28: #{tpu_custom_call.1} parent=1 // pred_region
      %s75 = ssub.s32 256, 256
      %76 = vsyncadd [#allocation10], %s75
      %s77 = sshll.u32 [#allocation9], 4
      %s78 = int_to_ptr.vmem [resolvable:$true] %s77
      %83 = dma.hbm_to_vmem [thread:$0]  %s6, 256, %s78, [#allocation10], 64, 64, 4
    $region29: #{tpu_custom_call.1} parent=1 // pred_fallthru
      _
    // Predicated region
    $region30: #{tpu_custom_call.1} parent=1 // pred_check
      _
    $region31: #{tpu_custom_call.1} parent=1 // pred_check_branch
      %85 = sbr.rel (0) target = $region33
    $region32: #{tpu_custom_call.1} parent=1 // pred_region
      %s87 = ssub.s32 16, 16
      %88 = vsyncadd [#allocation10], %s87
      %s90 = sshll.u32 [#allocation11], 4
      %s91 = int_to_ptr.vmem [resolvable:$true] %s90
      %93 = dma.hbm_to_vmem [thread:$0]  %s7, 16, %s91, [#allocation10]
    $region33: #{tpu_custom_call.1} parent=1 // pred_fallthru
      _
    // Predicated region
    $region34: #{tpu_custom_call.1} parent=1 // pred_check
      _
    $region35: #{tpu_custom_call.1} parent=1 // pred_check_branch
      %95 = sbr.rel (0) target = $region37
    $region36: #{tpu_custom_call.1} parent=1 // pred_region
      %s97 = ssub.s32 16, 16
      %98 = vsyncadd [#allocation13], %s97
      %s100 = sshll.u32 [#allocation12], 4
      %s101 = int_to_ptr.vmem [resolvable:$true] %s100
      %103 = dma.hbm_to_vmem [thread:$0]  %s8, 16, %s101, [#allocation13]
    $region37: #{tpu_custom_call.1} parent=1 // pred_fallthru
      _
    // Predicated region
    $region38: #{tpu_custom_call.1} parent=1 // pred_check
      _
    $region39: #{tpu_custom_call.1} parent=1 // pred_check_branch
      %105 = sbr.rel (0) target = $region41
    $region40: #{tpu_custom_call.1} parent=1 // pred_region
      %s107 = ssub.s32 256, 256
      %108 = vsyncadd [#allocation13], %s107
      %s109 = sshll.u32 [#allocation14], 4
      %s110 = int_to_ptr.vmem [resolvable:$true] %s109
      %115 = dma.hbm_to_vmem [thread:$0]  %s9, 256, %s110, [#allocation13], 64, 64, 4
    $region41: #{tpu_custom_call.1} parent=1 // pred_fallthru
      _
    // Predicated region
    $region42: #{tpu_custom_call.1} parent=1 // pred_check
      _
    $region43: #{tpu_custom_call.1} parent=1 // pred_check_branch
      %117 = sbr.rel (0) target = $region45
    $region44: #{tpu_custom_call.1} parent=1 // pred_region
      _
    $region45: #{tpu_custom_call.1} parent=1 // pred_fallthru
      _
    // Predicated region
    $region46: #{tpu_custom_call.1} parent=1 // pred_check
      _
    $region47: #{tpu_custom_call.1} parent=1 // pred_check_branch
      %119 = sbr.rel (0) target = $region49
    $region48: #{tpu_custom_call.1} parent=1 // pred_region
      %s121 = ssub.s32 16, 16
      %122 = vsyncadd [#allocation16], %s121
      %s124 = sshll.u32 [#allocation15], 4
      %s125 = int_to_ptr.vmem [resolvable:$true] %s124
      %127 = dma.hbm_to_vmem [thread:$0]  %s11, 16, %s125, [#allocation16]
    $region49: #{tpu_custom_call.1} parent=1 // pred_fallthru
      _
    // Predicated region
    $region50: #{tpu_custom_call.1} parent=1 // pred_check
      _
    $region51: #{tpu_custom_call.1} parent=1 // pred_check_branch
      %129 = sbr.rel (0) target = $region53
    $region52: #{tpu_custom_call.1} parent=1 // pred_region
      %s131 = ssub.s32 512, 512
      %132 = vsyncadd [#allocation16], %s131
      %s133 = sshll.u32 [#allocation17], 4
      %s134 = int_to_ptr.vmem [resolvable:$true] %s133
      %139 = dma.hbm_to_vmem [thread:$0]  %s12, 512, %s134, [#allocation16], 64, 64, 4
    $region53: #{tpu_custom_call.1} parent=1 // pred_fallthru
      _
    // Predicated region
    $region54: #{tpu_custom_call.1} parent=1 // pred_check
      _
    $region55: #{tpu_custom_call.1} parent=1 // pred_check_branch
      %141 = sbr.rel (0) target = $region57
    $region56: #{tpu_custom_call.1} parent=1 // pred_region
      %s143 = ssub.s32 16, 16
      %144 = vsyncadd [#allocation19], %s143
      %s146 = sshll.u32 [#allocation18], 4
      %s147 = int_to_ptr.vmem [resolvable:$true] %s146
      %149 = dma.hbm_to_vmem [thread:$0]  %s13, 16, %s147, [#allocation19]
    $region57: #{tpu_custom_call.1} parent=1 // pred_fallthru
      _
    // Predicated region
    $region58: #{tpu_custom_call.1} parent=1 // pred_check
      _
    $region59: #{tpu_custom_call.1} parent=1 // pred_check_branch
      %151 = sbr.rel (0) target = $region61
    $region60: #{tpu_custom_call.1} parent=1 // pred_region
      %s153 = ssub.s32 256, 256
      %154 = vsyncadd [#allocation19], %s153
      %s155 = sshll.u32 [#allocation20], 4
      %s156 = int_to_ptr.vmem [resolvable:$true] %s155
      %161 = dma.hbm_to_vmem [thread:$0]  %s14, 256, %s156, [#allocation19], 64, 64, 4
    $region61: #{tpu_custom_call.1} parent=1 // pred_fallthru
      _
    // Predicated region
    $region62: #{tpu_custom_call.1} parent=1 // pred_check
      _
    $region63: #{tpu_custom_call.1} parent=1 // pred_check_branch
      %163 = sbr.rel (0) target = $region65
    $region64: #{tpu_custom_call.1} parent=1 // pred_region
      %s165 = ssub.s32 16, 16
      %166 = vsyncadd [#allocation22], %s165
      %s168 = sshll.u32 [#allocation21], 4
      %s169 = int_to_ptr.vmem [resolvable:$true] %s168
      %171 = dma.hbm_to_vmem [thread:$0]  %s15, 16, %s169, [#allocation22]
    $region65: #{tpu_custom_call.1} parent=1 // pred_fallthru
      _
    // Predicated region
    $region66: #{tpu_custom_call.1} parent=1 // pred_check
      _
    $region67: #{tpu_custom_call.1} parent=1 // pred_check_branch
      %173 = sbr.rel (0) target = $region69
    $region68: #{tpu_custom_call.1} parent=1 // pred_region
      _
    $region69: #{tpu_custom_call.1} parent=1 // pred_fallthru
      _
    // Predicated region
    $region70: #{tpu_custom_call.1} parent=1 // pred_check
      _
    $region71: #{tpu_custom_call.1} parent=1 // pred_check_branch
      %175 = sbr.rel (0) target = $region73
    $region72: #{tpu_custom_call.1} parent=1 // pred_region
      _
    $region73: #{tpu_custom_call.1} parent=1 // pred_fallthru
      _
    // Predicated region
    $region74: #{tpu_custom_call.1} parent=1 // pred_check
      _
    $region75: #{tpu_custom_call.1} parent=1 // pred_check_branch
      %177 = sbr.rel (0) target = $region77
    $region76: #{tpu_custom_call.1} parent=1 // pred_region
      %178 = dma.done [#allocation4], 96
    $region77: #{tpu_custom_call.1} parent=1 // pred_fallthru
      _
    // Predicated region
    $region78: #{tpu_custom_call.1} parent=1 // pred_check
      _
    $region79: #{tpu_custom_call.1} parent=1 // pred_check_branch
      %180 = sbr.rel (0) target = $region81
    $region80: #{tpu_custom_call.1} parent=1 // pred_region
      %181 = dma.done [#allocation7], 32
    $region81: #{tpu_custom_call.1} parent=1 // pred_fallthru
      _
    // Predicated region
    $region82: #{tpu_custom_call.1} parent=1 // pred_check
      _
    $region83: #{tpu_custom_call.1} parent=1 // pred_check_branch
      %183 = sbr.rel (0) target = $region85
    $region84: #{tpu_custom_call.1} parent=1 // pred_region
      %184 = dma.done [#allocation7], 16
    $region85: #{tpu_custom_call.1} parent=1 // pred_fallthru
      _
    // Predicated region
    $region86: #{tpu_custom_call.1} parent=1 // pred_check
      _
    $region87: #{tpu_custom_call.1} parent=1 // pred_check_branch
      %186 = sbr.rel (0) target = $region89
    $region88: #{tpu_custom_call.1} parent=1 // pred_region
      %187 = dma.done [#allocation10], 256
    $region89: #{tpu_custom_call.1} parent=1 // pred_fallthru
      _
    // Predicated region
    $region90: #{tpu_custom_call.1} parent=1 // pred_check
      _
    $region91: #{tpu_custom_call.1} parent=1 // pred_check_branch
      %189 = sbr.rel (0) target = $region93
    $region92: #{tpu_custom_call.1} parent=1 // pred_region
      %190 = dma.done [#allocation10], 16
    $region93: #{tpu_custom_call.1} parent=1 // pred_fallthru
      _
    // Predicated region
    $region94: #{tpu_custom_call.1} parent=1 // pred_check
      _
    $region95: #{tpu_custom_call.1} parent=1 // pred_check_branch
      %192 = sbr.rel (0) target = $region97
    $region96: #{tpu_custom_call.1} parent=1 // pred_region
      %193 = dma.done [#allocation13], 16
    $region97: #{tpu_custom_call.1} parent=1 // pred_fallthru
      _
    // Predicated region
    $region98: #{tpu_custom_call.1} parent=1 // pred_check
      _
    $region99: #{tpu_custom_call.1} parent=1 // pred_check_branch
      %195 = sbr.rel (0) target = $region101
    $region100: #{tpu_custom_call.1} parent=1 // pred_region
      %196 = dma.done [#allocation13], 256
    $region101: #{tpu_custom_call.1} parent=1 // pred_fallthru
      _
    // Predicated region
    $region102: #{tpu_custom_call.1} parent=1 // pred_check
      _
    $region103: #{tpu_custom_call.1} parent=1 // pred_check_branch
      %198 = sbr.rel (0) target = $region105
    $region104: #{tpu_custom_call.1} parent=1 // pred_region
      %199 = dma.done [#allocation16], 16
    $region105: #{tpu_custom_call.1} parent=1 // pred_fallthru
      _
    // Predicated region
    $region106: #{tpu_custom_call.1} parent=1 // pred_check
      _
    $region107: #{tpu_custom_call.1} parent=1 // pred_check_branch
      %201 = sbr.rel (0) target = $region109
    $region108: #{tpu_custom_call.1} parent=1 // pred_region
      %202 = dma.done [#allocation16], 512
    $region109: #{tpu_custom_call.1} parent=1 // pred_fallthru
      _
    // Predicated region
    $region110: #{tpu_custom_call.1} parent=1 // pred_check
      _
    $region111: #{tpu_custom_call.1} parent=1 // pred_check_branch
      %204 = sbr.rel (0) target = $region113
    $region112: #{tpu_custom_call.1} parent=1 // pred_region
      %205 = dma.done [#allocation19], 16
    $region113: #{tpu_custom_call.1} parent=1 // pred_fallthru
      _
    // Predicated region
    $region114: #{tpu_custom_call.1} parent=1 // pred_check
      _
    $region115: #{tpu_custom_call.1} parent=1 // pred_check_branch
      %207 = sbr.rel (0) target = $region117
    $region116: #{tpu_custom_call.1} parent=1 // pred_region
      %208 = dma.done [#allocation19], 256
    $region117: #{tpu_custom_call.1} parent=1 // pred_fallthru
      _
    // Predicated region
    $region118: #{tpu_custom_call.1} parent=1 // pred_check
      _
    $region119: #{tpu_custom_call.1} parent=1 // pred_check_branch
      %210 = sbr.rel (0) target = $region121
    $region120: #{tpu_custom_call.1} parent=1 // pred_region
      %211 = dma.done [#allocation22], 16
    $region121: #{tpu_custom_call.1} parent=1 // pred_fallthru
      _
    %v213 = vld [vmem:[%s0] sm:$0xff]
    %v214 = vld [vmem:[%s0 + $0x8] sm:$0xff]
    %v215 = vld [vmem:[%s0 + $0x10] sm:$0xff]
    %v216 = vld [vmem:[%s0 + $0x18] sm:$0xff]
    %v217 = vpack.c.bf16 %v214, %v213
    %v218 = vpack.c.bf16 %v216, %v215
    %v219 = vld [vmem:[#allocation6] sm:$0x3]
    %v220 = vld [vmem:[%s3] sm:$0x1]
    %v222 = vlaneseq
    %v223 = vshrl.u32 %v222, 7
    %v224 = vsub.s32 0, %v223
    %v225 = vrot.slane %v220, %v224
    %vm227 = vcmask 23552
    %v229 = vsel %vm227, %v217, 0
    %v232 = vsel %vm227, %v218, 0
    %vm234 = vcmask 1040384
    %vm235 = vcmask 1041408
    %v236 = vsel %vm234, 4294967295, 65535
    %v237 = vsel %vm235, %v236, 0
    %v239 = vand.u32 %v219, %v237
    %241 = vmatprep.subr.bf16.mxu0 0
    %242 = vmatpush1.bf16.msra.mxu0 0
    %243 = vmatprep.subr.bf16.mxu0 0
    %244 = vmatpush1.bf16.msra.mxu0 0
    %245 = vmatprep.subr.bf16.mxu0 0
    %246 = vmatpush1.bf16.msra.mxu0 0
    %247 = vmatprep.subr.bf16.mxu0 0
    %248 = vmatpush1.bf16.msra.mxu0 0
    %249 = vmatprep.subr.bf16.mxu0 0
    %250 = vmatpush1.bf16.msra.mxu0 0
    %251 = vmatprep.subr.bf16.mxu0 0
    %252 = vmatpush1.bf16.msra.mxu0 0
    %253 = vmatprep.subr.bf16.mxu0 0
    %254 = vmatpush1.bf16.msra.mxu0 0
    %255 = vmatprep.subr.bf16.mxu0 0
    %256 = vmatpush1.bf16.msra.mxu0 %v239
    %257 = vmatprep.subr.bf16.mxu0 0
    %258 = vmatpush2.bf16.msra.mxu0 0
    %259 = vmatprep.subr.bf16.mxu0 0
    %260 = vmatpush2.bf16.msra.mxu0 0
    %261 = vmatprep.subr.bf16.mxu0 0
    %262 = vmatpush2.bf16.msra.mxu0 0
    %263 = vmatprep.subr.bf16.mxu0 0
    %264 = vmatpush2.bf16.msra.mxu0 0
    %265 = vmatprep.subr.bf16.mxu0 0
    %266 = vmatpush2.bf16.msra.mxu0 0
    %267 = vmatprep.subr.bf16.mxu0 0
    %268 = vmatpush2.bf16.msra.mxu0 0
    %269 = vmatprep.subr.bf16.mxu0 0
    %270 = vmatpush2.bf16.msra.mxu0 0
    %271 = vmatprep.subr.bf16.mxu0 0
    %272 = vmatpush2.bf16.msra.mxu0 0
    %273 = vmatprep.mubr.bf16.mxu0 0
    %274 = vmatmul.mubr.bf16.gmra.mxu0 %v229
    %v275 = vpop.f32.mrf.mxu0
    %v276 = vadd.f32 %v225, %v275
    %v277 = vpop.f32.mrf.mxu0
    %v278 = vpop.f32.mrf.mxu0
    %v279 = vadd.f32 %v225, %v278
    %v280 = vpop.f32.mrf.mxu0
    %281 = vmatprep.mubr.bf16.mxu0 0
    %282 = vmatmul.mubr.bf16.gmra.mxu0 %v232
    %v283 = vpop.f32.mrf.mxu0
    %v284 = vadd.f32 %v225, %v283
    %v285 = vpop.f32.mrf.mxu0
    %v286 = vpop.f32.mrf.mxu0
    %v287 = vadd.f32 %v225, %v286
    %v288 = vpop.f32.mrf.mxu0
    %289 = vdwg.mxu0
    %v290 = vmax.f32 %v276, 0.0
    %v291 = vmax.f32 %v279, 0.0
    %v292 = vmax.f32 %v284, 0.0
    %v293 = vmax.f32 %v287, 0.0
    %vm294 = vcmask 261120
    %v295 = vsel %vm294, %v290, 0.0
    %v296 = vsel %vm294, %v291, 0.0
    %v297 = vadd.f32 %v295, %v296
    %v298 = vrot.slane %v297, 4
    %v299 = vadd.f32 %v297, %v298
    %v300 = vrot.slane %v299, 2
    %v301 = vadd.f32 %v299, %v300
    %v302 = vrot.slane %v301, 1
    %v303 = vadd.f32 %v301, %v302
    %v304 = vsel %vm294, %v292, 0.0
    %v305 = vsel %vm294, %v293, 0.0
    %v306 = vadd.f32 %v304, %v305
    %v307 = vrot.slane %v306, 4
    %v308 = vadd.f32 %v306, %v307
    %v309 = vrot.slane %v308, 2
    %v310 = vadd.f32 %v308, %v309
    %v311 = vrot.slane %v310, 1
    %v312 = vadd.f32 %v310, %v311
    %v313 = vrcp.pop 16.0
    %v314 = vmul.f32 %v303, %v313
    %v315 = vmul.f32 %v312, %v313
    %v316 = vpack.c.bf16 %v314, %v314
    %v317 = vpack.c.bf16 %v315, %v315
    %v318 = vld [vmem:[#allocation20] sm:$0xf]
    %v319 = vld [vmem:[#allocation20 + $0x4] sm:$0xf]
    %v320 = vld [vmem:[#allocation20 + $0x8] sm:$0xf]
    %v321 = vld [vmem:[#allocation20 + $0xc] sm:$0xf]
    %v322 = vld [vmem:[#allocation21] sm:$0x1]
    %v324 = vlaneseq
    %v325 = vshrl.u32 %v324, 7
    %v326 = vsub.s32 0, %v325
    %v327 = vrot.slane %v322, %v326
    %v331 = vunpack.c.l.b16 %v316
    %v332 = vunpack.c.l.b16 %v317
    %vm333 = vcmask 1041409
    %v334 = vsel %vm333, %v332, %v331
    %v335 = vpack.c.b16 %v334, %v334
    %v340 = vunpack.c.l.b16 %v318
    %v341 = vunpack.c.l.b16 %v319
    %v342 = vunpack.c.l.b16 %v320
    %v343 = vunpack.c.l.b16 %v321
    %v344 = vpack.c.b16 %v341, %v340
    %v345 = vpack.c.b16 %v343, %v342
    %v349 = vsel %vm294, %v335, 0
    %351 = vmatprep.subr.bf16.mxu0 0
    %352 = vmatpush1.bf16.msra.mxu0 0
    %353 = vmatprep.subr.bf16.mxu0 0
    %354 = vmatpush1.bf16.msra.mxu0 0
    %355 = vmatprep.subr.bf16.mxu0 0
    %356 = vmatpush1.bf16.msra.mxu0 0
    %357 = vmatprep.subr.bf16.mxu0 0
    %358 = vmatpush1.bf16.msra.mxu0 0
    %359 = vmatprep.subr.bf16.mxu0 0
    %360 = vmatpush1.bf16.msra.mxu0 0
    %361 = vmatprep.subr.bf16.mxu0 0
    %362 = vmatpush1.bf16.msra.mxu0 0
    %363 = vmatprep.subr.bf16.mxu0 0
    %364 = vmatpush1.bf16.msra.mxu0 %v345
    %365 = vmatprep.subr.bf16.mxu0 0
    %366 = vmatpush1.bf16.msra.mxu0 %v344
    %367 = vmatprep.subr.bf16.mxu0 0
    %368 = vmatpush2.bf16.msra.mxu0 0
    %369 = vmatprep.subr.bf16.mxu0 0
    %370 = vmatpush2.bf16.msra.mxu0 0
    %371 = vmatprep.subr.bf16.mxu0 0
    %372 = vmatpush2.bf16.msra.mxu0 0
    %373 = vmatprep.subr.bf16.mxu0 0
    %374 = vmatpush2.bf16.msra.mxu0 0
    %375 = vmatprep.subr.bf16.mxu0 0
    %376 = vmatpush2.bf16.msra.mxu0 0
    %377 = vmatprep.subr.bf16.mxu0 0
    %378 = vmatpush2.bf16.msra.mxu0 0
    %379 = vmatprep.subr.bf16.mxu0 0
    %380 = vmatpush2.bf16.msra.mxu0 0
    %381 = vmatprep.subr.bf16.mxu0 0
    %382 = vmatpush2.bf16.msra.mxu0 0
    %383 = vmatprep.mubr.bf16.mxu0 0
    %384 = vmatmul.mubr.bf16.gmra.mxu0 %v349
    %v385 = vpop.f32.mrf.mxu0
    %v386 = vadd.f32 %v327, %v385
    %v387 = vpop.f32.mrf.mxu0
    %v388 = vpop.f32.mrf.mxu0
    %v389 = vpop.f32.mrf.mxu0
    %390 = vdwg.mxu0
    %v391 = vld [vmem:[%s16] sm:$0xf]
    %v392 = vld [vmem:[%s16 + $0x4] sm:$0xf]
    %v393 = vld [vmem:[%s16 + $0x8] sm:$0xf]
    %v394 = vld [vmem:[%s16 + $0xc] sm:$0xf]
    %v395 = vld [vmem:[%s17] sm:$0x1]
    %v397 = vlaneseq
    %v398 = vshrl.u32 %v397, 7
    %v399 = vsub.s32 0, %v398
    %v400 = vrot.slane %v395, %v399
    %v406 = vunpack.c.l.b16 %v391
    %v407 = vunpack.c.l.b16 %v392
    %v408 = vunpack.c.l.b16 %v393
    %v409 = vunpack.c.l.b16 %v394
    %v410 = vpack.c.b16 %v407, %v406
    %v411 = vpack.c.b16 %v409, %v408
    %414 = vmatprep.subr.bf16.mxu0 0
    %415 = vmatpush1.bf16.msra.mxu0 0
    %416 = vmatprep.subr.bf16.mxu0 0
    %417 = vmatpush1.bf16.msra.mxu0 0
    %418 = vmatprep.subr.bf16.mxu0 0
    %419 = vmatpush1.bf16.msra.mxu0 0
    %420 = vmatprep.subr.bf16.mxu0 0
    %421 = vmatpush1.bf16.msra.mxu0 0
    %422 = vmatprep.subr.bf16.mxu0 0
    %423 = vmatpush1.bf16.msra.mxu0 0
    %424 = vmatprep.subr.bf16.mxu0 0
    %425 = vmatpush1.bf16.msra.mxu0 0
    %426 = vmatprep.subr.bf16.mxu0 0
    %427 = vmatpush1.bf16.msra.mxu0 %v411
    %428 = vmatprep.subr.bf16.mxu0 0
    %429 = vmatpush1.bf16.msra.mxu0 %v410
    %430 = vmatprep.subr.bf16.mxu0 0
    %431 = vmatpush2.bf16.msra.mxu0 0
    %432 = vmatprep.subr.bf16.mxu0 0
    %433 = vmatpush2.bf16.msra.mxu0 0
    %434 = vmatprep.subr.bf16.mxu0 0
    %435 = vmatpush2.bf16.msra.mxu0 0
    %436 = vmatprep.subr.bf16.mxu0 0
    %437 = vmatpush2.bf16.msra.mxu0 0
    %438 = vmatprep.subr.bf16.mxu0 0
    %439 = vmatpush2.bf16.msra.mxu0 0
    %440 = vmatprep.subr.bf16.mxu0 0
    %441 = vmatpush2.bf16.msra.mxu0 0
    %442 = vmatprep.subr.bf16.mxu0 0
    %443 = vmatpush2.bf16.msra.mxu0 0
    %444 = vmatprep.subr.bf16.mxu0 0
    %445 = vmatpush2.bf16.msra.mxu0 0
    %446 = vmatprep.mubr.bf16.mxu0 0
    %447 = vmatmul.mubr.bf16.gmra.mxu0 %v349
    %v448 = vpop.f32.mrf.mxu0
    %v449 = vadd.f32 %v400, %v448
    %v450 = vpop.f32.mrf.mxu0
    %v451 = vpop.f32.mrf.mxu0
    %v452 = vpop.f32.mrf.mxu0
    %453 = vdwg.mxu0
    %v454 = vpack.c.bf16 %v291, %v290
    %v455 = vpack.c.bf16 %v293, %v292
    %v456 = vld [vmem:[%s4] sm:$0xf]
    %v457 = vld [vmem:[%s4 + $0x4] sm:$0xf]
    %v458 = vld [vmem:[%s4 + $0x8] sm:$0xf]
    %v459 = vld [vmem:[%s4 + $0xc] sm:$0xf]
    %v460 = vld [vmem:[#allocation8] sm:$0x1]
    %v462 = vlaneseq
    %v463 = vshrl.u32 %v462, 7
    %v464 = vsub.s32 0, %v463
    %v465 = vrot.slane %v460, %v464
    %v471 = vunpack.c.l.b16 %v456
    %v472 = vunpack.c.l.b16 %v457
    %v473 = vunpack.c.l.b16 %v458
    %v474 = vunpack.c.l.b16 %v459
    %v475 = vpack.c.b16 %v472, %v471
    %v476 = vpack.c.b16 %v474, %v473
    %v480 = vsel %vm294, %v454, 0
    %v483 = vsel %vm294, %v455, 0
    %485 = vmatprep.subr.bf16.mxu0 0
    %486 = vmatpush1.bf16.msra.mxu0 0
    %487 = vmatprep.subr.bf16.mxu0 0
    %488 = vmatpush1.bf16.msra.mxu0 0
    %489 = vmatprep.subr.bf16.mxu0 0
    %490 = vmatpush1.bf16.msra.mxu0 0
    %491 = vmatprep.subr.bf16.mxu0 0
    %492 = vmatpush1.bf16.msra.mxu0 0
    %493 = vmatprep.subr.bf16.mxu0 0
    %494 = vmatpush1.bf16.msra.mxu0 0
    %495 = vmatprep.subr.bf16.mxu0 0
    %496 = vmatpush1.bf16.msra.mxu0 0
    %497 = vmatprep.subr.bf16.mxu0 0
    %498 = vmatpush1.bf16.msra.mxu0 %v476
    %499 = vmatprep.subr.bf16.mxu0 0
    %500 = vmatpush1.bf16.msra.mxu0 %v475
    %501 = vmatprep.subr.bf16.mxu0 0
    %502 = vmatpush2.bf16.msra.mxu0 0
    %503 = vmatprep.subr.bf16.mxu0 0
    %504 = vmatpush2.bf16.msra.mxu0 0
    %505 = vmatprep.subr.bf16.mxu0 0
    %506 = vmatpush2.bf16.msra.mxu0 0
    %507 = vmatprep.subr.bf16.mxu0 0
    %508 = vmatpush2.bf16.msra.mxu0 0
    %509 = vmatprep.subr.bf16.mxu0 0
    %510 = vmatpush2.bf16.msra.mxu0 0
    %511 = vmatprep.subr.bf16.mxu0 0
    %512 = vmatpush2.bf16.msra.mxu0 0
    %513 = vmatprep.subr.bf16.mxu0 0
    %514 = vmatpush2.bf16.msra.mxu0 0
    %515 = vmatprep.subr.bf16.mxu0 0
    %516 = vmatpush2.bf16.msra.mxu0 0
    %517 = vmatprep.mubr.bf16.mxu0 0
    %518 = vmatmul.mubr.bf16.gmra.mxu0 %v480
    %v519 = vpop.f32.mrf.mxu0
    %v520 = vadd.f32 %v465, %v519
    %v521 = vpop.f32.mrf.mxu0
    %v522 = vpop.f32.mrf.mxu0
    %v523 = vadd.f32 %v465, %v522
    %v524 = vpop.f32.mrf.mxu0
    %525 = vmatprep.mubr.bf16.mxu0 0
    %526 = vmatmul.mubr.bf16.gmra.mxu0 %v483
    %v527 = vpop.f32.mrf.mxu0
    %v528 = vadd.f32 %v465, %v527
    %v529 = vpop.f32.mrf.mxu0
    %v530 = vpop.f32.mrf.mxu0
    %v531 = vadd.f32 %v465, %v530
    %v532 = vpop.f32.mrf.mxu0
    %533 = vdwg.mxu0
    %v534 = vld [vmem:[#allocation3] sm:$0x1]
    %v535 = vld [vmem:[#allocation3 + $0x1] sm:$0x1]
    %v536 = vld [vmem:[#allocation3 + $0x2] sm:$0x1]
    %v537 = vld [vmem:[#allocation3 + $0x3] sm:$0x1]
    %v538 = vld [vmem:[#allocation3 + $0x4] sm:$0x1]
    %v539 = vld [vmem:[#allocation3 + $0x5] sm:$0x1]
    %v540 = vld [vmem:[#allocation14] sm:$0xf]
    %v541 = vld [vmem:[#allocation14 + $0x4] sm:$0xf]
    %v542 = vld [vmem:[#allocation14 + $0x8] sm:$0xf]
    %v543 = vld [vmem:[#allocation14 + $0xc] sm:$0xf]
    %v550 = vcombine.low %v534, %v535
    %v551 = vcombine.low %v536, %v537
    %v552 = vcombine.low %v538, %v539
    %v554 = vunpack.c.l.s4 1966171168
    %v555 = vunpack.c.0.s8 %v554
    %v556 = vlaneseq
    %v557 = vshrl.u32 %v556, 7
    %v558 = vsub.s32 %v555, %v557
    %v559 = vrot.slane %v550, %v558
    %v561 = vunpack.c.l.s4 1966171168
    %v562 = vunpack.c.0.s8 %v561
    %v563 = vlaneseq
    %v564 = vshrl.u32 %v563, 7
    %v565 = vsub.s32 %v562, %v564
    %v566 = vrot.slane %v551, %v565
    %v568 = vunpack.c.l.s4 1966171168
    %v569 = vunpack.c.0.s8 %v568
    %v570 = vlaneseq
    %v571 = vshrl.u32 %v570, 7
    %v572 = vsub.s32 %v569, %v571
    %v573 = vrot.slane %v552, %v572
    %v574 = vcombine.low %v559, %v566
    %v576 = vunpack.c.l.s4 1966171168
    %v577 = vunpack.c.0.s8 %v576
    %v578 = vlaneseq
    %v579 = vshrl.u32 %v578, 7
    %v580 = vsub.s32 %v577, %v579
    %v581 = vrot.slane %v574, %v580
    %v583 = vunpack.c.l.s4 1966171168
    %v584 = vunpack.c.0.s8 %v583
    %v585 = vlaneseq
    %v586 = vshrl.u32 %v585, 7
    %v587 = vsub.s32 %v584, %v586
    %v588 = vrot.slane %v573, %v587
    %v589 = vcombine.low %v581, %v588
    %v594 = vunpack.c.l.b16 %v540
    %v595 = vunpack.c.l.b16 %v541
    %v596 = vunpack.c.l.b16 %v542
    %v597 = vunpack.c.l.b16 %v543
    %v598 = vpack.c.b16 %v595, %v594
    %v599 = vpack.c.b16 %v597, %v596
    %v603 = vsel %vm294, %v589, 0
    %605 = vmatprep.subr.bf16.mxu0 0
    %606 = vmatpush1.bf16.msra.mxu0 0
    %607 = vmatprep.subr.bf16.mxu0 0
    %608 = vmatpush1.bf16.msra.mxu0 0
    %609 = vmatprep.subr.bf16.mxu0 0
    %610 = vmatpush1.bf16.msra.mxu0 0
    %611 = vmatprep.subr.bf16.mxu0 0
    %612 = vmatpush1.bf16.msra.mxu0 0
    %613 = vmatprep.subr.bf16.mxu0 0
    %614 = vmatpush1.bf16.msra.mxu0 0
    %615 = vmatprep.subr.bf16.mxu0 0
    %616 = vmatpush1.bf16.msra.mxu0 0
    %617 = vmatprep.subr.bf16.mxu0 0
    %618 = vmatpush1.bf16.msra.mxu0 %v599
    %619 = vmatprep.subr.bf16.mxu0 0
    %620 = vmatpush1.bf16.msra.mxu0 %v598
    %621 = vmatprep.subr.bf16.mxu0 0
    %622 = vmatpush2.bf16.msra.mxu0 0
    %623 = vmatprep.subr.bf16.mxu0 0
    %624 = vmatpush2.bf16.msra.mxu0 0
    %625 = vmatprep.subr.bf16.mxu0 0
    %626 = vmatpush2.bf16.msra.mxu0 0
    %627 = vmatprep.subr.bf16.mxu0 0
    %628 = vmatpush2.bf16.msra.mxu0 0
    %629 = vmatprep.subr.bf16.mxu0 0
    %630 = vmatpush2.bf16.msra.mxu0 0
    %631 = vmatprep.subr.bf16.mxu0 0
    %632 = vmatpush2.bf16.msra.mxu0 0
    %633 = vmatprep.subr.bf16.mxu0 0
    %634 = vmatpush2.bf16.msra.mxu0 0
    %635 = vmatprep.subr.bf16.mxu0 0
    %636 = vmatpush2.bf16.msra.mxu0 0
    %637 = vmatprep.mubr.bf16.mxu0 0
    %638 = vmatmul.mubr.bf16.gmra.mxu0 %v603
    %v639 = vpop.f32.mrf.mxu0
    %v640 = vadd.f32 0.0, %v639
    %v641 = vpop.f32.mrf.mxu0
    %v642 = vpop.f32.mrf.mxu0
    %v643 = vadd.f32 0.0, %v642
    %v644 = vpop.f32.mrf.mxu0
    %645 = vdwg.mxu0
    %v648 = vcombine.high %v640, %v640
    %v650 = vunpack.c.l.s4 1983009808
    %v651 = vunpack.c.0.s8 %v650
    %v652 = vlaneseq
    %v653 = vshrl.u32 %v652, 7
    %v654 = vsub.s32 %v651, %v653
    %v655 = vrot.slane %v640, %v654
    %v657 = vunpack.c.l.s4 1983009808
    %v658 = vunpack.c.0.s8 %v657
    %v659 = vlaneseq
    %v660 = vshrl.u32 %v659, 7
    %v661 = vsub.s32 %v658, %v660
    %v662 = vrot.slane %v648, %v661
    %v663 = vcombine.high %v655, %v655
    %v664 = vcombine.high %v662, %v662
    %v666 = vunpack.c.l.s4 1983009808
    %v667 = vunpack.c.0.s8 %v666
    %v668 = vlaneseq
    %v669 = vshrl.u32 %v668, 7
    %v670 = vsub.s32 %v667, %v669
    %v671 = vrot.slane %v643, %v670
    %v672 = vcombine.high %v671, %v671
    %679 = vst [vmem:[#allocation2] sm:$0x3] %v655
    %680 = vst [vmem:[#allocation2 + $0x2] sm:$0x3] %v663
    %681 = vst [vmem:[#allocation2 + $0x4] sm:$0x3] %v662
    %682 = vst [vmem:[#allocation2 + $0x6] sm:$0x3] %v664
    %683 = vst [vmem:[#allocation2 + $0x8] sm:$0x3] %v671
    %684 = vst [vmem:[#allocation2 + $0xa] sm:$0x3] %v672
    %v685 = vld [vmem:[#allocation9] sm:$0xf]
    %v686 = vld [vmem:[#allocation9 + $0x4] sm:$0xf]
    %v687 = vld [vmem:[#allocation9 + $0x8] sm:$0xf]
    %v688 = vld [vmem:[#allocation9 + $0xc] sm:$0xf]
    %v689 = vld [vmem:[#allocation11] sm:$0x1]
    %v690 = vld [vmem:[#allocation12] sm:$0x1]
    %v691 = vld [vmem:[%s10] sm:$0xf]
    %v692 = vld [vmem:[%s10 + $0x4] sm:$0xf]
    %v693 = vld [vmem:[%s10 + $0x8] sm:$0xf]
    %v694 = vld [vmem:[%s10 + $0xc] sm:$0xf]
    %v695 = vld [vmem:[%s10 + $0x10] sm:$0xf]
    %v696 = vld [vmem:[%s10 + $0x14] sm:$0xf]
    %v697 = vld [vmem:[%s10 + $0x18] sm:$0xf]
    %v698 = vld [vmem:[%s10 + $0x1c] sm:$0xf]
    %v699 = vld [vmem:[#allocation15] sm:$0x1]
    %v700 = vld [vmem:[#allocation17] sm:$0xf]
    %v701 = vld [vmem:[#allocation17 + $0x4] sm:$0xf]
    %v702 = vld [vmem:[#allocation17 + $0x8] sm:$0xf]
    %v703 = vld [vmem:[#allocation17 + $0xc] sm:$0xf]
    %v704 = vld [vmem:[#allocation17 + $0x10] sm:$0xf]
    %v705 = vld [vmem:[#allocation17 + $0x14] sm:$0xf]
    %v706 = vld [vmem:[#allocation17 + $0x18] sm:$0xf]
    %v707 = vld [vmem:[#allocation17 + $0x1c] sm:$0xf]
    %v708 = vld [vmem:[#allocation18] sm:$0x1]
    %v709 = vpack.c.bf16 %v386, %v386
    %v711 = vlaneseq
    %v712 = vshrl.u32 %v711, 7
    %v713 = vsub.s32 0, %v712
    %v714 = vrot.slane %v689, %v713
    %v720 = vunpack.c.l.b16 %v685
    %v721 = vunpack.c.l.b16 %v686
    %v722 = vunpack.c.l.b16 %v687
    %v723 = vunpack.c.l.b16 %v688
    %v724 = vpack.c.b16 %v721, %v720
    %v725 = vpack.c.b16 %v723, %v722
    %v729 = vsel %vm294, %v709, 0
    %731 = vmatprep.subr.bf16.mxu0 0
    %732 = vmatpush1.bf16.msra.mxu0 0
    %733 = vmatprep.subr.bf16.mxu0 0
    %734 = vmatpush1.bf16.msra.mxu0 0
    %735 = vmatprep.subr.bf16.mxu0 0
    %736 = vmatpush1.bf16.msra.mxu0 0
    %737 = vmatprep.subr.bf16.mxu0 0
    %738 = vmatpush1.bf16.msra.mxu0 0
    %739 = vmatprep.subr.bf16.mxu0 0
    %740 = vmatpush1.bf16.msra.mxu0 0
    %741 = vmatprep.subr.bf16.mxu0 0
    %742 = vmatpush1.bf16.msra.mxu0 0
    %743 = vmatprep.subr.bf16.mxu0 0
    %744 = vmatpush1.bf16.msra.mxu0 %v725
    %745 = vmatprep.subr.bf16.mxu0 0
    %746 = vmatpush1.bf16.msra.mxu0 %v724
    %747 = vmatprep.subr.bf16.mxu0 0
    %748 = vmatpush2.bf16.msra.mxu0 0
    %749 = vmatprep.subr.bf16.mxu0 0
    %750 = vmatpush2.bf16.msra.mxu0 0
    %751 = vmatprep.subr.bf16.mxu0 0
    %752 = vmatpush2.bf16.msra.mxu0 0
    %753 = vmatprep.subr.bf16.mxu0 0
    %754 = vmatpush2.bf16.msra.mxu0 0
    %755 = vmatprep.subr.bf16.mxu0 0
    %756 = vmatpush2.bf16.msra.mxu0 0
    %757 = vmatprep.subr.bf16.mxu0 0
    %758 = vmatpush2.bf16.msra.mxu0 0
    %759 = vmatprep.subr.bf16.mxu0 0
    %760 = vmatpush2.bf16.msra.mxu0 0
    %761 = vmatprep.subr.bf16.mxu0 0
    %762 = vmatpush2.bf16.msra.mxu0 0
    %763 = vmatprep.mubr.bf16.mxu0 0
    %764 = vmatmul.mubr.bf16.gmra.mxu0 %v729
    %v765 = vpop.f32.mrf.mxu0
    %v766 = vadd.f32 %v714, %v765
    %v767 = vpop.f32.mrf.mxu0
    %v768 = vpop.f32.mrf.mxu0
    %v769 = vpop.f32.mrf.mxu0
    %770 = vdwg.mxu0
    %v773 = vunpack.c.l.s4 1966171168
    %v774 = vunpack.c.0.s8 %v773
    %v775 = vlaneseq
    %v776 = vshrl.u32 %v775, 7
    %v777 = vsub.s32 %v774, %v776
    %v778 = vrot.slane %v766, %v777
    %v779 = vcombine.high %v778, %v778
    %v781 = vunpack.c.l.s4 1966171168
    %v782 = vunpack.c.0.s8 %v781
    %v783 = vlaneseq
    %v784 = vshrl.u32 %v783, 7
    %v785 = vsub.s32 %v782, %v784
    %v786 = vrot.slane %v778, %v785
    %v788 = vunpack.c.l.s4 1966171168
    %v789 = vunpack.c.0.s8 %v788
    %v790 = vlaneseq
    %v791 = vshrl.u32 %v790, 7
    %v792 = vsub.s32 %v789, %v791
    %v793 = vrot.slane %v779, %v792
    %v794 = vlaneseq
    %v795 = vshrl.u32 %v794, 7
    %v796 = vsub.s32 0, %v795
    %v797 = vrot.slane %v786, %v796
    %v798 = vlaneseq
    %v799 = vshrl.u32 %v798, 7
    %v800 = vsub.s32 0, %v799
    %v801 = vrot.slane %v793, %v800
    %v804 = vadd.f32 %v520, %v797
    %v805 = vadd.f32 %v523, %v797
    %v806 = vadd.f32 %v528, %v801
    %v807 = vadd.f32 %v531, %v801
    %v808 = vmax.f32 %v804, 0.0
    %v809 = vmax.f32 %v805, 0.0
    %v810 = vmax.f32 %v806, 0.0
    %v811 = vmax.f32 %v807, 0.0
    %v813 = vlaneseq
    %v814 = vshrl.u32 %v813, 7
    %v815 = vsub.s32 0, %v814
    %v816 = vrot.slane %v690, %v815
    %v818 = vmul.f32 %v808, %v816
    %v819 = vmul.f32 %v809, %v816
    %v820 = vmul.f32 %v810, %v816
    %v821 = vmul.f32 %v811, %v816
    %v822 = vsel %vm294, %v818, 0.0
    %823 = vadd.xlane.f32.xlu0 %v822
    %v824 = vpop.xlane.xlu0 %823
    %v825 = vsel %vm294, %v819, 0.0
    %826 = vadd.xlane.f32.xlu0 %v825
    %v827 = vpop.xlane.xlu0 %826
    %v828 = vsel %vm294, %v820, 0.0
    %829 = vadd.xlane.f32.xlu0 %v828
    %v830 = vpop.xlane.xlu0 %829
    %v831 = vsel %vm294, %v821, 0.0
    %832 = vadd.xlane.f32.xlu0 %v831
    %v833 = vpop.xlane.xlu0 %832
    %v838 = vlaneseq
    %v839 = vand.u32 %v838, 127
    %v840 = vlaneseq
    %v841 = vshrl.u32 %v840, 7
    %v842 = vsub.s32 %v839, %v841
    %v843 = vrot.slane %v824, %v842
    %v844 = vadd.s32 %v839, 4294967288
    %v845 = vlaneseq
    %v846 = vshrl.u32 %v845, 7
    %v847 = vsub.s32 %v844, %v846
    %v848 = vrot.slane %v827, %v847
    %vm849 = vcmask 130112
    %v850 = vsel %vm849, %v848, %v843
    %v851 = vlaneseq
    %v852 = vshrl.u32 %v851, 7
    %v853 = vsub.s32 %v839, %v852
    %v854 = vrot.slane %v830, %v853
    %v855 = vlaneseq
    %v856 = vshrl.u32 %v855, 7
    %v857 = vsub.s32 %v844, %v856
    %v858 = vrot.slane %v833, %v857
    %v859 = vsel %vm849, %v858, %v854
    %v860 = vsel %vm333, %v859, %v850
    %vm862 = vcmask 123904
    %v863 = vsel %vm862, %v860, -inf
    %864 = vmax.xlane.f32.xlu0 %v863
    %v865 = vpop.xlane.xlu0 %864
    %v867 = vlaneseq
    %v868 = vshrl.u32 %v867, 7
    %v869 = vsub.s32 0, %v868
    %v870 = vrot.slane %v865, %v869
    %v871 = vlaneseq
    %v872 = vshrl.u32 %v871, 7
    %v873 = vsub.s32 1, %v872
    %v874 = vrot.slane %v865, %v873
    %v877 = vsub.f32 %v824, %v870
    %v878 = vsub.f32 %v827, %v870
    %v879 = vsub.f32 %v830, %v874
    %v880 = vsub.f32 %v833, %v874
    %v881 = vmul.f32 %v877, 1.442695
    %v882 = vpow.pop %v881
    %v883 = vmul.f32 %v878, 1.442695
    %v884 = vpow.pop %v883
    %v885 = vmul.f32 %v879, 1.442695
    %v886 = vpow.pop %v885
    %v887 = vmul.f32 %v880, 1.442695
    %v888 = vpow.pop %v887
    %893 = vset.pattern.permute.xlu0 0
    %894 = vperm.xlu0 %893, %v882
    %v895 = vpop.permute.xlu0 %894
    %896 = vset.pattern.permute.xlu0 0
    %897 = vperm.xlu0 %896, %v884
    %v898 = vpop.permute.xlu0 %897
    %899 = vset.pattern.permute.xlu0 0
    %900 = vperm.xlu0 %899, %v886
    %v901 = vpop.permute.xlu0 %900
    %902 = vset.pattern.permute.xlu0 0
    %903 = vperm.xlu0 %902, %v888
    %v904 = vpop.permute.xlu0 %903
    %v905 = vlaneseq
    %v906 = vshrl.u32 %v905, 7
    %v907 = vsub.s32 %v839, %v906
    %v908 = vrot.slane %v895, %v907
    %v909 = vlaneseq
    %v910 = vshrl.u32 %v909, 7
    %v911 = vsub.s32 %v844, %v910
    %v912 = vrot.slane %v898, %v911
    %v913 = vsel %vm849, %v912, %v908
    %v914 = vlaneseq
    %v915 = vshrl.u32 %v914, 7
    %v916 = vsub.s32 %v839, %v915
    %v917 = vrot.slane %v901, %v916
    %v918 = vlaneseq
    %v919 = vshrl.u32 %v918, 7
    %v920 = vsub.s32 %v844, %v919
    %v921 = vrot.slane %v904, %v920
    %v922 = vsel %vm849, %v921, %v917
    %v923 = vsel %vm333, %v922, %v913
    %v925 = vsel %vm862, %v923, 0.0
    %926 = vadd.xlane.f32.xlu0 %v925
    %v927 = vpop.xlane.xlu0 %926
    %v928 = vrcp.pop %v927
    %v930 = vlaneseq
    %v931 = vshrl.u32 %v930, 7
    %v932 = vsub.s32 0, %v931
    %v933 = vrot.slane %v928, %v932
    %v934 = vlaneseq
    %v935 = vshrl.u32 %v934, 7
    %v936 = vsub.s32 1, %v935
    %v937 = vrot.slane %v928, %v936
    %v940 = vmul.f32 %v882, %v933
    %v941 = vmul.f32 %v884, %v933
    %v942 = vmul.f32 %v886, %v937
    %v943 = vmul.f32 %v888, %v937
    %945 = vset.pattern.permute.xlu0 0
    %946 = vperm.xlu0 %945, %v940
    %v947 = vpop.permute.xlu0 %946
    %950 = vset.pattern.permute.xlu0 0
    %951 = vperm.xlu0 %950, %v941
    %v952 = vpop.permute.xlu0 %951
    %955 = vset.pattern.permute.xlu0 0
    %956 = vperm.xlu0 %955, %v942
    %v957 = vpop.permute.xlu0 %956
    %960 = vset.pattern.permute.xlu0 0
    %961 = vperm.xlu0 %960, %v943
    %v962 = vpop.permute.xlu0 %961
    %v964 = vmul.f32 %v290, %v947
    %v965 = vmul.f32 %v291, %v952
    %v966 = vmul.f32 %v292, %v957
    %v967 = vmul.f32 %v293, %v962
    %v968 = vsel %vm294, %v964, 0.0
    %v969 = vsel %vm294, %v965, 0.0
    %v970 = vadd.f32 %v968, %v969
    %v971 = vrot.slane %v970, 4
    %v972 = vadd.f32 %v970, %v971
    %v973 = vrot.slane %v972, 2
    %v974 = vadd.f32 %v972, %v973
    %v975 = vrot.slane %v974, 1
    %v976 = vadd.f32 %v974, %v975
    %v977 = vsel %vm294, %v966, 0.0
    %v978 = vsel %vm294, %v967, 0.0
    %v979 = vadd.f32 %v977, %v978
    %v980 = vrot.slane %v979, 4
    %v981 = vadd.f32 %v979, %v980
    %v982 = vrot.slane %v981, 2
    %v983 = vadd.f32 %v981, %v982
    %v984 = vrot.slane %v983, 1
    %v985 = vadd.f32 %v983, %v984
    %v986 = vld [vmem:[#allocation2] sm:$0x3]
    %v989 = vsel %vm333, %v985, %v976
    %992 = vrot.lane.b32.xlu0 %v386, 32
    %v993 = vpop.permute.xlu0 %992
    %v995 = vsel %vm294, %v989, %v993
    %v996 = vpack.c.bf16 %v995, %v995
    %v1005 = vunpack.c.l.b16 %v691
    %v1006 = vunpack.c.l.b16 %v692
    %v1007 = vunpack.c.l.b16 %v693
    %v1008 = vunpack.c.l.b16 %v694
    %v1009 = vunpack.c.l.b16 %v695
    %v1010 = vunpack.c.l.b16 %v696
    %v1011 = vunpack.c.l.b16 %v697
    %v1012 = vunpack.c.l.b16 %v698
    %v1013 = vpack.c.b16 %v1006, %v1005
    %v1014 = vpack.c.b16 %v1008, %v1007
    %v1015 = vpack.c.b16 %v1010, %v1009
    %v1016 = vpack.c.b16 %v1012, %v1011
    %vm1021 = vcmask 523264
    %v1023 = vsel %vm1021, %v996, 0
    %1025 = vmatprep.subr.bf16.mxu0 0
    %1026 = vmatpush1.bf16.msra.mxu0 0
    %1027 = vmatprep.subr.bf16.mxu0 0
    %1028 = vmatpush1.bf16.msra.mxu0 0
    %1029 = vmatprep.subr.bf16.mxu0 0
    %1030 = vmatpush1.bf16.msra.mxu0 0
    %1031 = vmatprep.subr.bf16.mxu0 0
    %1032 = vmatpush1.bf16.msra.mxu0 0
    %1033 = vmatprep.subr.bf16.mxu0 0
    %1034 = vmatpush1.bf16.msra.mxu0 %v1016
    %1035 = vmatprep.subr.bf16.mxu0 0
    %1036 = vmatpush1.bf16.msra.mxu0 %v1015
    %1037 = vmatprep.subr.bf16.mxu0 0
    %1038 = vmatpush1.bf16.msra.mxu0 %v1014
    %1039 = vmatprep.subr.bf16.mxu0 0
    %1040 = vmatpush1.bf16.msra.mxu0 %v1013
    %1041 = vmatprep.subr.bf16.mxu0 0
    %1042 = vmatpush2.bf16.msra.mxu0 0
    %1043 = vmatprep.subr.bf16.mxu0 0
    %1044 = vmatpush2.bf16.msra.mxu0 0
    %1045 = vmatprep.subr.bf16.mxu0 0
    %1046 = vmatpush2.bf16.msra.mxu0 0
    %1047 = vmatprep.subr.bf16.mxu0 0
    %1048 = vmatpush2.bf16.msra.mxu0 0
    %1049 = vmatprep.subr.bf16.mxu0 0
    %1050 = vmatpush2.bf16.msra.mxu0 0
    %1051 = vmatprep.subr.bf16.mxu0 0
    %1052 = vmatpush2.bf16.msra.mxu0 0
    %1053 = vmatprep.subr.bf16.mxu0 0
    %1054 = vmatpush2.bf16.msra.mxu0 0
    %1055 = vmatprep.subr.bf16.mxu0 0
    %1056 = vmatpush2.bf16.msra.mxu0 0
    %1057 = vmatprep.mubr.bf16.mxu0 0
    %1058 = vmatmul.mubr.bf16.gmra.mxu0 %v1023
    %v1059 = vpop.f32.mrf.mxu0
    %v1060 = vadd.f32 0.0, %v1059
    %v1061 = vpop.f32.mrf.mxu0
    %v1062 = vpop.f32.mrf.mxu0
    %v1063 = vpop.f32.mrf.mxu0
    %1064 = vdwg.mxu0
    %v1065 = vadd.f32 %v986, %v1060
    %v1067 = vlaneseq
    %v1068 = vshrl.u32 %v1067, 7
    %v1069 = vsub.s32 0, %v1068
    %v1070 = vrot.slane %v699, %v1069
    %v1072 = vadd.f32 %v1065, %v1070
    %v1073 = vxor.u32 %v1072, 2147483648
    %v1074 = vmul.f32 %v1073, 1.442695
    %v1075 = vpow.pop %v1074
    %v1076 = vadd.f32 %v1075, 1.0
    %v1077 = vrcp.pop %v1076
    %v1078 = vmul.f32 1.0, %v1077
    %v1079 = vtanh.pop %v1072
    %1081 = vrot.lane.b32.xlu0 %v449, 32
    %v1082 = vpop.permute.xlu0 %1081
    %v1084 = vmul.f32 %v1078, %v1082
    %1086 = vrot.lane.b32.xlu0 %v1079, 32
    %v1087 = vpop.permute.xlu0 %1086
    %v1089 = vmul.f32 %v1078, %v1087
    %1091 = vrot.lane.b32.xlu0 %v1089, 32
    %v1092 = vpop.permute.xlu0 %1091
    %v1094 = vadd.f32 %v1084, %v1092
    %v1095 = vtanh.pop %v1094
    %1097 = vrot.lane.b32.xlu0 %v1095, 32
    %v1098 = vpop.permute.xlu0 %1097
    %v1100 = vmul.f32 %v1078, %v1098
    %1102 = vrot.lane.b32.xlu0 %v1100, 64
    %v1103 = vpop.permute.xlu0 %1102
    %1105 = vrot.lane.b32.xlu0 %v989, 32
    %v1106 = vpop.permute.xlu0 %1105
    %v1108 = vsel %vm294, %v1103, %v1106
    %v1109 = vpack.c.bf16 %v1108, %v1108
    %v1111 = vlaneseq
    %v1112 = vshrl.u32 %v1111, 7
    %v1113 = vsub.s32 0, %v1112
    %v1114 = vrot.slane %v708, %v1113
    %v1124 = vunpack.c.l.b16 %v700
    %v1125 = vunpack.c.l.b16 %v701
    %v1126 = vunpack.c.l.b16 %v702
    %v1127 = vunpack.c.l.b16 %v703
    %v1128 = vunpack.c.l.b16 %v704
    %v1129 = vunpack.c.l.b16 %v705
    %v1130 = vunpack.c.l.b16 %v706
    %v1131 = vunpack.c.l.b16 %v707
    %v1132 = vpack.c.b16 %v1125, %v1124
    %v1133 = vpack.c.b16 %v1127, %v1126
    %v1134 = vpack.c.b16 %v1129, %v1128
    %v1135 = vpack.c.b16 %v1131, %v1130
    %v1141 = vsel %vm1021, %v1109, 0
    %1143 = vmatprep.subr.bf16.mxu0 0
    %1144 = vmatpush1.bf16.msra.mxu0 0
    %1145 = vmatprep.subr.bf16.mxu0 0
    %1146 = vmatpush1.bf16.msra.mxu0 0
    %1147 = vmatprep.subr.bf16.mxu0 0
    %1148 = vmatpush1.bf16.msra.mxu0 0
    %1149 = vmatprep.subr.bf16.mxu0 0
    %1150 = vmatpush1.bf16.msra.mxu0 0
    %1151 = vmatprep.subr.bf16.mxu0 0
    %1152 = vmatpush1.bf16.msra.mxu0 %v1135
    %1153 = vmatprep.subr.bf16.mxu0 0
    %1154 = vmatpush1.bf16.msra.mxu0 %v1134
    %1155 = vmatprep.subr.bf16.mxu0 0
    %1156 = vmatpush1.bf16.msra.mxu0 %v1133
    %1157 = vmatprep.subr.bf16.mxu0 0
    %1158 = vmatpush1.bf16.msra.mxu0 %v1132
    %1159 = vmatprep.subr.bf16.mxu0 0
    %1160 = vmatpush2.bf16.msra.mxu0 0
    %1161 = vmatprep.subr.bf16.mxu0 0
    %1162 = vmatpush2.bf16.msra.mxu0 0
    %1163 = vmatprep.subr.bf16.mxu0 0
    %1164 = vmatpush2.bf16.msra.mxu0 0
    %1165 = vmatprep.subr.bf16.mxu0 0
    %1166 = vmatpush2.bf16.msra.mxu0 0
    %1167 = vmatprep.subr.bf16.mxu0 0
    %1168 = vmatpush2.bf16.msra.mxu0 0
    %1169 = vmatprep.subr.bf16.mxu0 0
    %1170 = vmatpush2.bf16.msra.mxu0 0
    %1171 = vmatprep.subr.bf16.mxu0 0
    %1172 = vmatpush2.bf16.msra.mxu0 0
    %1173 = vmatprep.subr.bf16.mxu0 0
    %1174 = vmatpush2.bf16.msra.mxu0 0
    %1175 = vmatprep.mubr.bf16.mxu0 0
    %1176 = vmatmul.mubr.bf16.gmra.mxu0 %v1141
    %v1177 = vpop.f32.mrf.mxu0
    %v1178 = vadd.f32 %v1114, %v1177
    %v1179 = vpop.f32.mrf.mxu0
    %v1180 = vpop.f32.mrf.mxu0
    %v1181 = vpop.f32.mrf.mxu0
    %1182 = vdwg.mxu0
    %1183 = vst [vmem:[#allocation23] sm:$0x3] %v1178
    %v1184 = vlaneseq
    %v1185 = vshrl.u32 %v1184, 7
    %v1186 = vsub.s32 %v839, %v1185
    %v1187 = vrot.slane %v947, %v1186
    %v1188 = vlaneseq
    %v1189 = vshrl.u32 %v1188, 7
    %v1190 = vsub.s32 %v844, %v1189
    %v1191 = vrot.slane %v952, %v1190
    %v1192 = vsel %vm849, %v1191, %v1187
    %v1193 = vlaneseq
    %v1194 = vshrl.u32 %v1193, 7
    %v1195 = vsub.s32 %v839, %v1194
    %v1196 = vrot.slane %v957, %v1195
    %v1197 = vlaneseq
    %v1198 = vshrl.u32 %v1197, 7
    %v1199 = vsub.s32 %v844, %v1198
    %v1200 = vrot.slane %v962, %v1199
    %v1201 = vsel %vm849, %v1200, %v1196
    %v1202 = vsel %vm333, %v1201, %v1192
    %1204 = vst.msk [vmem:[#allocation24] sm:$0x3] %vm862, %v1202
    %v1205 = vpack.c.bf16 %v1100, %v1100
    %1207 = vrot.lane.b32.xlu0 %v1205, 64
    %v1208 = vpop.permute.xlu0 %1207
    %v1210 = vsel %vm294, %v1208, 0
    %1212 = vmatprep.subr.bf16.mxu0 0
    %1213 = vmatpush1.bf16.msra.mxu0 0
    %1214 = vmatprep.subr.bf16.mxu0 0
    %1215 = vmatpush1.bf16.msra.mxu0 0
    %1216 = vmatprep.subr.bf16.mxu0 0
    %1217 = vmatpush1.bf16.msra.mxu0 0
    %1218 = vmatprep.subr.bf16.mxu0 0
    %1219 = vmatpush1.bf16.msra.mxu0 0
    %1220 = vmatprep.subr.bf16.mxu0 0
    %1221 = vmatpush1.bf16.msra.mxu0 0
    %1222 = vmatprep.subr.bf16.mxu0 0
    %1223 = vmatpush1.bf16.msra.mxu0 0
    %1224 = vmatprep.subr.bf16.mxu0 0
    %1225 = vmatpush1.bf16.msra.mxu0 %v725
    %1226 = vmatprep.subr.bf16.mxu0 0
    %1227 = vmatpush1.bf16.msra.mxu0 %v724
    %1228 = vmatprep.subr.bf16.mxu0 0
    %1229 = vmatpush2.bf16.msra.mxu0 0
    %1230 = vmatprep.subr.bf16.mxu0 0
    %1231 = vmatpush2.bf16.msra.mxu0 0
    %1232 = vmatprep.subr.bf16.mxu0 0
    %1233 = vmatpush2.bf16.msra.mxu0 0
    %1234 = vmatprep.subr.bf16.mxu0 0
    %1235 = vmatpush2.bf16.msra.mxu0 0
    %1236 = vmatprep.subr.bf16.mxu0 0
    %1237 = vmatpush2.bf16.msra.mxu0 0
    %1238 = vmatprep.subr.bf16.mxu0 0
    %1239 = vmatpush2.bf16.msra.mxu0 0
    %1240 = vmatprep.subr.bf16.mxu0 0
    %1241 = vmatpush2.bf16.msra.mxu0 0
    %1242 = vmatprep.subr.bf16.mxu0 0
    %1243 = vmatpush2.bf16.msra.mxu0 0
    %1244 = vmatprep.mubr.bf16.mxu0 0
    %1245 = vmatmul.mubr.bf16.gmra.mxu0 %v1210
    %v1246 = vpop.f32.mrf.mxu0
    %v1247 = vadd.f32 %v714, %v1246
    %v1248 = vpop.f32.mrf.mxu0
    %v1249 = vpop.f32.mrf.mxu0
    %v1250 = vpop.f32.mrf.mxu0
    %1251 = vdwg.mxu0
    %v1254 = vunpack.c.l.s4 1966171168
    %v1255 = vunpack.c.0.s8 %v1254
    %v1256 = vlaneseq
    %v1257 = vshrl.u32 %v1256, 7
    %v1258 = vsub.s32 %v1255, %v1257
    %v1259 = vrot.slane %v1247, %v1258
    %v1260 = vcombine.high %v1259, %v1259
    %v1262 = vunpack.c.l.s4 1966171168
    %v1263 = vunpack.c.0.s8 %v1262
    %v1264 = vlaneseq
    %v1265 = vshrl.u32 %v1264, 7
    %v1266 = vsub.s32 %v1263, %v1265
    %v1267 = vrot.slane %v1259, %v1266
    %v1269 = vunpack.c.l.s4 1966171168
    %v1270 = vunpack.c.0.s8 %v1269
    %v1271 = vlaneseq
    %v1272 = vshrl.u32 %v1271, 7
    %v1273 = vsub.s32 %v1270, %v1272
    %v1274 = vrot.slane %v1260, %v1273
    %v1275 = vlaneseq
    %v1276 = vshrl.u32 %v1275, 7
    %v1277 = vsub.s32 0, %v1276
    %v1278 = vrot.slane %v1267, %v1277
    %v1279 = vlaneseq
    %v1280 = vshrl.u32 %v1279, 7
    %v1281 = vsub.s32 0, %v1280
    %v1282 = vrot.slane %v1274, %v1281
    %v1285 = vadd.f32 %v520, %v1278
    %v1286 = vadd.f32 %v523, %v1278
    %v1287 = vadd.f32 %v528, %v1282
    %v1288 = vadd.f32 %v531, %v1282
    %v1289 = vmax.f32 %v1285, 0.0
    %v1290 = vmax.f32 %v1286, 0.0
    %v1291 = vmax.f32 %v1287, 0.0
    %v1292 = vmax.f32 %v1288, 0.0
    %v1293 = vmul.f32 %v1289, %v816
    %v1294 = vmul.f32 %v1290, %v816
    %v1295 = vmul.f32 %v1291, %v816
    %v1296 = vmul.f32 %v1292, %v816
    %v1297 = vsel %vm294, %v1293, 0.0
    %1298 = vadd.xlane.f32.xlu0 %v1297
    %v1299 = vpop.xlane.xlu0 %1298
    %v1300 = vsel %vm294, %v1294, 0.0
    %1301 = vadd.xlane.f32.xlu0 %v1300
    %v1302 = vpop.xlane.xlu0 %1301
    %v1303 = vsel %vm294, %v1295, 0.0
    %1304 = vadd.xlane.f32.xlu0 %v1303
    %v1305 = vpop.xlane.xlu0 %1304
    %v1306 = vsel %vm294, %v1296, 0.0
    %1307 = vadd.xlane.f32.xlu0 %v1306
    %v1308 = vpop.xlane.xlu0 %1307
    %v1313 = vlaneseq
    %v1314 = vshrl.u32 %v1313, 7
    %v1315 = vsub.s32 %v839, %v1314
    %v1316 = vrot.slane %v1299, %v1315
    %v1317 = vlaneseq
    %v1318 = vshrl.u32 %v1317, 7
    %v1319 = vsub.s32 %v844, %v1318
    %v1320 = vrot.slane %v1302, %v1319
    %v1321 = vsel %vm849, %v1320, %v1316
    %v1322 = vlaneseq
    %v1323 = vshrl.u32 %v1322, 7
    %v1324 = vsub.s32 %v839, %v1323
    %v1325 = vrot.slane %v1305, %v1324
    %v1326 = vlaneseq
    %v1327 = vshrl.u32 %v1326, 7
    %v1328 = vsub.s32 %v844, %v1327
    %v1329 = vrot.slane %v1308, %v1328
    %v1330 = vsel %vm849, %v1329, %v1325
    %v1331 = vsel %vm333, %v1330, %v1321
    %v1333 = vsel %vm862, %v1331, -inf
    %1334 = vmax.xlane.f32.xlu0 %v1333
    %v1335 = vpop.xlane.xlu0 %1334
    %v1337 = vlaneseq
    %v1338 = vshrl.u32 %v1337, 7
    %v1339 = vsub.s32 0, %v1338
    %v1340 = vrot.slane %v1335, %v1339
    %v1341 = vlaneseq
    %v1342 = vshrl.u32 %v1341, 7
    %v1343 = vsub.s32 1, %v1342
    %v1344 = vrot.slane %v1335, %v1343
    %v1347 = vsub.f32 %v1299, %v1340
    %v1348 = vsub.f32 %v1302, %v1340
    %v1349 = vsub.f32 %v1305, %v1344
    %v1350 = vsub.f32 %v1308, %v1344
    %v1351 = vmul.f32 %v1347, 1.442695
    %v1352 = vpow.pop %v1351
    %v1353 = vmul.f32 %v1348, 1.442695
    %v1354 = vpow.pop %v1353
    %v1355 = vmul.f32 %v1349, 1.442695
    %v1356 = vpow.pop %v1355
    %v1357 = vmul.f32 %v1350, 1.442695
    %v1358 = vpow.pop %v1357
    %1363 = vset.pattern.permute.xlu0 0
    %1364 = vperm.xlu0 %1363, %v1352
    %v1365 = vpop.permute.xlu0 %1364
    %1366 = vset.pattern.permute.xlu0 0
    %1367 = vperm.xlu0 %1366, %v1354
    %v1368 = vpop.permute.xlu0 %1367
    %1369 = vset.pattern.permute.xlu0 0
    %1370 = vperm.xlu0 %1369, %v1356
    %v1371 = vpop.permute.xlu0 %1370
    %1372 = vset.pattern.permute.xlu0 0
    %1373 = vperm.xlu0 %1372, %v1358
    %v1374 = vpop.permute.xlu0 %1373
    %v1375 = vlaneseq
    %v1376 = vshrl.u32 %v1375, 7
    %v1377 = vsub.s32 %v839, %v1376
    %v1378 = vrot.slane %v1365, %v1377
    %v1379 = vlaneseq
    %v1380 = vshrl.u32 %v1379, 7
    %v1381 = vsub.s32 %v844, %v1380
    %v1382 = vrot.slane %v1368, %v1381
    %v1383 = vsel %vm849, %v1382, %v1378
    %v1384 = vlaneseq
    %v1385 = vshrl.u32 %v1384, 7
    %v1386 = vsub.s32 %v839, %v1385
    %v1387 = vrot.slane %v1371, %v1386
    %v1388 = vlaneseq
    %v1389 = vshrl.u32 %v1388, 7
    %v1390 = vsub.s32 %v844, %v1389
    %v1391 = vrot.slane %v1374, %v1390
    %v1392 = vsel %vm849, %v1391, %v1387
    %v1393 = vsel %vm333, %v1392, %v1383
    %v1395 = vsel %vm862, %v1393, 0.0
    %1396 = vadd.xlane.f32.xlu0 %v1395
    %v1397 = vpop.xlane.xlu0 %1396
    %v1398 = vrcp.pop %v1397
    %v1400 = vlaneseq
    %v1401 = vshrl.u32 %v1400, 7
    %v1402 = vsub.s32 0, %v1401
    %v1403 = vrot.slane %v1398, %v1402
    %v1404 = vlaneseq
    %v1405 = vshrl.u32 %v1404, 7
    %v1406 = vsub.s32 1, %v1405
    %v1407 = vrot.slane %v1398, %v1406
    %v1410 = vmul.f32 %v1352, %v1403
    %v1411 = vmul.f32 %v1354, %v1403
    %v1412 = vmul.f32 %v1356, %v1407
    %v1413 = vmul.f32 %v1358, %v1407
    %1415 = vset.pattern.permute.xlu0 0
    %1416 = vperm.xlu0 %1415, %v1410
    %v1417 = vpop.permute.xlu0 %1416
    %1420 = vset.pattern.permute.xlu0 0
    %1421 = vperm.xlu0 %1420, %v1411
    %v1422 = vpop.permute.xlu0 %1421
    %1425 = vset.pattern.permute.xlu0 0
    %1426 = vperm.xlu0 %1425, %v1412
    %v1427 = vpop.permute.xlu0 %1426
    %1430 = vset.pattern.permute.xlu0 0
    %1431 = vperm.xlu0 %1430, %v1413
    %v1432 = vpop.permute.xlu0 %1431
    %v1434 = vmul.f32 %v290, %v1417
    %v1435 = vmul.f32 %v291, %v1422
    %v1436 = vmul.f32 %v292, %v1427
    %v1437 = vmul.f32 %v293, %v1432
    %v1438 = vsel %vm294, %v1434, 0.0
    %v1439 = vsel %vm294, %v1435, 0.0
    %v1440 = vadd.f32 %v1438, %v1439
    %v1441 = vrot.slane %v1440, 4
    %v1442 = vadd.f32 %v1440, %v1441
    %v1443 = vrot.slane %v1442, 2
    %v1444 = vadd.f32 %v1442, %v1443
    %v1445 = vrot.slane %v1444, 1
    %v1446 = vadd.f32 %v1444, %v1445
    %v1447 = vsel %vm294, %v1436, 0.0
    %v1448 = vsel %vm294, %v1437, 0.0
    %v1449 = vadd.f32 %v1447, %v1448
    %v1450 = vrot.slane %v1449, 4
    %v1451 = vadd.f32 %v1449, %v1450
    %v1452 = vrot.slane %v1451, 2
    %v1453 = vadd.f32 %v1451, %v1452
    %v1454 = vrot.slane %v1453, 1
    %v1455 = vadd.f32 %v1453, %v1454
    %s1456 = scalar_lea.vmem [#allocation2], 2
    %v1457 = vld [vmem:[%s1456] sm:$0x3]
    %v1460 = vsel %vm333, %v1455, %v1446
    %1462 = vrot.lane.b32.xlu0 %v1100, 96
    %v1463 = vpop.permute.xlu0 %1462
    %v1465 = vsel %vm294, %v1460, %v1463
    %v1466 = vpack.c.bf16 %v1465, %v1465
    %v1468 = vsel %vm1021, %v1466, 0
    %1470 = vmatprep.subr.bf16.mxu0 0
    %1471 = vmatpush1.bf16.msra.mxu0 0
    %1472 = vmatprep.subr.bf16.mxu0 0
    %1473 = vmatpush1.bf16.msra.mxu0 0
    %1474 = vmatprep.subr.bf16.mxu0 0
    %1475 = vmatpush1.bf16.msra.mxu0 0
    %1476 = vmatprep.subr.bf16.mxu0 0
    %1477 = vmatpush1.bf16.msra.mxu0 0
    %1478 = vmatprep.subr.bf16.mxu0 0
    %1479 = vmatpush1.bf16.msra.mxu0 %v1016
    %1480 = vmatprep.subr.bf16.mxu0 0
    %1481 = vmatpush1.bf16.msra.mxu0 %v1015
    %1482 = vmatprep.subr.bf16.mxu0 0
    %1483 = vmatpush1.bf16.msra.mxu0 %v1014
    %1484 = vmatprep.subr.bf16.mxu0 0
    %1485 = vmatpush1.bf16.msra.mxu0 %v1013
    %1486 = vmatprep.subr.bf16.mxu0 0
    %1487 = vmatpush2.bf16.msra.mxu0 0
    %1488 = vmatprep.subr.bf16.mxu0 0
    %1489 = vmatpush2.bf16.msra.mxu0 0
    %1490 = vmatprep.subr.bf16.mxu0 0
    %1491 = vmatpush2.bf16.msra.mxu0 0
    %1492 = vmatprep.subr.bf16.mxu0 0
    %1493 = vmatpush2.bf16.msra.mxu0 0
    %1494 = vmatprep.subr.bf16.mxu0 0
    %1495 = vmatpush2.bf16.msra.mxu0 0
    %1496 = vmatprep.subr.bf16.mxu0 0
    %1497 = vmatpush2.bf16.msra.mxu0 0
    %1498 = vmatprep.subr.bf16.mxu0 0
    %1499 = vmatpush2.bf16.msra.mxu0 0
    %1500 = vmatprep.subr.bf16.mxu0 0
    %1501 = vmatpush2.bf16.msra.mxu0 0
    %1502 = vmatprep.mubr.bf16.mxu0 0
    %1503 = vmatmul.mubr.bf16.gmra.mxu0 %v1468
    %v1504 = vpop.f32.mrf.mxu0
    %v1505 = vadd.f32 0.0, %v1504
    %v1506 = vpop.f32.mrf.mxu0
    %v1507 = vpop.f32.mrf.mxu0
    %v1508 = vpop.f32.mrf.mxu0
    %1509 = vdwg.mxu0
    %v1510 = vadd.f32 %v1457, %v1505
    %v1511 = vadd.f32 %v1510, %v1070
    %v1512 = vxor.u32 %v1511, 2147483648
    %v1513 = vmul.f32 %v1512, 1.442695
    %v1514 = vpow.pop %v1513
    %v1515 = vadd.f32 %v1514, 1.0
    %v1516 = vrcp.pop %v1515
    %v1517 = vmul.f32 1.0, %v1516
    %v1518 = vtanh.pop %v1511
    %v1519 = vmul.f32 %v1517, %v1094
    %1521 = vrot.lane.b32.xlu0 %v1518, 32
    %v1522 = vpop.permute.xlu0 %1521
    %v1524 = vmul.f32 %v1517, %v1522
    %1526 = vrot.lane.b32.xlu0 %v1524, 32
    %v1527 = vpop.permute.xlu0 %1526
    %v1529 = vadd.f32 %v1519, %v1527
    %v1530 = vtanh.pop %v1529
    %1532 = vrot.lane.b32.xlu0 %v1530, 32
    %v1533 = vpop.permute.xlu0 %1532
    %v1535 = vmul.f32 %v1517, %v1533
    %1537 = vrot.lane.b32.xlu0 %v1535, 64
    %v1538 = vpop.permute.xlu0 %1537
    %1540 = vrot.lane.b32.xlu0 %v1460, 32
    %v1541 = vpop.permute.xlu0 %1540
    %v1543 = vsel %vm294, %v1538, %v1541
    %v1544 = vpack.c.bf16 %v1543, %v1543
    %v1546 = vsel %vm1021, %v1544, 0
    %1548 = vmatprep.subr.bf16.mxu0 0
    %1549 = vmatpush1.bf16.msra.mxu0 0
    %1550 = vmatprep.subr.bf16.mxu0 0
    %1551 = vmatpush1.bf16.msra.mxu0 0
    %1552 = vmatprep.subr.bf16.mxu0 0
    %1553 = vmatpush1.bf16.msra.mxu0 0
    %1554 = vmatprep.subr.bf16.mxu0 0
    %1555 = vmatpush1.bf16.msra.mxu0 0
    %1556 = vmatprep.subr.bf16.mxu0 0
    %1557 = vmatpush1.bf16.msra.mxu0 %v1135
    %1558 = vmatprep.subr.bf16.mxu0 0
    %1559 = vmatpush1.bf16.msra.mxu0 %v1134
    %1560 = vmatprep.subr.bf16.mxu0 0
    %1561 = vmatpush1.bf16.msra.mxu0 %v1133
    %1562 = vmatprep.subr.bf16.mxu0 0
    %1563 = vmatpush1.bf16.msra.mxu0 %v1132
    %1564 = vmatprep.subr.bf16.mxu0 0
    %1565 = vmatpush2.bf16.msra.mxu0 0
    %1566 = vmatprep.subr.bf16.mxu0 0
    %1567 = vmatpush2.bf16.msra.mxu0 0
    %1568 = vmatprep.subr.bf16.mxu0 0
    %1569 = vmatpush2.bf16.msra.mxu0 0
    %1570 = vmatprep.subr.bf16.mxu0 0
    %1571 = vmatpush2.bf16.msra.mxu0 0
    %1572 = vmatprep.subr.bf16.mxu0 0
    %1573 = vmatpush2.bf16.msra.mxu0 0
    %1574 = vmatprep.subr.bf16.mxu0 0
    %1575 = vmatpush2.bf16.msra.mxu0 0
    %1576 = vmatprep.subr.bf16.mxu0 0
    %1577 = vmatpush2.bf16.msra.mxu0 0
    %1578 = vmatprep.subr.bf16.mxu0 0
    %1579 = vmatpush2.bf16.msra.mxu0 0
    %1580 = vmatprep.mubr.bf16.mxu0 0
    %1581 = vmatmul.mubr.bf16.gmra.mxu0 %v1546
    %v1582 = vpop.f32.mrf.mxu0
    %v1583 = vadd.f32 %v1114, %v1582
    %v1584 = vpop.f32.mrf.mxu0
    %v1585 = vpop.f32.mrf.mxu0
    %v1586 = vpop.f32.mrf.mxu0
    %1587 = vdwg.mxu0
    %s1588 = scalar_lea.vmem [#allocation23], 2
    %1589 = vst [vmem:[%s1588] sm:$0x3] %v1583
    %v1590 = vlaneseq
    %v1591 = vshrl.u32 %v1590, 7
    %v1592 = vsub.s32 %v839, %v1591
    %v1593 = vrot.slane %v1417, %v1592
    %v1594 = vlaneseq
    %v1595 = vshrl.u32 %v1594, 7
    %v1596 = vsub.s32 %v844, %v1595
    %v1597 = vrot.slane %v1422, %v1596
    %v1598 = vsel %vm849, %v1597, %v1593
    %v1599 = vlaneseq
    %v1600 = vshrl.u32 %v1599, 7
    %v1601 = vsub.s32 %v839, %v1600
    %v1602 = vrot.slane %v1427, %v1601
    %v1603 = vlaneseq
    %v1604 = vshrl.u32 %v1603, 7
    %v1605 = vsub.s32 %v844, %v1604
    %v1606 = vrot.slane %v1432, %v1605
    %v1607 = vsel %vm849, %v1606, %v1602
    %v1608 = vsel %vm333, %v1607, %v1598
    %s1610 = scalar_lea.vmem [#allocation24], 2
    %1611 = vst.msk [vmem:[%s1610] sm:$0x3] %vm862, %v1608
    %v1612 = vpack.c.bf16 %v1535, %v1535
    %1614 = vrot.lane.b32.xlu0 %v1612, 64
    %v1615 = vpop.permute.xlu0 %1614
    %v1617 = vsel %vm294, %v1615, 0
    %1619 = vmatprep.subr.bf16.mxu0 0
    %1620 = vmatpush1.bf16.msra.mxu0 0
    %1621 = vmatprep.subr.bf16.mxu0 0
    %1622 = vmatpush1.bf16.msra.mxu0 0
    %1623 = vmatprep.subr.bf16.mxu0 0
    %1624 = vmatpush1.bf16.msra.mxu0 0
    %1625 = vmatprep.subr.bf16.mxu0 0
    %1626 = vmatpush1.bf16.msra.mxu0 0
    %1627 = vmatprep.subr.bf16.mxu0 0
    %1628 = vmatpush1.bf16.msra.mxu0 0
    %1629 = vmatprep.subr.bf16.mxu0 0
    %1630 = vmatpush1.bf16.msra.mxu0 0
    %1631 = vmatprep.subr.bf16.mxu0 0
    %1632 = vmatpush1.bf16.msra.mxu0 %v725
    %1633 = vmatprep.subr.bf16.mxu0 0
    %1634 = vmatpush1.bf16.msra.mxu0 %v724
    %1635 = vmatprep.subr.bf16.mxu0 0
    %1636 = vmatpush2.bf16.msra.mxu0 0
    %1637 = vmatprep.subr.bf16.mxu0 0
    %1638 = vmatpush2.bf16.msra.mxu0 0
    %1639 = vmatprep.subr.bf16.mxu0 0
    %1640 = vmatpush2.bf16.msra.mxu0 0
    %1641 = vmatprep.subr.bf16.mxu0 0
    %1642 = vmatpush2.bf16.msra.mxu0 0
    %1643 = vmatprep.subr.bf16.mxu0 0
    %1644 = vmatpush2.bf16.msra.mxu0 0
    %1645 = vmatprep.subr.bf16.mxu0 0
    %1646 = vmatpush2.bf16.msra.mxu0 0
    %1647 = vmatprep.subr.bf16.mxu0 0
    %1648 = vmatpush2.bf16.msra.mxu0 0
    %1649 = vmatprep.subr.bf16.mxu0 0
    %1650 = vmatpush2.bf16.msra.mxu0 0
    %1651 = vmatprep.mubr.bf16.mxu0 0
    %1652 = vmatmul.mubr.bf16.gmra.mxu0 %v1617
    %v1653 = vpop.f32.mrf.mxu0
    %v1654 = vadd.f32 %v714, %v1653
    %v1655 = vpop.f32.mrf.mxu0
    %v1656 = vpop.f32.mrf.mxu0
    %v1657 = vpop.f32.mrf.mxu0
    %1658 = vdwg.mxu0
    %v1661 = vunpack.c.l.s4 1966171168
    %v1662 = vunpack.c.0.s8 %v1661
    %v1663 = vlaneseq
    %v1664 = vshrl.u32 %v1663, 7
    %v1665 = vsub.s32 %v1662, %v1664
    %v1666 = vrot.slane %v1654, %v1665
    %v1667 = vcombine.high %v1666, %v1666
    %v1669 = vunpack.c.l.s4 1966171168
    %v1670 = vunpack.c.0.s8 %v1669
    %v1671 = vlaneseq
    %v1672 = vshrl.u32 %v1671, 7
    %v1673 = vsub.s32 %v1670, %v1672
    %v1674 = vrot.slane %v1666, %v1673
    %v1676 = vunpack.c.l.s4 1966171168
    %v1677 = vunpack.c.0.s8 %v1676
    %v1678 = vlaneseq
    %v1679 = vshrl.u32 %v1678, 7
    %v1680 = vsub.s32 %v1677, %v1679
    %v1681 = vrot.slane %v1667, %v1680
    %v1682 = vlaneseq
    %v1683 = vshrl.u32 %v1682, 7
    %v1684 = vsub.s32 0, %v1683
    %v1685 = vrot.slane %v1674, %v1684
    %v1686 = vlaneseq
    %v1687 = vshrl.u32 %v1686, 7
    %v1688 = vsub.s32 0, %v1687
    %v1689 = vrot.slane %v1681, %v1688
    %v1692 = vadd.f32 %v520, %v1685
    %v1693 = vadd.f32 %v523, %v1685
    %v1694 = vadd.f32 %v528, %v1689
    %v1695 = vadd.f32 %v531, %v1689
    %v1696 = vmax.f32 %v1692, 0.0
    %v1697 = vmax.f32 %v1693, 0.0
    %v1698 = vmax.f32 %v1694, 0.0
    %v1699 = vmax.f32 %v1695, 0.0
    %v1700 = vmul.f32 %v1696, %v816
    %v1701 = vmul.f32 %v1697, %v816
    %v1702 = vmul.f32 %v1698, %v816
    %v1703 = vmul.f32 %v1699, %v816
    %v1704 = vsel %vm294, %v1700, 0.0
    %1705 = vadd.xlane.f32.xlu0 %v1704
    %v1706 = vpop.xlane.xlu0 %1705
    %v1707 = vsel %vm294, %v1701, 0.0
    %1708 = vadd.xlane.f32.xlu0 %v1707
    %v1709 = vpop.xlane.xlu0 %1708
    %v1710 = vsel %vm294, %v1702, 0.0
    %1711 = vadd.xlane.f32.xlu0 %v1710
    %v1712 = vpop.xlane.xlu0 %1711
    %v1713 = vsel %vm294, %v1703, 0.0
    %1714 = vadd.xlane.f32.xlu0 %v1713
    %v1715 = vpop.xlane.xlu0 %1714
    %v1720 = vlaneseq
    %v1721 = vshrl.u32 %v1720, 7
    %v1722 = vsub.s32 %v839, %v1721
    %v1723 = vrot.slane %v1706, %v1722
    %v1724 = vlaneseq
    %v1725 = vshrl.u32 %v1724, 7
    %v1726 = vsub.s32 %v844, %v1725
    %v1727 = vrot.slane %v1709, %v1726
    %v1728 = vsel %vm849, %v1727, %v1723
    %v1729 = vlaneseq
    %v1730 = vshrl.u32 %v1729, 7
    %v1731 = vsub.s32 %v839, %v1730
    %v1732 = vrot.slane %v1712, %v1731
    %v1733 = vlaneseq
    %v1734 = vshrl.u32 %v1733, 7
    %v1735 = vsub.s32 %v844, %v1734
    %v1736 = vrot.slane %v1715, %v1735
    %v1737 = vsel %vm849, %v1736, %v1732
    %v1738 = vsel %vm333, %v1737, %v1728
    %v1740 = vsel %vm862, %v1738, -inf
    %1741 = vmax.xlane.f32.xlu0 %v1740
    %v1742 = vpop.xlane.xlu0 %1741
    %v1744 = vlaneseq
    %v1745 = vshrl.u32 %v1744, 7
    %v1746 = vsub.s32 0, %v1745
    %v1747 = vrot.slane %v1742, %v1746
    %v1748 = vlaneseq
    %v1749 = vshrl.u32 %v1748, 7
    %v1750 = vsub.s32 1, %v1749
    %v1751 = vrot.slane %v1742, %v1750
    %v1754 = vsub.f32 %v1706, %v1747
    %v1755 = vsub.f32 %v1709, %v1747
    %v1756 = vsub.f32 %v1712, %v1751
    %v1757 = vsub.f32 %v1715, %v1751
    %v1758 = vmul.f32 %v1754, 1.442695
    %v1759 = vpow.pop %v1758
    %v1760 = vmul.f32 %v1755, 1.442695
    %v1761 = vpow.pop %v1760
    %v1762 = vmul.f32 %v1756, 1.442695
    %v1763 = vpow.pop %v1762
    %v1764 = vmul.f32 %v1757, 1.442695
    %v1765 = vpow.pop %v1764
    %1770 = vset.pattern.permute.xlu0 0
    %1771 = vperm.xlu0 %1770, %v1759
    %v1772 = vpop.permute.xlu0 %1771
    %1773 = vset.pattern.permute.xlu0 0
    %1774 = vperm.xlu0 %1773, %v1761
    %v1775 = vpop.permute.xlu0 %1774
    %1776 = vset.pattern.permute.xlu0 0
    %1777 = vperm.xlu0 %1776, %v1763
    %v1778 = vpop.permute.xlu0 %1777
    %1779 = vset.pattern.permute.xlu0 0
    %1780 = vperm.xlu0 %1779, %v1765
    %v1781 = vpop.permute.xlu0 %1780
    %v1782 = vlaneseq
    %v1783 = vshrl.u32 %v1782, 7
    %v1784 = vsub.s32 %v839, %v1783
    %v1785 = vrot.slane %v1772, %v1784
    %v1786 = vlaneseq
    %v1787 = vshrl.u32 %v1786, 7
    %v1788 = vsub.s32 %v844, %v1787
    %v1789 = vrot.slane %v1775, %v1788
    %v1790 = vsel %vm849, %v1789, %v1785
    %v1791 = vlaneseq
    %v1792 = vshrl.u32 %v1791, 7
    %v1793 = vsub.s32 %v839, %v1792
    %v1794 = vrot.slane %v1778, %v1793
    %v1795 = vlaneseq
    %v1796 = vshrl.u32 %v1795, 7
    %v1797 = vsub.s32 %v844, %v1796
    %v1798 = vrot.slane %v1781, %v1797
    %v1799 = vsel %vm849, %v1798, %v1794
    %v1800 = vsel %vm333, %v1799, %v1790
    %v1802 = vsel %vm862, %v1800, 0.0
    %1803 = vadd.xlane.f32.xlu0 %v1802
    %v1804 = vpop.xlane.xlu0 %1803
    %v1805 = vrcp.pop %v1804
    %v1807 = vlaneseq
    %v1808 = vshrl.u32 %v1807, 7
    %v1809 = vsub.s32 0, %v1808
    %v1810 = vrot.slane %v1805, %v1809
    %v1811 = vlaneseq
    %v1812 = vshrl.u32 %v1811, 7
    %v1813 = vsub.s32 1, %v1812
    %v1814 = vrot.slane %v1805, %v1813
    %v1817 = vmul.f32 %v1759, %v1810
    %v1818 = vmul.f32 %v1761, %v1810
    %v1819 = vmul.f32 %v1763, %v1814
    %v1820 = vmul.f32 %v1765, %v1814
    %1822 = vset.pattern.permute.xlu0 0
    %1823 = vperm.xlu0 %1822, %v1817
    %v1824 = vpop.permute.xlu0 %1823
    %1827 = vset.pattern.permute.xlu0 0
    %1828 = vperm.xlu0 %1827, %v1818
    %v1829 = vpop.permute.xlu0 %1828
    %1832 = vset.pattern.permute.xlu0 0
    %1833 = vperm.xlu0 %1832, %v1819
    %v1834 = vpop.permute.xlu0 %1833
    %1837 = vset.pattern.permute.xlu0 0
    %1838 = vperm.xlu0 %1837, %v1820
    %v1839 = vpop.permute.xlu0 %1838
    %v1841 = vmul.f32 %v290, %v1824
    %v1842 = vmul.f32 %v291, %v1829
    %v1843 = vmul.f32 %v292, %v1834
    %v1844 = vmul.f32 %v293, %v1839
    %v1845 = vsel %vm294, %v1841, 0.0
    %v1846 = vsel %vm294, %v1842, 0.0
    %v1847 = vadd.f32 %v1845, %v1846
    %v1848 = vrot.slane %v1847, 4
    %v1849 = vadd.f32 %v1847, %v1848
    %v1850 = vrot.slane %v1849, 2
    %v1851 = vadd.f32 %v1849, %v1850
    %v1852 = vrot.slane %v1851, 1
    %v1853 = vadd.f32 %v1851, %v1852
    %v1854 = vsel %vm294, %v1843, 0.0
    %v1855 = vsel %vm294, %v1844, 0.0
    %v1856 = vadd.f32 %v1854, %v1855
    %v1857 = vrot.slane %v1856, 4
    %v1858 = vadd.f32 %v1856, %v1857
    %v1859 = vrot.slane %v1858, 2
    %v1860 = vadd.f32 %v1858, %v1859
    %v1861 = vrot.slane %v1860, 1
    %v1862 = vadd.f32 %v1860, %v1861
    %s1863 = scalar_lea.vmem [#allocation2], 4
    %v1864 = vld [vmem:[%s1863] sm:$0x3]
    %v1867 = vsel %vm333, %v1862, %v1853
    %1869 = vrot.lane.b32.xlu0 %v1535, 96
    %v1870 = vpop.permute.xlu0 %1869
    %v1872 = vsel %vm294, %v1867, %v1870
    %v1873 = vpack.c.bf16 %v1872, %v1872
    %v1875 = vsel %vm1021, %v1873, 0
    %1877 = vmatprep.subr.bf16.mxu0 0
    %1878 = vmatpush1.bf16.msra.mxu0 0
    %1879 = vmatprep.subr.bf16.mxu0 0
    %1880 = vmatpush1.bf16.msra.mxu0 0
    %1881 = vmatprep.subr.bf16.mxu0 0
    %1882 = vmatpush1.bf16.msra.mxu0 0
    %1883 = vmatprep.subr.bf16.mxu0 0
    %1884 = vmatpush1.bf16.msra.mxu0 0
    %1885 = vmatprep.subr.bf16.mxu0 0
    %1886 = vmatpush1.bf16.msra.mxu0 %v1016
    %1887 = vmatprep.subr.bf16.mxu0 0
    %1888 = vmatpush1.bf16.msra.mxu0 %v1015
    %1889 = vmatprep.subr.bf16.mxu0 0
    %1890 = vmatpush1.bf16.msra.mxu0 %v1014
    %1891 = vmatprep.subr.bf16.mxu0 0
    %1892 = vmatpush1.bf16.msra.mxu0 %v1013
    %1893 = vmatprep.subr.bf16.mxu0 0
    %1894 = vmatpush2.bf16.msra.mxu0 0
    %1895 = vmatprep.subr.bf16.mxu0 0
    %1896 = vmatpush2.bf16.msra.mxu0 0
    %1897 = vmatprep.subr.bf16.mxu0 0
    %1898 = vmatpush2.bf16.msra.mxu0 0
    %1899 = vmatprep.subr.bf16.mxu0 0
    %1900 = vmatpush2.bf16.msra.mxu0 0
    %1901 = vmatprep.subr.bf16.mxu0 0
    %1902 = vmatpush2.bf16.msra.mxu0 0
    %1903 = vmatprep.subr.bf16.mxu0 0
    %1904 = vmatpush2.bf16.msra.mxu0 0
    %1905 = vmatprep.subr.bf16.mxu0 0
    %1906 = vmatpush2.bf16.msra.mxu0 0
    %1907 = vmatprep.subr.bf16.mxu0 0
    %1908 = vmatpush2.bf16.msra.mxu0 0
    %1909 = vmatprep.mubr.bf16.mxu0 0
    %1910 = vmatmul.mubr.bf16.gmra.mxu0 %v1875
    %v1911 = vpop.f32.mrf.mxu0
    %v1912 = vadd.f32 0.0, %v1911
    %v1913 = vpop.f32.mrf.mxu0
    %v1914 = vpop.f32.mrf.mxu0
    %v1915 = vpop.f32.mrf.mxu0
    %1916 = vdwg.mxu0
    %v1917 = vadd.f32 %v1864, %v1912
    %v1918 = vadd.f32 %v1917, %v1070
    %v1919 = vxor.u32 %v1918, 2147483648
    %v1920 = vmul.f32 %v1919, 1.442695
    %v1921 = vpow.pop %v1920
    %v1922 = vadd.f32 %v1921, 1.0
    %v1923 = vrcp.pop %v1922
    %v1924 = vmul.f32 1.0, %v1923
    %v1925 = vtanh.pop %v1918
    %v1926 = vmul.f32 %v1924, %v1529
    %1928 = vrot.lane.b32.xlu0 %v1925, 32
    %v1929 = vpop.permute.xlu0 %1928
    %v1931 = vmul.f32 %v1924, %v1929
    %1933 = vrot.lane.b32.xlu0 %v1931, 32
    %v1934 = vpop.permute.xlu0 %1933
    %v1936 = vadd.f32 %v1926, %v1934
    %v1937 = vtanh.pop %v1936
    %1939 = vrot.lane.b32.xlu0 %v1937, 32
    %v1940 = vpop.permute.xlu0 %1939
    %v1942 = vmul.f32 %v1924, %v1940
    %1944 = vrot.lane.b32.xlu0 %v1942, 64
    %v1945 = vpop.permute.xlu0 %1944
    %1947 = vrot.lane.b32.xlu0 %v1867, 32
    %v1948 = vpop.permute.xlu0 %1947
    %v1950 = vsel %vm294, %v1945, %v1948
    %v1951 = vpack.c.bf16 %v1950, %v1950
    %v1953 = vsel %vm1021, %v1951, 0
    %1955 = vmatprep.subr.bf16.mxu0 0
    %1956 = vmatpush1.bf16.msra.mxu0 0
    %1957 = vmatprep.subr.bf16.mxu0 0
    %1958 = vmatpush1.bf16.msra.mxu0 0
    %1959 = vmatprep.subr.bf16.mxu0 0
    %1960 = vmatpush1.bf16.msra.mxu0 0
    %1961 = vmatprep.subr.bf16.mxu0 0
    %1962 = vmatpush1.bf16.msra.mxu0 0
    %1963 = vmatprep.subr.bf16.mxu0 0
    %1964 = vmatpush1.bf16.msra.mxu0 %v1135
    %1965 = vmatprep.subr.bf16.mxu0 0
    %1966 = vmatpush1.bf16.msra.mxu0 %v1134
    %1967 = vmatprep.subr.bf16.mxu0 0
    %1968 = vmatpush1.bf16.msra.mxu0 %v1133
    %1969 = vmatprep.subr.bf16.mxu0 0
    %1970 = vmatpush1.bf16.msra.mxu0 %v1132
    %1971 = vmatprep.subr.bf16.mxu0 0
    %1972 = vmatpush2.bf16.msra.mxu0 0
    %1973 = vmatprep.subr.bf16.mxu0 0
    %1974 = vmatpush2.bf16.msra.mxu0 0
    %1975 = vmatprep.subr.bf16.mxu0 0
    %1976 = vmatpush2.bf16.msra.mxu0 0
    %1977 = vmatprep.subr.bf16.mxu0 0
    %1978 = vmatpush2.bf16.msra.mxu0 0
    %1979 = vmatprep.subr.bf16.mxu0 0
    %1980 = vmatpush2.bf16.msra.mxu0 0
    %1981 = vmatprep.subr.bf16.mxu0 0
    %1982 = vmatpush2.bf16.msra.mxu0 0
    %1983 = vmatprep.subr.bf16.mxu0 0
    %1984 = vmatpush2.bf16.msra.mxu0 0
    %1985 = vmatprep.subr.bf16.mxu0 0
    %1986 = vmatpush2.bf16.msra.mxu0 0
    %1987 = vmatprep.mubr.bf16.mxu0 0
    %1988 = vmatmul.mubr.bf16.gmra.mxu0 %v1953
    %v1989 = vpop.f32.mrf.mxu0
    %v1990 = vadd.f32 %v1114, %v1989
    %v1991 = vpop.f32.mrf.mxu0
    %v1992 = vpop.f32.mrf.mxu0
    %v1993 = vpop.f32.mrf.mxu0
    %1994 = vdwg.mxu0
    %s1995 = scalar_lea.vmem [#allocation23], 4
    %1996 = vst [vmem:[%s1995] sm:$0x3] %v1990
    %v1997 = vlaneseq
    %v1998 = vshrl.u32 %v1997, 7
    %v1999 = vsub.s32 %v839, %v1998
    %v2000 = vrot.slane %v1824, %v1999
    %v2001 = vlaneseq
    %v2002 = vshrl.u32 %v2001, 7
    %v2003 = vsub.s32 %v844, %v2002
    %v2004 = vrot.slane %v1829, %v2003
    %v2005 = vsel %vm849, %v2004, %v2000
    %v2006 = vlaneseq
    %v2007 = vshrl.u32 %v2006, 7
    %v2008 = vsub.s32 %v839, %v2007
    %v2009 = vrot.slane %v1834, %v2008
    %v2010 = vlaneseq
    %v2011 = vshrl.u32 %v2010, 7
    %v2012 = vsub.s32 %v844, %v2011
    %v2013 = vrot.slane %v1839, %v2012
    %v2014 = vsel %vm849, %v2013, %v2009
    %v2015 = vsel %vm333, %v2014, %v2005
    %s2017 = scalar_lea.vmem [#allocation24], 4
    %2018 = vst.msk [vmem:[%s2017] sm:$0x3] %vm862, %v2015
    %v2019 = vpack.c.bf16 %v1942, %v1942
    %2021 = vrot.lane.b32.xlu0 %v2019, 64
    %v2022 = vpop.permute.xlu0 %2021
    %v2024 = vsel %vm294, %v2022, 0
    %2026 = vmatprep.subr.bf16.mxu0 0
    %2027 = vmatpush1.bf16.msra.mxu0 0
    %2028 = vmatprep.subr.bf16.mxu0 0
    %2029 = vmatpush1.bf16.msra.mxu0 0
    %2030 = vmatprep.subr.bf16.mxu0 0
    %2031 = vmatpush1.bf16.msra.mxu0 0
    %2032 = vmatprep.subr.bf16.mxu0 0
    %2033 = vmatpush1.bf16.msra.mxu0 0
    %2034 = vmatprep.subr.bf16.mxu0 0
    %2035 = vmatpush1.bf16.msra.mxu0 0
    %2036 = vmatprep.subr.bf16.mxu0 0
    %2037 = vmatpush1.bf16.msra.mxu0 0
    %2038 = vmatprep.subr.bf16.mxu0 0
    %2039 = vmatpush1.bf16.msra.mxu0 %v725
    %2040 = vmatprep.subr.bf16.mxu0 0
    %2041 = vmatpush1.bf16.msra.mxu0 %v724
    %2042 = vmatprep.subr.bf16.mxu0 0
    %2043 = vmatpush2.bf16.msra.mxu0 0
    %2044 = vmatprep.subr.bf16.mxu0 0
    %2045 = vmatpush2.bf16.msra.mxu0 0
    %2046 = vmatprep.subr.bf16.mxu0 0
    %2047 = vmatpush2.bf16.msra.mxu0 0
    %2048 = vmatprep.subr.bf16.mxu0 0
    %2049 = vmatpush2.bf16.msra.mxu0 0
    %2050 = vmatprep.subr.bf16.mxu0 0
    %2051 = vmatpush2.bf16.msra.mxu0 0
    %2052 = vmatprep.subr.bf16.mxu0 0
    %2053 = vmatpush2.bf16.msra.mxu0 0
    %2054 = vmatprep.subr.bf16.mxu0 0
    %2055 = vmatpush2.bf16.msra.mxu0 0
    %2056 = vmatprep.subr.bf16.mxu0 0
    %2057 = vmatpush2.bf16.msra.mxu0 0
    %2058 = vmatprep.mubr.bf16.mxu0 0
    %2059 = vmatmul.mubr.bf16.gmra.mxu0 %v2024
    %v2060 = vpop.f32.mrf.mxu0
    %v2061 = vadd.f32 %v714, %v2060
    %v2062 = vpop.f32.mrf.mxu0
    %v2063 = vpop.f32.mrf.mxu0
    %v2064 = vpop.f32.mrf.mxu0
    %2065 = vdwg.mxu0
    %v2068 = vunpack.c.l.s4 1966171168
    %v2069 = vunpack.c.0.s8 %v2068
    %v2070 = vlaneseq
    %v2071 = vshrl.u32 %v2070, 7
    %v2072 = vsub.s32 %v2069, %v2071
    %v2073 = vrot.slane %v2061, %v2072
    %v2074 = vcombine.high %v2073, %v2073
    %v2076 = vunpack.c.l.s4 1966171168
    %v2077 = vunpack.c.0.s8 %v2076
    %v2078 = vlaneseq
    %v2079 = vshrl.u32 %v2078, 7
    %v2080 = vsub.s32 %v2077, %v2079
    %v2081 = vrot.slane %v2073, %v2080
    %v2083 = vunpack.c.l.s4 1966171168
    %v2084 = vunpack.c.0.s8 %v2083
    %v2085 = vlaneseq
    %v2086 = vshrl.u32 %v2085, 7
    %v2087 = vsub.s32 %v2084, %v2086
    %v2088 = vrot.slane %v2074, %v2087
    %v2089 = vlaneseq
    %v2090 = vshrl.u32 %v2089, 7
    %v2091 = vsub.s32 0, %v2090
    %v2092 = vrot.slane %v2081, %v2091
    %v2093 = vlaneseq
    %v2094 = vshrl.u32 %v2093, 7
    %v2095 = vsub.s32 0, %v2094
    %v2096 = vrot.slane %v2088, %v2095
    %v2099 = vadd.f32 %v520, %v2092
    %v2100 = vadd.f32 %v523, %v2092
    %v2101 = vadd.f32 %v528, %v2096
    %v2102 = vadd.f32 %v531, %v2096
    %v2103 = vmax.f32 %v2099, 0.0
    %v2104 = vmax.f32 %v2100, 0.0
    %v2105 = vmax.f32 %v2101, 0.0
    %v2106 = vmax.f32 %v2102, 0.0
    %v2107 = vmul.f32 %v2103, %v816
    %v2108 = vmul.f32 %v2104, %v816
    %v2109 = vmul.f32 %v2105, %v816
    %v2110 = vmul.f32 %v2106, %v816
    %v2111 = vsel %vm294, %v2107, 0.0
    %2112 = vadd.xlane.f32.xlu0 %v2111
    %v2113 = vpop.xlane.xlu0 %2112
    %v2114 = vsel %vm294, %v2108, 0.0
    %2115 = vadd.xlane.f32.xlu0 %v2114
    %v2116 = vpop.xlane.xlu0 %2115
    %v2117 = vsel %vm294, %v2109, 0.0
    %2118 = vadd.xlane.f32.xlu0 %v2117
    %v2119 = vpop.xlane.xlu0 %2118
    %v2120 = vsel %vm294, %v2110, 0.0
    %2121 = vadd.xlane.f32.xlu0 %v2120
    %v2122 = vpop.xlane.xlu0 %2121
    %v2127 = vlaneseq
    %v2128 = vshrl.u32 %v2127, 7
    %v2129 = vsub.s32 %v839, %v2128
    %v2130 = vrot.slane %v2113, %v2129
    %v2131 = vlaneseq
    %v2132 = vshrl.u32 %v2131, 7
    %v2133 = vsub.s32 %v844, %v2132
    %v2134 = vrot.slane %v2116, %v2133
    %v2135 = vsel %vm849, %v2134, %v2130
    %v2136 = vlaneseq
    %v2137 = vshrl.u32 %v2136, 7
    %v2138 = vsub.s32 %v839, %v2137
    %v2139 = vrot.slane %v2119, %v2138
    %v2140 = vlaneseq
    %v2141 = vshrl.u32 %v2140, 7
    %v2142 = vsub.s32 %v844, %v2141
    %v2143 = vrot.slane %v2122, %v2142
    %v2144 = vsel %vm849, %v2143, %v2139
    %v2145 = vsel %vm333, %v2144, %v2135
    %v2147 = vsel %vm862, %v2145, -inf
    %2148 = vmax.xlane.f32.xlu0 %v2147
    %v2149 = vpop.xlane.xlu0 %2148
    %v2151 = vlaneseq
    %v2152 = vshrl.u32 %v2151, 7
    %v2153 = vsub.s32 0, %v2152
    %v2154 = vrot.slane %v2149, %v2153
    %v2155 = vlaneseq
    %v2156 = vshrl.u32 %v2155, 7
    %v2157 = vsub.s32 1, %v2156
    %v2158 = vrot.slane %v2149, %v2157
    %v2161 = vsub.f32 %v2113, %v2154
    %v2162 = vsub.f32 %v2116, %v2154
    %v2163 = vsub.f32 %v2119, %v2158
    %v2164 = vsub.f32 %v2122, %v2158
    %v2165 = vmul.f32 %v2161, 1.442695
    %v2166 = vpow.pop %v2165
    %v2167 = vmul.f32 %v2162, 1.442695
    %v2168 = vpow.pop %v2167
    %v2169 = vmul.f32 %v2163, 1.442695
    %v2170 = vpow.pop %v2169
    %v2171 = vmul.f32 %v2164, 1.442695
    %v2172 = vpow.pop %v2171
    %2177 = vset.pattern.permute.xlu0 0
    %2178 = vperm.xlu0 %2177, %v2166
    %v2179 = vpop.permute.xlu0 %2178
    %2180 = vset.pattern.permute.xlu0 0
    %2181 = vperm.xlu0 %2180, %v2168
    %v2182 = vpop.permute.xlu0 %2181
    %2183 = vset.pattern.permute.xlu0 0
    %2184 = vperm.xlu0 %2183, %v2170
    %v2185 = vpop.permute.xlu0 %2184
    %2186 = vset.pattern.permute.xlu0 0
    %2187 = vperm.xlu0 %2186, %v2172
    %v2188 = vpop.permute.xlu0 %2187
    %v2189 = vlaneseq
    %v2190 = vshrl.u32 %v2189, 7
    %v2191 = vsub.s32 %v839, %v2190
    %v2192 = vrot.slane %v2179, %v2191
    %v2193 = vlaneseq
    %v2194 = vshrl.u32 %v2193, 7
    %v2195 = vsub.s32 %v844, %v2194
    %v2196 = vrot.slane %v2182, %v2195
    %v2197 = vsel %vm849, %v2196, %v2192
    %v2198 = vlaneseq
    %v2199 = vshrl.u32 %v2198, 7
    %v2200 = vsub.s32 %v839, %v2199
    %v2201 = vrot.slane %v2185, %v2200
    %v2202 = vlaneseq
    %v2203 = vshrl.u32 %v2202, 7
    %v2204 = vsub.s32 %v844, %v2203
    %v2205 = vrot.slane %v2188, %v2204
    %v2206 = vsel %vm849, %v2205, %v2201
    %v2207 = vsel %vm333, %v2206, %v2197
    %v2209 = vsel %vm862, %v2207, 0.0
    %2210 = vadd.xlane.f32.xlu0 %v2209
    %v2211 = vpop.xlane.xlu0 %2210
    %v2212 = vrcp.pop %v2211
    %v2214 = vlaneseq
    %v2215 = vshrl.u32 %v2214, 7
    %v2216 = vsub.s32 0, %v2215
    %v2217 = vrot.slane %v2212, %v2216
    %v2218 = vlaneseq
    %v2219 = vshrl.u32 %v2218, 7
    %v2220 = vsub.s32 1, %v2219
    %v2221 = vrot.slane %v2212, %v2220
    %v2224 = vmul.f32 %v2166, %v2217
    %v2225 = vmul.f32 %v2168, %v2217
    %v2226 = vmul.f32 %v2170, %v2221
    %v2227 = vmul.f32 %v2172, %v2221
    %2229 = vset.pattern.permute.xlu0 0
    %2230 = vperm.xlu0 %2229, %v2224
    %v2231 = vpop.permute.xlu0 %2230
    %2234 = vset.pattern.permute.xlu0 0
    %2235 = vperm.xlu0 %2234, %v2225
    %v2236 = vpop.permute.xlu0 %2235
    %2239 = vset.pattern.permute.xlu0 0
    %2240 = vperm.xlu0 %2239, %v2226
    %v2241 = vpop.permute.xlu0 %2240
    %2244 = vset.pattern.permute.xlu0 0
    %2245 = vperm.xlu0 %2244, %v2227
    %v2246 = vpop.permute.xlu0 %2245
    %v2248 = vmul.f32 %v290, %v2231
    %v2249 = vmul.f32 %v291, %v2236
    %v2250 = vmul.f32 %v292, %v2241
    %v2251 = vmul.f32 %v293, %v2246
    %v2252 = vsel %vm294, %v2248, 0.0
    %v2253 = vsel %vm294, %v2249, 0.0
    %v2254 = vadd.f32 %v2252, %v2253
    %v2255 = vrot.slane %v2254, 4
    %v2256 = vadd.f32 %v2254, %v2255
    %v2257 = vrot.slane %v2256, 2
    %v2258 = vadd.f32 %v2256, %v2257
    %v2259 = vrot.slane %v2258, 1
    %v2260 = vadd.f32 %v2258, %v2259
    %v2261 = vsel %vm294, %v2250, 0.0
    %v2262 = vsel %vm294, %v2251, 0.0
    %v2263 = vadd.f32 %v2261, %v2262
    %v2264 = vrot.slane %v2263, 4
    %v2265 = vadd.f32 %v2263, %v2264
    %v2266 = vrot.slane %v2265, 2
    %v2267 = vadd.f32 %v2265, %v2266
    %v2268 = vrot.slane %v2267, 1
    %v2269 = vadd.f32 %v2267, %v2268
    %s2270 = scalar_lea.vmem [#allocation2], 6
    %v2271 = vld [vmem:[%s2270] sm:$0x3]
    %v2274 = vsel %vm333, %v2269, %v2260
    %2276 = vrot.lane.b32.xlu0 %v1942, 96
    %v2277 = vpop.permute.xlu0 %2276
    %v2279 = vsel %vm294, %v2274, %v2277
    %v2280 = vpack.c.bf16 %v2279, %v2279
    %v2282 = vsel %vm1021, %v2280, 0
    %2284 = vmatprep.subr.bf16.mxu0 0
    %2285 = vmatpush1.bf16.msra.mxu0 0
    %2286 = vmatprep.subr.bf16.mxu0 0
    %2287 = vmatpush1.bf16.msra.mxu0 0
    %2288 = vmatprep.subr.bf16.mxu0 0
    %2289 = vmatpush1.bf16.msra.mxu0 0
    %2290 = vmatprep.subr.bf16.mxu0 0
    %2291 = vmatpush1.bf16.msra.mxu0 0
    %2292 = vmatprep.subr.bf16.mxu0 0
    %2293 = vmatpush1.bf16.msra.mxu0 %v1016
    %2294 = vmatprep.subr.bf16.mxu0 0
    %2295 = vmatpush1.bf16.msra.mxu0 %v1015
    %2296 = vmatprep.subr.bf16.mxu0 0
    %2297 = vmatpush1.bf16.msra.mxu0 %v1014
    %2298 = vmatprep.subr.bf16.mxu0 0
    %2299 = vmatpush1.bf16.msra.mxu0 %v1013
    %2300 = vmatprep.subr.bf16.mxu0 0
    %2301 = vmatpush2.bf16.msra.mxu0 0
    %2302 = vmatprep.subr.bf16.mxu0 0
    %2303 = vmatpush2.bf16.msra.mxu0 0
    %2304 = vmatprep.subr.bf16.mxu0 0
    %2305 = vmatpush2.bf16.msra.mxu0 0
    %2306 = vmatprep.subr.bf16.mxu0 0
    %2307 = vmatpush2.bf16.msra.mxu0 0
    %2308 = vmatprep.subr.bf16.mxu0 0
    %2309 = vmatpush2.bf16.msra.mxu0 0
    %2310 = vmatprep.subr.bf16.mxu0 0
    %2311 = vmatpush2.bf16.msra.mxu0 0
    %2312 = vmatprep.subr.bf16.mxu0 0
    %2313 = vmatpush2.bf16.msra.mxu0 0
    %2314 = vmatprep.subr.bf16.mxu0 0
    %2315 = vmatpush2.bf16.msra.mxu0 0
    %2316 = vmatprep.mubr.bf16.mxu0 0
    %2317 = vmatmul.mubr.bf16.gmra.mxu0 %v2282
    %v2318 = vpop.f32.mrf.mxu0
    %v2319 = vadd.f32 0.0, %v2318
    %v2320 = vpop.f32.mrf.mxu0
    %v2321 = vpop.f32.mrf.mxu0
    %v2322 = vpop.f32.mrf.mxu0
    %2323 = vdwg.mxu0
    %v2324 = vadd.f32 %v2271, %v2319
    %v2325 = vadd.f32 %v2324, %v1070
    %v2326 = vxor.u32 %v2325, 2147483648
    %v2327 = vmul.f32 %v2326, 1.442695
    %v2328 = vpow.pop %v2327
    %v2329 = vadd.f32 %v2328, 1.0
    %v2330 = vrcp.pop %v2329
    %v2331 = vmul.f32 1.0, %v2330
    %v2332 = vtanh.pop %v2325
    %v2333 = vmul.f32 %v2331, %v1936
    %2335 = vrot.lane.b32.xlu0 %v2332, 32
    %v2336 = vpop.permute.xlu0 %2335
    %v2338 = vmul.f32 %v2331, %v2336
    %2340 = vrot.lane.b32.xlu0 %v2338, 32
    %v2341 = vpop.permute.xlu0 %2340
    %v2343 = vadd.f32 %v2333, %v2341
    %v2344 = vtanh.pop %v2343
    %2346 = vrot.lane.b32.xlu0 %v2344, 32
    %v2347 = vpop.permute.xlu0 %2346
    %v2349 = vmul.f32 %v2331, %v2347
    %2351 = vrot.lane.b32.xlu0 %v2349, 64
    %v2352 = vpop.permute.xlu0 %2351
    %2354 = vrot.lane.b32.xlu0 %v2274, 32
    %v2355 = vpop.permute.xlu0 %2354
    %v2357 = vsel %vm294, %v2352, %v2355
    %v2358 = vpack.c.bf16 %v2357, %v2357
    %v2360 = vsel %vm1021, %v2358, 0
    %2362 = vmatprep.subr.bf16.mxu0 0
    %2363 = vmatpush1.bf16.msra.mxu0 0
    %2364 = vmatprep.subr.bf16.mxu0 0
    %2365 = vmatpush1.bf16.msra.mxu0 0
    %2366 = vmatprep.subr.bf16.mxu0 0
    %2367 = vmatpush1.bf16.msra.mxu0 0
    %2368 = vmatprep.subr.bf16.mxu0 0
    %2369 = vmatpush1.bf16.msra.mxu0 0
    %2370 = vmatprep.subr.bf16.mxu0 0
    %2371 = vmatpush1.bf16.msra.mxu0 %v1135
    %2372 = vmatprep.subr.bf16.mxu0 0
    %2373 = vmatpush1.bf16.msra.mxu0 %v1134
    %2374 = vmatprep.subr.bf16.mxu0 0
    %2375 = vmatpush1.bf16.msra.mxu0 %v1133
    %2376 = vmatprep.subr.bf16.mxu0 0
    %2377 = vmatpush1.bf16.msra.mxu0 %v1132
    %2378 = vmatprep.subr.bf16.mxu0 0
    %2379 = vmatpush2.bf16.msra.mxu0 0
    %2380 = vmatprep.subr.bf16.mxu0 0
    %2381 = vmatpush2.bf16.msra.mxu0 0
    %2382 = vmatprep.subr.bf16.mxu0 0
    %2383 = vmatpush2.bf16.msra.mxu0 0
    %2384 = vmatprep.subr.bf16.mxu0 0
    %2385 = vmatpush2.bf16.msra.mxu0 0
    %2386 = vmatprep.subr.bf16.mxu0 0
    %2387 = vmatpush2.bf16.msra.mxu0 0
    %2388 = vmatprep.subr.bf16.mxu0 0
    %2389 = vmatpush2.bf16.msra.mxu0 0
    %2390 = vmatprep.subr.bf16.mxu0 0
    %2391 = vmatpush2.bf16.msra.mxu0 0
    %2392 = vmatprep.subr.bf16.mxu0 0
    %2393 = vmatpush2.bf16.msra.mxu0 0
    %2394 = vmatprep.mubr.bf16.mxu0 0
    %2395 = vmatmul.mubr.bf16.gmra.mxu0 %v2360
    %v2396 = vpop.f32.mrf.mxu0
    %v2397 = vadd.f32 %v1114, %v2396
    %v2398 = vpop.f32.mrf.mxu0
    %v2399 = vpop.f32.mrf.mxu0
    %v2400 = vpop.f32.mrf.mxu0
    %2401 = vdwg.mxu0
    %s2402 = scalar_lea.vmem [#allocation23], 6
    %2403 = vst [vmem:[%s2402] sm:$0x3] %v2397
    %v2404 = vlaneseq
    %v2405 = vshrl.u32 %v2404, 7
    %v2406 = vsub.s32 %v839, %v2405
    %v2407 = vrot.slane %v2231, %v2406
    %v2408 = vlaneseq
    %v2409 = vshrl.u32 %v2408, 7
    %v2410 = vsub.s32 %v844, %v2409
    %v2411 = vrot.slane %v2236, %v2410
    %v2412 = vsel %vm849, %v2411, %v2407
    %v2413 = vlaneseq
    %v2414 = vshrl.u32 %v2413, 7
    %v2415 = vsub.s32 %v839, %v2414
    %v2416 = vrot.slane %v2241, %v2415
    %v2417 = vlaneseq
    %v2418 = vshrl.u32 %v2417, 7
    %v2419 = vsub.s32 %v844, %v2418
    %v2420 = vrot.slane %v2246, %v2419
    %v2421 = vsel %vm849, %v2420, %v2416
    %v2422 = vsel %vm333, %v2421, %v2412
    %s2424 = scalar_lea.vmem [#allocation24], 6
    %2425 = vst.msk [vmem:[%s2424] sm:$0x3] %vm862, %v2422
    %v2426 = vpack.c.bf16 %v2349, %v2349
    %2428 = vrot.lane.b32.xlu0 %v2426, 64
    %v2429 = vpop.permute.xlu0 %2428
    %v2431 = vsel %vm294, %v2429, 0
    %2433 = vmatprep.subr.bf16.mxu0 0
    %2434 = vmatpush1.bf16.msra.mxu0 0
    %2435 = vmatprep.subr.bf16.mxu0 0
    %2436 = vmatpush1.bf16.msra.mxu0 0
    %2437 = vmatprep.subr.bf16.mxu0 0
    %2438 = vmatpush1.bf16.msra.mxu0 0
    %2439 = vmatprep.subr.bf16.mxu0 0
    %2440 = vmatpush1.bf16.msra.mxu0 0
    %2441 = vmatprep.subr.bf16.mxu0 0
    %2442 = vmatpush1.bf16.msra.mxu0 0
    %2443 = vmatprep.subr.bf16.mxu0 0
    %2444 = vmatpush1.bf16.msra.mxu0 0
    %2445 = vmatprep.subr.bf16.mxu0 0
    %2446 = vmatpush1.bf16.msra.mxu0 %v725
    %2447 = vmatprep.subr.bf16.mxu0 0
    %2448 = vmatpush1.bf16.msra.mxu0 %v724
    %2449 = vmatprep.subr.bf16.mxu0 0
    %2450 = vmatpush2.bf16.msra.mxu0 0
    %2451 = vmatprep.subr.bf16.mxu0 0
    %2452 = vmatpush2.bf16.msra.mxu0 0
    %2453 = vmatprep.subr.bf16.mxu0 0
    %2454 = vmatpush2.bf16.msra.mxu0 0
    %2455 = vmatprep.subr.bf16.mxu0 0
    %2456 = vmatpush2.bf16.msra.mxu0 0
    %2457 = vmatprep.subr.bf16.mxu0 0
    %2458 = vmatpush2.bf16.msra.mxu0 0
    %2459 = vmatprep.subr.bf16.mxu0 0
    %2460 = vmatpush2.bf16.msra.mxu0 0
    %2461 = vmatprep.subr.bf16.mxu0 0
    %2462 = vmatpush2.bf16.msra.mxu0 0
    %2463 = vmatprep.subr.bf16.mxu0 0
    %2464 = vmatpush2.bf16.msra.mxu0 0
    %2465 = vmatprep.mubr.bf16.mxu0 0
    %2466 = vmatmul.mubr.bf16.gmra.mxu0 %v2431
    %v2467 = vpop.f32.mrf.mxu0
    %v2468 = vadd.f32 %v714, %v2467
    %v2469 = vpop.f32.mrf.mxu0
    %v2470 = vpop.f32.mrf.mxu0
    %v2471 = vpop.f32.mrf.mxu0
    %2472 = vdwg.mxu0
    %v2475 = vunpack.c.l.s4 1966171168
    %v2476 = vunpack.c.0.s8 %v2475
    %v2477 = vlaneseq
    %v2478 = vshrl.u32 %v2477, 7
    %v2479 = vsub.s32 %v2476, %v2478
    %v2480 = vrot.slane %v2468, %v2479
    %v2481 = vcombine.high %v2480, %v2480
    %v2483 = vunpack.c.l.s4 1966171168
    %v2484 = vunpack.c.0.s8 %v2483
    %v2485 = vlaneseq
    %v2486 = vshrl.u32 %v2485, 7
    %v2487 = vsub.s32 %v2484, %v2486
    %v2488 = vrot.slane %v2480, %v2487
    %v2490 = vunpack.c.l.s4 1966171168
    %v2491 = vunpack.c.0.s8 %v2490
    %v2492 = vlaneseq
    %v2493 = vshrl.u32 %v2492, 7
    %v2494 = vsub.s32 %v2491, %v2493
    %v2495 = vrot.slane %v2481, %v2494
    %v2496 = vlaneseq
    %v2497 = vshrl.u32 %v2496, 7
    %v2498 = vsub.s32 0, %v2497
    %v2499 = vrot.slane %v2488, %v2498
    %v2500 = vlaneseq
    %v2501 = vshrl.u32 %v2500, 7
    %v2502 = vsub.s32 0, %v2501
    %v2503 = vrot.slane %v2495, %v2502
    %v2506 = vadd.f32 %v520, %v2499
    %v2507 = vadd.f32 %v523, %v2499
    %v2508 = vadd.f32 %v528, %v2503
    %v2509 = vadd.f32 %v531, %v2503
    %v2510 = vmax.f32 %v2506, 0.0
    %v2511 = vmax.f32 %v2507, 0.0
    %v2512 = vmax.f32 %v2508, 0.0
    %v2513 = vmax.f32 %v2509, 0.0
    %v2514 = vmul.f32 %v2510, %v816
    %v2515 = vmul.f32 %v2511, %v816
    %v2516 = vmul.f32 %v2512, %v816
    %v2517 = vmul.f32 %v2513, %v816
    %v2518 = vsel %vm294, %v2514, 0.0
    %2519 = vadd.xlane.f32.xlu0 %v2518
    %v2520 = vpop.xlane.xlu0 %2519
    %v2521 = vsel %vm294, %v2515, 0.0
    %2522 = vadd.xlane.f32.xlu0 %v2521
    %v2523 = vpop.xlane.xlu0 %2522
    %v2524 = vsel %vm294, %v2516, 0.0
    %2525 = vadd.xlane.f32.xlu0 %v2524
    %v2526 = vpop.xlane.xlu0 %2525
    %v2527 = vsel %vm294, %v2517, 0.0
    %2528 = vadd.xlane.f32.xlu0 %v2527
    %v2529 = vpop.xlane.xlu0 %2528
    %v2534 = vlaneseq
    %v2535 = vshrl.u32 %v2534, 7
    %v2536 = vsub.s32 %v839, %v2535
    %v2537 = vrot.slane %v2520, %v2536
    %v2538 = vlaneseq
    %v2539 = vshrl.u32 %v2538, 7
    %v2540 = vsub.s32 %v844, %v2539
    %v2541 = vrot.slane %v2523, %v2540
    %v2542 = vsel %vm849, %v2541, %v2537
    %v2543 = vlaneseq
    %v2544 = vshrl.u32 %v2543, 7
    %v2545 = vsub.s32 %v839, %v2544
    %v2546 = vrot.slane %v2526, %v2545
    %v2547 = vlaneseq
    %v2548 = vshrl.u32 %v2547, 7
    %v2549 = vsub.s32 %v844, %v2548
    %v2550 = vrot.slane %v2529, %v2549
    %v2551 = vsel %vm849, %v2550, %v2546
    %v2552 = vsel %vm333, %v2551, %v2542
    %v2554 = vsel %vm862, %v2552, -inf
    %2555 = vmax.xlane.f32.xlu0 %v2554
    %v2556 = vpop.xlane.xlu0 %2555
    %v2558 = vlaneseq
    %v2559 = vshrl.u32 %v2558, 7
    %v2560 = vsub.s32 0, %v2559
    %v2561 = vrot.slane %v2556, %v2560
    %v2562 = vlaneseq
    %v2563 = vshrl.u32 %v2562, 7
    %v2564 = vsub.s32 1, %v2563
    %v2565 = vrot.slane %v2556, %v2564
    %v2568 = vsub.f32 %v2520, %v2561
    %v2569 = vsub.f32 %v2523, %v2561
    %v2570 = vsub.f32 %v2526, %v2565
    %v2571 = vsub.f32 %v2529, %v2565
    %v2572 = vmul.f32 %v2568, 1.442695
    %v2573 = vpow.pop %v2572
    %v2574 = vmul.f32 %v2569, 1.442695
    %v2575 = vpow.pop %v2574
    %v2576 = vmul.f32 %v2570, 1.442695
    %v2577 = vpow.pop %v2576
    %v2578 = vmul.f32 %v2571, 1.442695
    %v2579 = vpow.pop %v2578
    %2584 = vset.pattern.permute.xlu0 0
    %2585 = vperm.xlu0 %2584, %v2573
    %v2586 = vpop.permute.xlu0 %2585
    %2587 = vset.pattern.permute.xlu0 0
    %2588 = vperm.xlu0 %2587, %v2575
    %v2589 = vpop.permute.xlu0 %2588
    %2590 = vset.pattern.permute.xlu0 0
    %2591 = vperm.xlu0 %2590, %v2577
    %v2592 = vpop.permute.xlu0 %2591
    %2593 = vset.pattern.permute.xlu0 0
    %2594 = vperm.xlu0 %2593, %v2579
    %v2595 = vpop.permute.xlu0 %2594
    %v2596 = vlaneseq
    %v2597 = vshrl.u32 %v2596, 7
    %v2598 = vsub.s32 %v839, %v2597
    %v2599 = vrot.slane %v2586, %v2598
    %v2600 = vlaneseq
    %v2601 = vshrl.u32 %v2600, 7
    %v2602 = vsub.s32 %v844, %v2601
    %v2603 = vrot.slane %v2589, %v2602
    %v2604 = vsel %vm849, %v2603, %v2599
    %v2605 = vlaneseq
    %v2606 = vshrl.u32 %v2605, 7
    %v2607 = vsub.s32 %v839, %v2606
    %v2608 = vrot.slane %v2592, %v2607
    %v2609 = vlaneseq
    %v2610 = vshrl.u32 %v2609, 7
    %v2611 = vsub.s32 %v844, %v2610
    %v2612 = vrot.slane %v2595, %v2611
    %v2613 = vsel %vm849, %v2612, %v2608
    %v2614 = vsel %vm333, %v2613, %v2604
    %v2616 = vsel %vm862, %v2614, 0.0
    %2617 = vadd.xlane.f32.xlu0 %v2616
    %v2618 = vpop.xlane.xlu0 %2617
    %v2619 = vrcp.pop %v2618
    %v2621 = vlaneseq
    %v2622 = vshrl.u32 %v2621, 7
    %v2623 = vsub.s32 0, %v2622
    %v2624 = vrot.slane %v2619, %v2623
    %v2625 = vlaneseq
    %v2626 = vshrl.u32 %v2625, 7
    %v2627 = vsub.s32 1, %v2626
    %v2628 = vrot.slane %v2619, %v2627
    %v2631 = vmul.f32 %v2573, %v2624
    %v2632 = vmul.f32 %v2575, %v2624
    %v2633 = vmul.f32 %v2577, %v2628
    %v2634 = vmul.f32 %v2579, %v2628
    %2636 = vset.pattern.permute.xlu0 0
    %2637 = vperm.xlu0 %2636, %v2631
    %v2638 = vpop.permute.xlu0 %2637
    %2641 = vset.pattern.permute.xlu0 0
    %2642 = vperm.xlu0 %2641, %v2632
    %v2643 = vpop.permute.xlu0 %2642
    %2646 = vset.pattern.permute.xlu0 0
    %2647 = vperm.xlu0 %2646, %v2633
    %v2648 = vpop.permute.xlu0 %2647
    %2651 = vset.pattern.permute.xlu0 0
    %2652 = vperm.xlu0 %2651, %v2634
    %v2653 = vpop.permute.xlu0 %2652
    %v2655 = vmul.f32 %v290, %v2638
    %v2656 = vmul.f32 %v291, %v2643
    %v2657 = vmul.f32 %v292, %v2648
    %v2658 = vmul.f32 %v293, %v2653
    %v2659 = vsel %vm294, %v2655, 0.0
    %v2660 = vsel %vm294, %v2656, 0.0
    %v2661 = vadd.f32 %v2659, %v2660
    %v2662 = vrot.slane %v2661, 4
    %v2663 = vadd.f32 %v2661, %v2662
    %v2664 = vrot.slane %v2663, 2
    %v2665 = vadd.f32 %v2663, %v2664
    %v2666 = vrot.slane %v2665, 1
    %v2667 = vadd.f32 %v2665, %v2666
    %v2668 = vsel %vm294, %v2657, 0.0
    %v2669 = vsel %vm294, %v2658, 0.0
    %v2670 = vadd.f32 %v2668, %v2669
    %v2671 = vrot.slane %v2670, 4
    %v2672 = vadd.f32 %v2670, %v2671
    %v2673 = vrot.slane %v2672, 2
    %v2674 = vadd.f32 %v2672, %v2673
    %v2675 = vrot.slane %v2674, 1
    %v2676 = vadd.f32 %v2674, %v2675
    %s2677 = scalar_lea.vmem [#allocation2], 8
    %v2678 = vld [vmem:[%s2677] sm:$0x3]
    %v2681 = vsel %vm333, %v2676, %v2667
    %2683 = vrot.lane.b32.xlu0 %v2349, 96
    %v2684 = vpop.permute.xlu0 %2683
    %v2686 = vsel %vm294, %v2681, %v2684
    %v2687 = vpack.c.bf16 %v2686, %v2686
    %v2689 = vsel %vm1021, %v2687, 0
    %2691 = vmatprep.subr.bf16.mxu0 0
    %2692 = vmatpush1.bf16.msra.mxu0 0
    %2693 = vmatprep.subr.bf16.mxu0 0
    %2694 = vmatpush1.bf16.msra.mxu0 0
    %2695 = vmatprep.subr.bf16.mxu0 0
    %2696 = vmatpush1.bf16.msra.mxu0 0
    %2697 = vmatprep.subr.bf16.mxu0 0
    %2698 = vmatpush1.bf16.msra.mxu0 0
    %2699 = vmatprep.subr.bf16.mxu0 0
    %2700 = vmatpush1.bf16.msra.mxu0 %v1016
    %2701 = vmatprep.subr.bf16.mxu0 0
    %2702 = vmatpush1.bf16.msra.mxu0 %v1015
    %2703 = vmatprep.subr.bf16.mxu0 0
    %2704 = vmatpush1.bf16.msra.mxu0 %v1014
    %2705 = vmatprep.subr.bf16.mxu0 0
    %2706 = vmatpush1.bf16.msra.mxu0 %v1013
    %2707 = vmatprep.subr.bf16.mxu0 0
    %2708 = vmatpush2.bf16.msra.mxu0 0
    %2709 = vmatprep.subr.bf16.mxu0 0
    %2710 = vmatpush2.bf16.msra.mxu0 0
    %2711 = vmatprep.subr.bf16.mxu0 0
    %2712 = vmatpush2.bf16.msra.mxu0 0
    %2713 = vmatprep.subr.bf16.mxu0 0
    %2714 = vmatpush2.bf16.msra.mxu0 0
    %2715 = vmatprep.subr.bf16.mxu0 0
    %2716 = vmatpush2.bf16.msra.mxu0 0
    %2717 = vmatprep.subr.bf16.mxu0 0
    %2718 = vmatpush2.bf16.msra.mxu0 0
    %2719 = vmatprep.subr.bf16.mxu0 0
    %2720 = vmatpush2.bf16.msra.mxu0 0
    %2721 = vmatprep.subr.bf16.mxu0 0
    %2722 = vmatpush2.bf16.msra.mxu0 0
    %2723 = vmatprep.mubr.bf16.mxu0 0
    %2724 = vmatmul.mubr.bf16.gmra.mxu0 %v2689
    %v2725 = vpop.f32.mrf.mxu0
    %v2726 = vadd.f32 0.0, %v2725
    %v2727 = vpop.f32.mrf.mxu0
    %v2728 = vpop.f32.mrf.mxu0
    %v2729 = vpop.f32.mrf.mxu0
    %2730 = vdwg.mxu0
    %v2731 = vadd.f32 %v2678, %v2726
    %v2732 = vadd.f32 %v2731, %v1070
    %v2733 = vxor.u32 %v2732, 2147483648
    %v2734 = vmul.f32 %v2733, 1.442695
    %v2735 = vpow.pop %v2734
    %v2736 = vadd.f32 %v2735, 1.0
    %v2737 = vrcp.pop %v2736
    %v2738 = vmul.f32 1.0, %v2737
    %v2739 = vtanh.pop %v2732
    %v2740 = vmul.f32 %v2738, %v2343
    %2742 = vrot.lane.b32.xlu0 %v2739, 32
    %v2743 = vpop.permute.xlu0 %2742
    %v2745 = vmul.f32 %v2738, %v2743
    %2747 = vrot.lane.b32.xlu0 %v2745, 32
    %v2748 = vpop.permute.xlu0 %2747
    %v2750 = vadd.f32 %v2740, %v2748
    %v2751 = vtanh.pop %v2750
    %2753 = vrot.lane.b32.xlu0 %v2751, 32
    %v2754 = vpop.permute.xlu0 %2753
    %v2756 = vmul.f32 %v2738, %v2754
    %2758 = vrot.lane.b32.xlu0 %v2756, 64
    %v2759 = vpop.permute.xlu0 %2758
    %2761 = vrot.lane.b32.xlu0 %v2681, 32
    %v2762 = vpop.permute.xlu0 %2761
    %v2764 = vsel %vm294, %v2759, %v2762
    %v2765 = vpack.c.bf16 %v2764, %v2764
    %v2767 = vsel %vm1021, %v2765, 0
    %2769 = vmatprep.subr.bf16.mxu0 0
    %2770 = vmatpush1.bf16.msra.mxu0 0
    %2771 = vmatprep.subr.bf16.mxu0 0
    %2772 = vmatpush1.bf16.msra.mxu0 0
    %2773 = vmatprep.subr.bf16.mxu0 0
    %2774 = vmatpush1.bf16.msra.mxu0 0
    %2775 = vmatprep.subr.bf16.mxu0 0
    %2776 = vmatpush1.bf16.msra.mxu0 0
    %2777 = vmatprep.subr.bf16.mxu0 0
    %2778 = vmatpush1.bf16.msra.mxu0 %v1135
    %2779 = vmatprep.subr.bf16.mxu0 0
    %2780 = vmatpush1.bf16.msra.mxu0 %v1134
    %2781 = vmatprep.subr.bf16.mxu0 0
    %2782 = vmatpush1.bf16.msra.mxu0 %v1133
    %2783 = vmatprep.subr.bf16.mxu0 0
    %2784 = vmatpush1.bf16.msra.mxu0 %v1132
    %2785 = vmatprep.subr.bf16.mxu0 0
    %2786 = vmatpush2.bf16.msra.mxu0 0
    %2787 = vmatprep.subr.bf16.mxu0 0
    %2788 = vmatpush2.bf16.msra.mxu0 0
    %2789 = vmatprep.subr.bf16.mxu0 0
    %2790 = vmatpush2.bf16.msra.mxu0 0
    %2791 = vmatprep.subr.bf16.mxu0 0
    %2792 = vmatpush2.bf16.msra.mxu0 0
    %2793 = vmatprep.subr.bf16.mxu0 0
    %2794 = vmatpush2.bf16.msra.mxu0 0
    %2795 = vmatprep.subr.bf16.mxu0 0
    %2796 = vmatpush2.bf16.msra.mxu0 0
    %2797 = vmatprep.subr.bf16.mxu0 0
    %2798 = vmatpush2.bf16.msra.mxu0 0
    %2799 = vmatprep.subr.bf16.mxu0 0
    %2800 = vmatpush2.bf16.msra.mxu0 0
    %2801 = vmatprep.mubr.bf16.mxu0 0
    %2802 = vmatmul.mubr.bf16.gmra.mxu0 %v2767
    %v2803 = vpop.f32.mrf.mxu0
    %v2804 = vadd.f32 %v1114, %v2803
    %v2805 = vpop.f32.mrf.mxu0
    %v2806 = vpop.f32.mrf.mxu0
    %v2807 = vpop.f32.mrf.mxu0
    %2808 = vdwg.mxu0
    %s2809 = scalar_lea.vmem [#allocation23], 8
    %2810 = vst [vmem:[%s2809] sm:$0x3] %v2804
    %v2811 = vlaneseq
    %v2812 = vshrl.u32 %v2811, 7
    %v2813 = vsub.s32 %v839, %v2812
    %v2814 = vrot.slane %v2638, %v2813
    %v2815 = vlaneseq
    %v2816 = vshrl.u32 %v2815, 7
    %v2817 = vsub.s32 %v844, %v2816
    %v2818 = vrot.slane %v2643, %v2817
    %v2819 = vsel %vm849, %v2818, %v2814
    %v2820 = vlaneseq
    %v2821 = vshrl.u32 %v2820, 7
    %v2822 = vsub.s32 %v839, %v2821
    %v2823 = vrot.slane %v2648, %v2822
    %v2824 = vlaneseq
    %v2825 = vshrl.u32 %v2824, 7
    %v2826 = vsub.s32 %v844, %v2825
    %v2827 = vrot.slane %v2653, %v2826
    %v2828 = vsel %vm849, %v2827, %v2823
    %v2829 = vsel %vm333, %v2828, %v2819
    %s2831 = scalar_lea.vmem [#allocation24], 8
    %2832 = vst.msk [vmem:[%s2831] sm:$0x3] %vm862, %v2829
    %v2833 = vpack.c.bf16 %v2756, %v2756
    %2835 = vrot.lane.b32.xlu0 %v2833, 64
    %v2836 = vpop.permute.xlu0 %2835
    %v2838 = vsel %vm294, %v2836, 0
    %2840 = vmatprep.subr.bf16.mxu0 0
    %2841 = vmatpush1.bf16.msra.mxu0 0
    %2842 = vmatprep.subr.bf16.mxu0 0
    %2843 = vmatpush1.bf16.msra.mxu0 0
    %2844 = vmatprep.subr.bf16.mxu0 0
    %2845 = vmatpush1.bf16.msra.mxu0 0
    %2846 = vmatprep.subr.bf16.mxu0 0
    %2847 = vmatpush1.bf16.msra.mxu0 0
    %2848 = vmatprep.subr.bf16.mxu0 0
    %2849 = vmatpush1.bf16.msra.mxu0 0
    %2850 = vmatprep.subr.bf16.mxu0 0
    %2851 = vmatpush1.bf16.msra.mxu0 0
    %2852 = vmatprep.subr.bf16.mxu0 0
    %2853 = vmatpush1.bf16.msra.mxu0 %v725
    %2854 = vmatprep.subr.bf16.mxu0 0
    %2855 = vmatpush1.bf16.msra.mxu0 %v724
    %2856 = vmatprep.subr.bf16.mxu0 0
    %2857 = vmatpush2.bf16.msra.mxu0 0
    %2858 = vmatprep.subr.bf16.mxu0 0
    %2859 = vmatpush2.bf16.msra.mxu0 0
    %2860 = vmatprep.subr.bf16.mxu0 0
    %2861 = vmatpush2.bf16.msra.mxu0 0
    %2862 = vmatprep.subr.bf16.mxu0 0
    %2863 = vmatpush2.bf16.msra.mxu0 0
    %2864 = vmatprep.subr.bf16.mxu0 0
    %2865 = vmatpush2.bf16.msra.mxu0 0
    %2866 = vmatprep.subr.bf16.mxu0 0
    %2867 = vmatpush2.bf16.msra.mxu0 0
    %2868 = vmatprep.subr.bf16.mxu0 0
    %2869 = vmatpush2.bf16.msra.mxu0 0
    %2870 = vmatprep.subr.bf16.mxu0 0
    %2871 = vmatpush2.bf16.msra.mxu0 0
    %2872 = vmatprep.mubr.bf16.mxu0 0
    %2873 = vmatmul.mubr.bf16.gmra.mxu0 %v2838
    %v2874 = vpop.f32.mrf.mxu0
    %v2875 = vadd.f32 %v714, %v2874
    %v2876 = vpop.f32.mrf.mxu0
    %v2877 = vpop.f32.mrf.mxu0
    %v2878 = vpop.f32.mrf.mxu0
    %2879 = vdwg.mxu0
    %v2882 = vunpack.c.l.s4 1966171168
    %v2883 = vunpack.c.0.s8 %v2882
    %v2884 = vlaneseq
    %v2885 = vshrl.u32 %v2884, 7
    %v2886 = vsub.s32 %v2883, %v2885
    %v2887 = vrot.slane %v2875, %v2886
    %v2888 = vcombine.high %v2887, %v2887
    %v2890 = vunpack.c.l.s4 1966171168
    %v2891 = vunpack.c.0.s8 %v2890
    %v2892 = vlaneseq
    %v2893 = vshrl.u32 %v2892, 7
    %v2894 = vsub.s32 %v2891, %v2893
    %v2895 = vrot.slane %v2887, %v2894
    %v2897 = vunpack.c.l.s4 1966171168
    %v2898 = vunpack.c.0.s8 %v2897
    %v2899 = vlaneseq
    %v2900 = vshrl.u32 %v2899, 7
    %v2901 = vsub.s32 %v2898, %v2900
    %v2902 = vrot.slane %v2888, %v2901
    %v2903 = vlaneseq
    %v2904 = vshrl.u32 %v2903, 7
    %v2905 = vsub.s32 0, %v2904
    %v2906 = vrot.slane %v2895, %v2905
    %v2907 = vlaneseq
    %v2908 = vshrl.u32 %v2907, 7
    %v2909 = vsub.s32 0, %v2908
    %v2910 = vrot.slane %v2902, %v2909
    %v2913 = vadd.f32 %v520, %v2906
    %v2914 = vadd.f32 %v523, %v2906
    %v2915 = vadd.f32 %v528, %v2910
    %v2916 = vadd.f32 %v531, %v2910
    %v2917 = vmax.f32 %v2913, 0.0
    %v2918 = vmax.f32 %v2914, 0.0
    %v2919 = vmax.f32 %v2915, 0.0
    %v2920 = vmax.f32 %v2916, 0.0
    %v2921 = vmul.f32 %v2917, %v816
    %v2922 = vmul.f32 %v2918, %v816
    %v2923 = vmul.f32 %v2919, %v816
    %v2924 = vmul.f32 %v2920, %v816
    %v2925 = vsel %vm294, %v2921, 0.0
    %2926 = vadd.xlane.f32.xlu0 %v2925
    %v2927 = vpop.xlane.xlu0 %2926
    %v2928 = vsel %vm294, %v2922, 0.0
    %2929 = vadd.xlane.f32.xlu0 %v2928
    %v2930 = vpop.xlane.xlu0 %2929
    %v2931 = vsel %vm294, %v2923, 0.0
    %2932 = vadd.xlane.f32.xlu0 %v2931
    %v2933 = vpop.xlane.xlu0 %2932
    %v2934 = vsel %vm294, %v2924, 0.0
    %2935 = vadd.xlane.f32.xlu0 %v2934
    %v2936 = vpop.xlane.xlu0 %2935
    %v2941 = vlaneseq
    %v2942 = vshrl.u32 %v2941, 7
    %v2943 = vsub.s32 %v839, %v2942
    %v2944 = vrot.slane %v2927, %v2943
    %v2945 = vlaneseq
    %v2946 = vshrl.u32 %v2945, 7
    %v2947 = vsub.s32 %v844, %v2946
    %v2948 = vrot.slane %v2930, %v2947
    %v2949 = vsel %vm849, %v2948, %v2944
    %v2950 = vlaneseq
    %v2951 = vshrl.u32 %v2950, 7
    %v2952 = vsub.s32 %v839, %v2951
    %v2953 = vrot.slane %v2933, %v2952
    %v2954 = vlaneseq
    %v2955 = vshrl.u32 %v2954, 7
    %v2956 = vsub.s32 %v844, %v2955
    %v2957 = vrot.slane %v2936, %v2956
    %v2958 = vsel %vm849, %v2957, %v2953
    %v2959 = vsel %vm333, %v2958, %v2949
    %v2961 = vsel %vm862, %v2959, -inf
    %2962 = vmax.xlane.f32.xlu0 %v2961
    %v2963 = vpop.xlane.xlu0 %2962
    %v2965 = vlaneseq
    %v2966 = vshrl.u32 %v2965, 7
    %v2967 = vsub.s32 0, %v2966
    %v2968 = vrot.slane %v2963, %v2967
    %v2969 = vlaneseq
    %v2970 = vshrl.u32 %v2969, 7
    %v2971 = vsub.s32 1, %v2970
    %v2972 = vrot.slane %v2963, %v2971
    %v2975 = vsub.f32 %v2927, %v2968
    %v2976 = vsub.f32 %v2930, %v2968
    %v2977 = vsub.f32 %v2933, %v2972
    %v2978 = vsub.f32 %v2936, %v2972
    %v2979 = vmul.f32 %v2975, 1.442695
    %v2980 = vpow.pop %v2979
    %v2981 = vmul.f32 %v2976, 1.442695
    %v2982 = vpow.pop %v2981
    %v2983 = vmul.f32 %v2977, 1.442695
    %v2984 = vpow.pop %v2983
    %v2985 = vmul.f32 %v2978, 1.442695
    %v2986 = vpow.pop %v2985
    %2991 = vset.pattern.permute.xlu0 0
    %2992 = vperm.xlu0 %2991, %v2980
    %v2993 = vpop.permute.xlu0 %2992
    %2994 = vset.pattern.permute.xlu0 0
    %2995 = vperm.xlu0 %2994, %v2982
    %v2996 = vpop.permute.xlu0 %2995
    %2997 = vset.pattern.permute.xlu0 0
    %2998 = vperm.xlu0 %2997, %v2984
    %v2999 = vpop.permute.xlu0 %2998
    %3000 = vset.pattern.permute.xlu0 0
    %3001 = vperm.xlu0 %3000, %v2986
    %v3002 = vpop.permute.xlu0 %3001
    %v3003 = vlaneseq
    %v3004 = vshrl.u32 %v3003, 7
    %v3005 = vsub.s32 %v839, %v3004
    %v3006 = vrot.slane %v2993, %v3005
    %v3007 = vlaneseq
    %v3008 = vshrl.u32 %v3007, 7
    %v3009 = vsub.s32 %v844, %v3008
    %v3010 = vrot.slane %v2996, %v3009
    %v3011 = vsel %vm849, %v3010, %v3006
    %v3012 = vlaneseq
    %v3013 = vshrl.u32 %v3012, 7
    %v3014 = vsub.s32 %v839, %v3013
    %v3015 = vrot.slane %v2999, %v3014
    %v3016 = vlaneseq
    %v3017 = vshrl.u32 %v3016, 7
    %v3018 = vsub.s32 %v844, %v3017
    %v3019 = vrot.slane %v3002, %v3018
    %v3020 = vsel %vm849, %v3019, %v3015
    %v3021 = vsel %vm333, %v3020, %v3011
    %v3023 = vsel %vm862, %v3021, 0.0
    %3024 = vadd.xlane.f32.xlu0 %v3023
    %v3025 = vpop.xlane.xlu0 %3024
    %v3026 = vrcp.pop %v3025
    %v3028 = vlaneseq
    %v3029 = vshrl.u32 %v3028, 7
    %v3030 = vsub.s32 0, %v3029
    %v3031 = vrot.slane %v3026, %v3030
    %v3032 = vlaneseq
    %v3033 = vshrl.u32 %v3032, 7
    %v3034 = vsub.s32 1, %v3033
    %v3035 = vrot.slane %v3026, %v3034
    %v3038 = vmul.f32 %v2980, %v3031
    %v3039 = vmul.f32 %v2982, %v3031
    %v3040 = vmul.f32 %v2984, %v3035
    %v3041 = vmul.f32 %v2986, %v3035
    %3043 = vset.pattern.permute.xlu0 0
    %3044 = vperm.xlu0 %3043, %v3038
    %v3045 = vpop.permute.xlu0 %3044
    %3048 = vset.pattern.permute.xlu0 0
    %3049 = vperm.xlu0 %3048, %v3039
    %v3050 = vpop.permute.xlu0 %3049
    %3053 = vset.pattern.permute.xlu0 0
    %3054 = vperm.xlu0 %3053, %v3040
    %v3055 = vpop.permute.xlu0 %3054
    %3058 = vset.pattern.permute.xlu0 0
    %3059 = vperm.xlu0 %3058, %v3041
    %v3060 = vpop.permute.xlu0 %3059
    %v3062 = vmul.f32 %v290, %v3045
    %v3063 = vmul.f32 %v291, %v3050
    %v3064 = vmul.f32 %v292, %v3055
    %v3065 = vmul.f32 %v293, %v3060
    %v3066 = vsel %vm294, %v3062, 0.0
    %v3067 = vsel %vm294, %v3063, 0.0
    %v3068 = vadd.f32 %v3066, %v3067
    %v3069 = vrot.slane %v3068, 4
    %v3070 = vadd.f32 %v3068, %v3069
    %v3071 = vrot.slane %v3070, 2
    %v3072 = vadd.f32 %v3070, %v3071
    %v3073 = vrot.slane %v3072, 1
    %v3074 = vadd.f32 %v3072, %v3073
    %v3075 = vsel %vm294, %v3064, 0.0
    %v3076 = vsel %vm294, %v3065, 0.0
    %v3077 = vadd.f32 %v3075, %v3076
    %v3078 = vrot.slane %v3077, 4
    %v3079 = vadd.f32 %v3077, %v3078
    %v3080 = vrot.slane %v3079, 2
    %v3081 = vadd.f32 %v3079, %v3080
    %v3082 = vrot.slane %v3081, 1
    %v3083 = vadd.f32 %v3081, %v3082
    %s3084 = scalar_lea.vmem [#allocation2], 10
    %v3085 = vld [vmem:[%s3084] sm:$0x3]
    %v3088 = vsel %vm333, %v3083, %v3074
    %3090 = vrot.lane.b32.xlu0 %v2756, 96
    %v3091 = vpop.permute.xlu0 %3090
    %v3093 = vsel %vm294, %v3088, %v3091
    %v3094 = vpack.c.bf16 %v3093, %v3093
    %v3096 = vsel %vm1021, %v3094, 0
    %3098 = vmatprep.subr.bf16.mxu0 0
    %3099 = vmatpush1.bf16.msra.mxu0 0
    %3100 = vmatprep.subr.bf16.mxu0 0
    %3101 = vmatpush1.bf16.msra.mxu0 0
    %3102 = vmatprep.subr.bf16.mxu0 0
    %3103 = vmatpush1.bf16.msra.mxu0 0
    %3104 = vmatprep.subr.bf16.mxu0 0
    %3105 = vmatpush1.bf16.msra.mxu0 0
    %3106 = vmatprep.subr.bf16.mxu0 0
    %3107 = vmatpush1.bf16.msra.mxu0 %v1016
    %3108 = vmatprep.subr.bf16.mxu0 0
    %3109 = vmatpush1.bf16.msra.mxu0 %v1015
    %3110 = vmatprep.subr.bf16.mxu0 0
    %3111 = vmatpush1.bf16.msra.mxu0 %v1014
    %3112 = vmatprep.subr.bf16.mxu0 0
    %3113 = vmatpush1.bf16.msra.mxu0 %v1013
    %3114 = vmatprep.subr.bf16.mxu0 0
    %3115 = vmatpush2.bf16.msra.mxu0 0
    %3116 = vmatprep.subr.bf16.mxu0 0
    %3117 = vmatpush2.bf16.msra.mxu0 0
    %3118 = vmatprep.subr.bf16.mxu0 0
    %3119 = vmatpush2.bf16.msra.mxu0 0
    %3120 = vmatprep.subr.bf16.mxu0 0
    %3121 = vmatpush2.bf16.msra.mxu0 0
    %3122 = vmatprep.subr.bf16.mxu0 0
    %3123 = vmatpush2.bf16.msra.mxu0 0
    %3124 = vmatprep.subr.bf16.mxu0 0
    %3125 = vmatpush2.bf16.msra.mxu0 0
    %3126 = vmatprep.subr.bf16.mxu0 0
    %3127 = vmatpush2.bf16.msra.mxu0 0
    %3128 = vmatprep.subr.bf16.mxu0 0
    %3129 = vmatpush2.bf16.msra.mxu0 0
    %3130 = vmatprep.mubr.bf16.mxu0 0
    %3131 = vmatmul.mubr.bf16.gmra.mxu0 %v3096
    %v3132 = vpop.f32.mrf.mxu0
    %v3133 = vadd.f32 0.0, %v3132
    %v3134 = vpop.f32.mrf.mxu0
    %v3135 = vpop.f32.mrf.mxu0
    %v3136 = vpop.f32.mrf.mxu0
    %3137 = vdwg.mxu0
    %v3138 = vadd.f32 %v3085, %v3133
    %v3139 = vadd.f32 %v3138, %v1070
    %v3140 = vxor.u32 %v3139, 2147483648
    %v3141 = vmul.f32 %v3140, 1.442695
    %v3142 = vpow.pop %v3141
    %v3143 = vadd.f32 %v3142, 1.0
    %v3144 = vrcp.pop %v3143
    %v3145 = vmul.f32 1.0, %v3144
    %v3146 = vtanh.pop %v3139
    %v3147 = vmul.f32 %v3145, %v2750
    %3149 = vrot.lane.b32.xlu0 %v3146, 32
    %v3150 = vpop.permute.xlu0 %3149
    %v3152 = vmul.f32 %v3145, %v3150
    %3154 = vrot.lane.b32.xlu0 %v3152, 32
    %v3155 = vpop.permute.xlu0 %3154
    %v3157 = vadd.f32 %v3147, %v3155
    %v3158 = vtanh.pop %v3157
    %3160 = vrot.lane.b32.xlu0 %v3158, 32
    %v3161 = vpop.permute.xlu0 %3160
    %v3163 = vmul.f32 %v3145, %v3161
    %3165 = vrot.lane.b32.xlu0 %v3163, 64
    %v3166 = vpop.permute.xlu0 %3165
    %3168 = vrot.lane.b32.xlu0 %v3088, 32
    %v3169 = vpop.permute.xlu0 %3168
    %v3171 = vsel %vm294, %v3166, %v3169
    %v3172 = vpack.c.bf16 %v3171, %v3171
    %v3174 = vsel %vm1021, %v3172, 0
    %3176 = vmatprep.subr.bf16.mxu0 0
    %3177 = vmatpush1.bf16.msra.mxu0 0
    %3178 = vmatprep.subr.bf16.mxu0 0
    %3179 = vmatpush1.bf16.msra.mxu0 0
    %3180 = vmatprep.subr.bf16.mxu0 0
    %3181 = vmatpush1.bf16.msra.mxu0 0
    %3182 = vmatprep.subr.bf16.mxu0 0
    %3183 = vmatpush1.bf16.msra.mxu0 0
    %3184 = vmatprep.subr.bf16.mxu0 0
    %3185 = vmatpush1.bf16.msra.mxu0 %v1135
    %3186 = vmatprep.subr.bf16.mxu0 0
    %3187 = vmatpush1.bf16.msra.mxu0 %v1134
    %3188 = vmatprep.subr.bf16.mxu0 0
    %3189 = vmatpush1.bf16.msra.mxu0 %v1133
    %3190 = vmatprep.subr.bf16.mxu0 0
    %3191 = vmatpush1.bf16.msra.mxu0 %v1132
    %3192 = vmatprep.subr.bf16.mxu0 0
    %3193 = vmatpush2.bf16.msra.mxu0 0
    %3194 = vmatprep.subr.bf16.mxu0 0
    %3195 = vmatpush2.bf16.msra.mxu0 0
    %3196 = vmatprep.subr.bf16.mxu0 0
    %3197 = vmatpush2.bf16.msra.mxu0 0
    %3198 = vmatprep.subr.bf16.mxu0 0
    %3199 = vmatpush2.bf16.msra.mxu0 0
    %3200 = vmatprep.subr.bf16.mxu0 0
    %3201 = vmatpush2.bf16.msra.mxu0 0
    %3202 = vmatprep.subr.bf16.mxu0 0
    %3203 = vmatpush2.bf16.msra.mxu0 0
    %3204 = vmatprep.subr.bf16.mxu0 0
    %3205 = vmatpush2.bf16.msra.mxu0 0
    %3206 = vmatprep.subr.bf16.mxu0 0
    %3207 = vmatpush2.bf16.msra.mxu0 0
    %3208 = vmatprep.mubr.bf16.mxu0 0
    %3209 = vmatmul.mubr.bf16.gmra.mxu0 %v3174
    %v3210 = vpop.f32.mrf.mxu0
    %v3211 = vadd.f32 %v1114, %v3210
    %v3212 = vpop.f32.mrf.mxu0
    %v3213 = vpop.f32.mrf.mxu0
    %v3214 = vpop.f32.mrf.mxu0
    %3215 = vdwg.mxu0
    %s3216 = scalar_lea.vmem [#allocation23], 10
    %3217 = vst [vmem:[%s3216] sm:$0x3] %v3211
    %v3218 = vlaneseq
    %v3219 = vshrl.u32 %v3218, 7
    %v3220 = vsub.s32 %v839, %v3219
    %v3221 = vrot.slane %v3045, %v3220
    %v3222 = vlaneseq
    %v3223 = vshrl.u32 %v3222, 7
    %v3224 = vsub.s32 %v844, %v3223
    %v3225 = vrot.slane %v3050, %v3224
    %v3226 = vsel %vm849, %v3225, %v3221
    %v3227 = vlaneseq
    %v3228 = vshrl.u32 %v3227, 7
    %v3229 = vsub.s32 %v839, %v3228
    %v3230 = vrot.slane %v3055, %v3229
    %v3231 = vlaneseq
    %v3232 = vshrl.u32 %v3231, 7
    %v3233 = vsub.s32 %v844, %v3232
    %v3234 = vrot.slane %v3060, %v3233
    %v3235 = vsel %vm849, %v3234, %v3230
    %v3236 = vsel %vm333, %v3235, %v3226
    %s3238 = scalar_lea.vmem [#allocation24], 10
    %3239 = vst.msk [vmem:[%s3238] sm:$0x3] %vm862, %v3236
    // Predicated region
    $region122: #{tpu_custom_call.1} parent=1 // pred_check
      _
    $region123: #{tpu_custom_call.1} parent=1 // pred_check_branch
      %3241 = sbr.rel (0) target = $region125
    $region124: #{tpu_custom_call.1} parent=1 // pred_region
      %s3243 = ssub.s32 192, 192
      %3244 = vsyncadd [#allocation5], %s3243
      %s3245 = sshll.u32 [#allocation23], 4
      %s3246 = int_to_ptr.vmem [resolvable:$true] %s3245
      %3251 = dma.vmem_to_hbm [thread:$0]  %s3246, 192, %s18, [#allocation5], 32, 32, 2
    $region125: #{tpu_custom_call.1} parent=1 // pred_fallthru
      _
    // Predicated region
    $region126: #{tpu_custom_call.1} parent=1 // pred_check
      _
    $region127: #{tpu_custom_call.1} parent=1 // pred_check_branch
      %3253 = sbr.rel (0) target = $region129
    $region128: #{tpu_custom_call.1} parent=1 // pred_region
      %s3255 = ssub.s32 192, 192
      %3256 = vsyncadd [#allocation25], %s3255
      %s3257 = sshll.u32 [#allocation24], 4
      %s3258 = int_to_ptr.vmem [resolvable:$true] %s3257
      %3263 = dma.vmem_to_hbm [thread:$0]  %s3258, 192, %s19, [#allocation25], 32, 32, 2
    $region129: #{tpu_custom_call.1} parent=1 // pred_fallthru
      _
    // Predicated region
    $region130: #{tpu_custom_call.1} parent=1 // pred_check
      _
    $region131: #{tpu_custom_call.1} parent=1 // pred_check_branch
      %3265 = sbr.rel (0) target = $region133
    $region132: #{tpu_custom_call.1} parent=1 // pred_region
      %3266 = dma.done [#allocation5], 192
    $region133: #{tpu_custom_call.1} parent=1 // pred_fallthru
      _
    // Predicated region
    $region134: #{tpu_custom_call.1} parent=1 // pred_check
      _
    $region135: #{tpu_custom_call.1} parent=1 // pred_check_branch
      %3268 = sbr.rel (0) target = $region137
    $region136: #{tpu_custom_call.1} parent=1 // pred_region
      %3269 = dma.done [#allocation25], 192
    $region137: #{tpu_custom_call.1} parent=1 // pred_fallthru
      _
    %3270 = vsyncpa [#allocation4], 1
    %3271 = vsyncpa [#allocation7], 1
    %3272 = vsyncpa [#allocation10], 1
    %3273 = vsyncpa [#allocation13], 1
    %3274 = vsyncpa [#allocation16], 1
    %3275 = vsyncpa [#allocation19], 1
    %3276 = vsyncpa [#allocation22], 1
    %3277 = vsyncpa [#allocation5], 1
    %3278 = vsyncpa [#allocation25], 1

</llo_original>
